<compile_context>
chip_gen: v6e
topology: v6e:2x2x1
jax: 0.10.0
libtpu: 0.0.40
codegen_flags: <defaults>
</compile_context>

<pallas_src>
from typing import Dict

import jax
import jax.numpy as jnp
from jax.experimental import pallas as pl
from jax.experimental.pallas import tpu as pltpu

# ------------------------- model hyperparameters -------------------------
VOCAB = 100
HIDDEN = 32
NHEADS = 2
HEAD_DIM = HIDDEN // NHEADS
FFN = 64
NLAYERS = 2
MAX_POS = 64
LN_EPS = 1e-12

VEC_W = 3 * HIDDEN            # packed-vector row width (widest vector = bqkv)
VEC_ROWS_PER_LAYER = 8        # bqkv, bo, b1, b2, ln1g, ln1b, ln2g, ln2b


def _layernorm(x, gamma, beta):
    mu = jnp.mean(x, axis=-1, keepdims=True)
    var = jnp.mean((x - mu) ** 2, axis=-1, keepdims=True)
    return (x - mu) * jax.lax.rsqrt(var + LN_EPS) * gamma + beta


# ------------------------- fused Pallas kernel -------------------------
def _fused_encoder_kernel(emb_ref, mask_ref, vec_ref,
                          wqkv_ref, wo_ref, w1_ref, w2_ref,
                          o_ref, ctx_scr):
    """Whole text encoder (emb-LN + NLAYERS transformer blocks) in one kernel.

    emb_ref : (B*S, H)  summed word+pos+type embeddings (batch folded into M)
    mask_ref: (B, S)    attention mask (1 = attend, 0 = pad)
    vec_ref : (2 + 8*NLAYERS, 3H) packed biases / LayerNorm params
    wqkv_ref: (NLAYERS, H, 3H)    fused Wq|Wk|Wv
    wo_ref  : (NLAYERS, H, H)
    w1_ref  : (NLAYERS, H, FFN)
    w2_ref  : (NLAYERS, FFN, H)
    o_ref   : (B*S, H)  last_hidden_state (batch folded)
    ctx_scr : (B*S, H)  VMEM scratch for per-head attention context
    """
    B, S = mask_ref.shape
    V = vec_ref[...]                                           # tiny packed slab

    # embedding LayerNorm over the whole (B*S, H) slab
    x = emb_ref[...].astype(jnp.float32)
    x = _layernorm(x, V[0:1, :HIDDEN], V[1:2, :HIDDEN])

    # additive mask bias: computed ONCE, reused across all layers / heads
    neg_bias = (1.0 - mask_ref[...].astype(jnp.float32)) * -1e9   # (B, S)

    scale = 1.0 / (float(HEAD_DIM) ** 0.5)
    for li in range(NLAYERS):                                  # static unroll
        base = 2 + li * VEC_ROWS_PER_LAYER
        bqkv = V[base + 0:base + 1, :3 * HIDDEN]
        bo   = V[base + 1:base + 2, :HIDDEN]
        b1   = V[base + 2:base + 3, :FFN]
        b2   = V[base + 3:base + 4, :HIDDEN]
        g1   = V[base + 4:base + 5, :HIDDEN]
        be1  = V[base + 5:base + 6, :HIDDEN]
        g2   = V[base + 6:base + 7, :HIDDEN]
        be2  = V[base + 7:base + 8, :HIDDEN]

        # single fused QKV matmul over the full (B*S, H) activation slab
        qkv = jnp.dot(x, wqkv_ref[li], preferred_element_type=jnp.float32) + bqkv

        # attention: static loops over batch & heads; head context written
        # directly into VMEM scratch (no lane-axis concatenate)
        for b in range(B):
            rs = slice(b * S, (b + 1) * S)
            bias_b = neg_bias[b:b + 1, :]                      # (1, S)
            for h in range(NHEADS):
                cs = slice(h * HEAD_DIM, (h + 1) * HEAD_DIM)
                q_h = qkv[rs, h * HEAD_DIM:(h + 1) * HEAD_DIM]
                k_h = qkv[rs, HIDDEN + h * HEAD_DIM:HIDDEN + (h + 1) * HEAD_DIM]
                v_h = qkv[rs, 2 * HIDDEN + h * HEAD_DIM:2 * HIDDEN + (h + 1) * HEAD_DIM]
                s = jnp.dot(q_h, k_h.T, preferred_element_type=jnp.float32) * scale
                s = s + bias_b
                s = s - jnp.max(s, axis=-1, keepdims=True)
                p = jnp.exp(s)
                p = p * pl.reciprocal(jnp.sum(p, axis=-1, keepdims=True), approx=True)
                ctx_scr[rs, cs] = jnp.dot(p, v_h, preferred_element_type=jnp.float32)

        ctx = ctx_scr[...]
        attn_out = jnp.dot(ctx, wo_ref[li], preferred_element_type=jnp.float32) + bo
        x1 = _layernorm(x + attn_out, g1, be1)

        # TODO(synk): HF BERT uses exact (erf) GELU; tanh approximation used here.
        h1 = jax.nn.gelu(
            jnp.dot(x1, w1_ref[li], preferred_element_type=jnp.float32) + b1,
            approximate=True)
        ffn_out = jnp.dot(h1, w2_ref[li], preferred_element_type=jnp.float32) + b2
        x = _layernorm(x1 + ffn_out, g2, be2)

    o_ref[...] = x


# ------------------------- pallas_call wrapper -------------------------
def text_encoder_pallas(packed, emb2d, mask2d):
    BS, H = emb2d.shape
    grid_spec = pltpu.PrefetchScalarGridSpec(
        num_scalar_prefetch=0,
        grid=(1,),
        in_specs=[
            pl.BlockSpec(emb2d.shape, lambda i: (0, 0)),
            pl.BlockSpec(mask2d.shape, lambda i: (0, 0)),
            pl.BlockSpec(packed["vec"].shape, lambda i: (0, 0)),
            pl.BlockSpec(packed["wqkv"].shape, lambda i: (0, 0, 0)),
            pl.BlockSpec(packed["wo"].shape, lambda i: (0, 0, 0)),
            pl.BlockSpec(packed["w1"].shape, lambda i: (0, 0, 0)),
            pl.BlockSpec(packed["w2"].shape, lambda i: (0, 0, 0)),
        ],
        out_specs=pl.BlockSpec((BS, H), lambda i: (0, 0)),
        scratch_shapes=[pltpu.VMEM((BS, H), jnp.float32)],
    )
    return pl.pallas_call(
        _fused_encoder_kernel,
        out_shape=jax.ShapeDtypeStruct((BS, H), jnp.float32),
        grid_spec=grid_spec,
        compiler_params=pltpu.CompilerParams(dimension_semantics=("arbitrary",)),
    )(emb2d, mask2d, packed["vec"], packed["wqkv"], packed["wo"],
      packed["w1"], packed["w2"])


# ------------------------- parameter init / packing -------------------------
def pack_params(params):
    """Pack per-layer tensors into 5 contiguous slabs for the fused kernel."""
    def vrow(v):
        v = jnp.ravel(v).astype(jnp.float32)
        return jnp.pad(v, (0, VEC_W - v.shape[0]))

    rows = [vrow(params["emb_ln_g"]), vrow(params["emb_ln_b"])]
    wqkv, wo, w1, w2 = [], [], [], []
    for (Wq, bq, Wk, bk, Wv, bv, Wo, bo, g1, b1n, W1, b1f, W2, b2f, g2, b2n) \
            in params["layers"]:
        wqkv.append(jnp.concatenate([Wq, Wk, Wv], axis=1))      # (H, 3H)
        wo.append(Wo)
        w1.append(W1)
        w2.append(W2)
        rows.extend([
            vrow(jnp.concatenate([jnp.ravel(bq), jnp.ravel(bk), jnp.ravel(bv)])),
            vrow(bo), vrow(b1f), vrow(b2f),
            vrow(g1), vrow(b1n), vrow(g2), vrow(b2n),
        ])
    return {
        "vec": jnp.stack(rows),          # (2 + 8*NLAYERS, 3H)
        "wqkv": jnp.stack(wqkv),         # (NLAYERS, H, 3H)
        "wo": jnp.stack(wo),             # (NLAYERS, H, H)
        "w1": jnp.stack(w1),             # (NLAYERS, H, FFN)
        "w2": jnp.stack(w2),             # (NLAYERS, FFN, H)
    }


def init_params(key):
    def dense(k, fan_in, fan_out):
        return jax.random.normal(k, (fan_in, fan_out), jnp.float32) * 0.02

    keys = jax.random.split(key, 4 + NLAYERS)
    params = {
        "word_emb": jax.random.normal(keys[0], (VOCAB, HIDDEN), jnp.float32) * 0.02,
        "pos_emb": jax.random.normal(keys[1], (MAX_POS, HIDDEN), jnp.float32) * 0.02,
        "type_emb": jax.random.normal(keys[2], (2, HIDDEN), jnp.float32) * 0.02,
        "emb_ln_g": jnp.ones((1, HIDDEN), jnp.float32),
        "emb_ln_b": jnp.zeros((1, HIDDEN), jnp.float32),
        "layers": [],
    }
    for li in range(NLAYERS):
        lk = jax.random.split(keys[4 + li], 6)
        layer = (
            dense(lk[0], HIDDEN, HIDDEN), jnp.zeros((1, HIDDEN), jnp.float32),   # Wq, bq
            dense(lk[1], HIDDEN, HIDDEN), jnp.zeros((1, HIDDEN), jnp.float32),   # Wk, bk
            dense(lk[2], HIDDEN, HIDDEN), jnp.zeros((1, HIDDEN), jnp.float32),   # Wv, bv
            dense(lk[3], HIDDEN, HIDDEN), jnp.zeros((1, HIDDEN), jnp.float32),   # Wo, bo
            jnp.ones((1, HIDDEN), jnp.float32), jnp.zeros((1, HIDDEN), jnp.float32),  # LN1
            dense(lk[4], HIDDEN, FFN), jnp.zeros((1, FFN), jnp.float32),         # W1, b1
            dense(lk[5], FFN, HIDDEN), jnp.zeros((1, HIDDEN), jnp.float32),      # W2, b2
            jnp.ones((1, HIDDEN), jnp.float32), jnp.zeros((1, HIDDEN), jnp.float32),  # LN2
        )
        params["layers"].append(layer)
    params["packed"] = pack_params(params)
    return params


# ------------------------- TextEncoder forward -------------------------
def text_encoder_forward(params, inputs: Dict[str, jnp.ndarray],
                         embedding_method: str = "last_hidden_state_cls"):
    input_ids = inputs["input_ids"]              # (B, S) int32
    attention_mask = inputs["attention_mask"]    # (B, S)
    B, S = input_ids.shape

    # embedding gather + position/type embeddings (glue, not the hot path)
    emb = (params["word_emb"][input_ids]
           + params["pos_emb"][:S][None, :, :]
           + params["type_emb"][0][None, None, :])          # (B, S, H)
    emb2d = emb.reshape(B * S, HIDDEN).astype(jnp.float32)   # batch folded into M
    mask2d = attention_mask.astype(jnp.float32)

    hidden2d = text_encoder_pallas(params["packed"], emb2d, mask2d)
    last_hidden_state = hidden2d.reshape(B, S, HIDDEN)

    if embedding_method == "last_hidden_state_cls":
        return last_hidden_state[:, 0, :]
    elif embedding_method == "last_hidden_state":
        return last_hidden_state
    elif embedding_method == "last_hidden_state_mean":
        return jnp.mean(last_hidden_state[:, 1:-1, :], axis=1)
    else:
        # TODO(synk): pooler_output / hidden_states_from_end / projected-text
        # variants depend on HF-model internals not modeled here.
        raise ValueError("Embedding type not handled.")


# ------------------------- pure-JAX reference (sanity check) -------------------------
def _reference_forward(params, inputs):
    input_ids = inputs["input_ids"]
    attention_mask = inputs["attention_mask"].astype(jnp.float32)
    B, S = input_ids.shape
    x = (params["word_emb"][input_ids]
         + params["pos_emb"][:S][None, :, :]
         + params["type_emb"][0][None, None, :])
    x = _layernorm(x, params["emb_ln_g"], params["emb_ln_b"])
    neg = (1.0 - attention_mask)[:, None, None, :] * -1e9
    for (wq, bq, wk, bk, wv, bv, wo, bo, g1, b1n, w1, b1f, w2, b2f, g2, b2n) in params["layers"]:
        q = x @ wq + bq
        k = x @ wk + bk
        v = x @ wv + bv
        qh = q.reshape(B, S, NHEADS, HEAD_DIM).transpose(0, 2, 1, 3)
        kh = k.reshape(B, S, NHEADS, HEAD_DIM).transpose(0, 2, 1, 3)
        vh = v.reshape(B, S, NHEADS, HEAD_DIM).transpose(0, 2, 1, 3)
        s = jnp.einsum("bhqd,bhkd->bhqk", qh, kh) / (HEAD_DIM ** 0.5) + neg
        p = jax.nn.softmax(s, axis=-1)
        ctx = jnp.einsum("bhqk,bhkd->bhqd", p, vh).transpose(0, 2, 1, 3).reshape(B, S, HIDDEN)
        x1 = _layernorm(x + ctx @ wo + bo, g1, b1n)
        h = jax.nn.gelu(x1 @ w1 + b1f, approximate=True)
        x = _layernorm(x1 + h @ w2 + b2f, g2, b2n)
    return x[:, 0, :]


if __name__ == "__main__":
    key = jax.random.PRNGKey(0)
    pkey, dkey = jax.random.split(key)
    params = init_params(pkey)

    B, S = 2, 8
    input_ids = jax.random.randint(dkey, (B, S), 0, VOCAB, dtype=jnp.int32)
    attention_mask = jnp.ones((B, S), dtype=jnp.int32)
    inputs = {"input_ids": input_ids, "attention_mask": attention_mask}

    out = text_encoder_forward(params, inputs, embedding_method="last_hidden_state_cls")
    out = jax.block_until_ready(out)
    assert out.shape == (B, HIDDEN), out.shape

    ref = _reference_forward(params, inputs)
    max_diff = float(jnp.max(jnp.abs(out - ref)))
    assert jnp.allclose(out, ref, rtol=2e-3, atol=2e-3), max_diff

    print("KERNEL_OK")
</pallas_src>

<mosaic_0001>
module attributes {stable_mosaic.version = 11 : i64} {
  func.func @_fused_encoder_kernel(%arg0: i32, %arg1: memref<16x32xf32, #tpu.memory_space<vmem>>, %arg2: memref<2x8xf32, #tpu.memory_space<vmem>>, %arg3: memref<18x96xf32, #tpu.memory_space<vmem>>, %arg4: memref<2x32x96xf32, #tpu.memory_space<vmem>>, %arg5: memref<2x32x32xf32, #tpu.memory_space<vmem>>, %arg6: memref<2x32x64xf32, #tpu.memory_space<vmem>>, %arg7: memref<2x64x32xf32, #tpu.memory_space<vmem>>, %arg8: memref<16x32xf32, #tpu.memory_space<vmem>>, %arg9: memref<16x32xf32, #tpu.memory_space<vmem>>) attributes {dimension_semantics = [#tpu.dimension_semantics<arbitrary>], iteration_bounds = array<i64: 1>, scalar_prefetch = 0 : i64, scratch_operands = 1 : i64, tpu.core_type = #tpu.core_type<tc>, window_params = [{pipeline_mode = #tpu.pipeline_mode<synchronous>, transform_indices = @transform_0, window_bounds = array<i64: 16, 32>}, {pipeline_mode = #tpu.pipeline_mode<synchronous>, transform_indices = @transform_1, window_bounds = array<i64: 2, 8>}, {pipeline_mode = #tpu.pipeline_mode<synchronous>, transform_indices = @transform_2, window_bounds = array<i64: 18, 96>}, {pipeline_mode = #tpu.pipeline_mode<synchronous>, transform_indices = @transform_3, window_bounds = array<i64: 2, 32, 96>}, {pipeline_mode = #tpu.pipeline_mode<synchronous>, transform_indices = @transform_4, window_bounds = array<i64: 2, 32, 32>}, {pipeline_mode = #tpu.pipeline_mode<synchronous>, transform_indices = @transform_5, window_bounds = array<i64: 2, 32, 64>}, {pipeline_mode = #tpu.pipeline_mode<synchronous>, transform_indices = @transform_6, window_bounds = array<i64: 2, 64, 32>}, {pipeline_mode = #tpu.pipeline_mode<synchronous>, transform_indices = @transform_7, window_bounds = array<i64: 16, 32>}]} {
    %c0 = arith.constant 0 : index
    %c0_0 = arith.constant 0 : index
    %0 = vector.load %arg3[%c0, %c0_0] : memref<18x96xf32, #tpu.memory_space<vmem>>, vector<18x96xf32>
    %c0_1 = arith.constant 0 : index
    %c0_2 = arith.constant 0 : index
    %1 = vector.load %arg1[%c0_1, %c0_2] : memref<16x32xf32, #tpu.memory_space<vmem>>, vector<16x32xf32>
    %2 = vector.extract_strided_slice %0 {offsets = [0, 0], sizes = [1, 32], strides = [1, 1]} : vector<18x96xf32> to vector<1x32xf32>
    %3 = vector.extract_strided_slice %0 {offsets = [1, 0], sizes = [1, 32], strides = [1, 1]} : vector<18x96xf32> to vector<1x32xf32>
    %cst = arith.constant dense<0.000000e+00> : vector<16xf32>
    %4 = vector.multi_reduction <add>, %1, %cst [1] : vector<16x32xf32> to vector<16xf32>
    %5 = vector.shape_cast %4 : vector<16xf32> to vector<16x1xf32>
    %cst_3 = arith.constant 3.200000e+01 : f32
    %6 = vector.broadcast %cst_3 : f32 to vector<16x1xf32>
    %7 = arith.divf %5, %6 : vector<16x1xf32>
    %8 = vector.broadcast %7 : vector<16x1xf32> to vector<16x32xf32>
    %9 = arith.subf %1, %8 : vector<16x32xf32>
    %10 = arith.mulf %9, %9 : vector<16x32xf32>
    %cst_4 = arith.constant dense<0.000000e+00> : vector<16xf32>
    %11 = vector.multi_reduction <add>, %10, %cst_4 [1] : vector<16x32xf32> to vector<16xf32>
    %12 = vector.shape_cast %11 : vector<16xf32> to vector<16x1xf32>
    %cst_5 = arith.constant 3.200000e+01 : f32
    %13 = vector.broadcast %cst_5 : f32 to vector<16x1xf32>
    %14 = arith.divf %12, %13 : vector<16x1xf32>
    %15 = vector.broadcast %7 : vector<16x1xf32> to vector<16x32xf32>
    %16 = arith.subf %1, %15 : vector<16x32xf32>
    %cst_6 = arith.constant 9.99999996E-13 : f32
    %17 = vector.broadcast %cst_6 : f32 to vector<16x1xf32>
    %18 = arith.addf %14, %17 : vector<16x1xf32>
    %19 = math.rsqrt %18 : vector<16x1xf32>
    %20 = vector.broadcast %19 : vector<16x1xf32> to vector<16x32xf32>
    %21 = arith.mulf %16, %20 : vector<16x32xf32>
    %22 = vector.broadcast %2 : vector<1x32xf32> to vector<16x32xf32>
    %23 = arith.mulf %21, %22 : vector<16x32xf32>
    %24 = vector.broadcast %3 : vector<1x32xf32> to vector<16x32xf32>
    %25 = arith.addf %23, %24 : vector<16x32xf32>
    %c0_7 = arith.constant 0 : index
    %c0_8 = arith.constant 0 : index
    %26 = vector.load %arg2[%c0_7, %c0_8] : memref<2x8xf32, #tpu.memory_space<vmem>>, vector<2x8xf32>
    %cst_9 = arith.constant 1.000000e+00 : f32
    %27 = vector.broadcast %cst_9 : f32 to vector<2x8xf32>
    %28 = arith.subf %27, %26 : vector<2x8xf32>
    %cst_10 = arith.constant -1.000000e+09 : f32
    %29 = vector.broadcast %cst_10 : f32 to vector<2x8xf32>
    %30 = arith.mulf %28, %29 : vector<2x8xf32>
    %31 = vector.extract_strided_slice %0 {offsets = [2, 0], sizes = [1, 96], strides = [1, 1]} : vector<18x96xf32> to vector<1x96xf32>
    %32 = vector.extract_strided_slice %0 {offsets = [3, 0], sizes = [1, 32], strides = [1, 1]} : vector<18x96xf32> to vector<1x32xf32>
    %33 = vector.extract_strided_slice %0 {offsets = [4, 0], sizes = [1, 64], strides = [1, 1]} : vector<18x96xf32> to vector<1x64xf32>
    %34 = vector.extract_strided_slice %0 {offsets = [5, 0], sizes = [1, 32], strides = [1, 1]} : vector<18x96xf32> to vector<1x32xf32>
    %35 = vector.extract_strided_slice %0 {offsets = [6, 0], sizes = [1, 32], strides = [1, 1]} : vector<18x96xf32> to vector<1x32xf32>
    %36 = vector.extract_strided_slice %0 {offsets = [7, 0], sizes = [1, 32], strides = [1, 1]} : vector<18x96xf32> to vector<1x32xf32>
    %37 = vector.extract_strided_slice %0 {offsets = [8, 0], sizes = [1, 32], strides = [1, 1]} : vector<18x96xf32> to vector<1x32xf32>
    %38 = vector.extract_strided_slice %0 {offsets = [9, 0], sizes = [1, 32], strides = [1, 1]} : vector<18x96xf32> to vector<1x32xf32>
    %c0_11 = arith.constant 0 : index
    %c0_12 = arith.constant 0 : index
    %c0_13 = arith.constant 0 : index
    %39 = vector.load %arg4[%c0_11, %c0_12, %c0_13] : memref<2x32x96xf32, #tpu.memory_space<vmem>>, vector<1x32x96xf32>
    %40 = vector.shape_cast %39 : vector<1x32x96xf32> to vector<32x96xf32>
    %cst_14 = arith.constant dense<0.000000e+00> : vector<16x96xf32>
    %41 = tpu.matmul %25, %40, %cst_14 {dimension_numbers = #tpu.dot_dimension_numbers<[1], [0], [0], [1], [0, 0, 1, 1], [], []>} : vector<16x32xf32>, vector<32x96xf32>, vector<16x96xf32> -> vector<16x96xf32>
    %42 = vector.broadcast %31 : vector<1x96xf32> to vector<16x96xf32>
    %43 = arith.addf %41, %42 : vector<16x96xf32>
    %44 = vector.extract_strided_slice %30 {offsets = [0, 0], sizes = [1, 8], strides = [1, 1]} : vector<2x8xf32> to vector<1x8xf32>
    %45 = vector.extract_strided_slice %43 {offsets = [0, 0], sizes = [8, 16], strides = [1, 1]} : vector<16x96xf32> to vector<8x16xf32>
    %46 = vector.extract_strided_slice %43 {offsets = [0, 32], sizes = [8, 16], strides = [1, 1]} : vector<16x96xf32> to vector<8x16xf32>
    %47 = vector.extract_strided_slice %43 {offsets = [0, 64], sizes = [8, 16], strides = [1, 1]} : vector<16x96xf32> to vector<8x16xf32>
    %48 = tpu.transpose %46, [1, 0] : vector<8x16xf32> -> vector<16x8xf32>
    %cst_15 = arith.constant dense<0.000000e+00> : vector<8x8xf32>
    %49 = tpu.matmul %45, %48, %cst_15 {dimension_numbers = #tpu.dot_dimension_numbers<[1], [0], [0], [1], [0, 0, 1, 1], [], []>} : vector<8x16xf32>, vector<16x8xf32>, vector<8x8xf32> -> vector<8x8xf32>
    %cst_16 = arith.constant 2.500000e-01 : f32
    %50 = vector.broadcast %cst_16 : f32 to vector<8x8xf32>
    %51 = arith.mulf %49, %50 : vector<8x8xf32>
    %52 = vector.broadcast %44 : vector<1x8xf32> to vector<8x8xf32>
    %53 = arith.addf %51, %52 : vector<8x8xf32>
    %cst_17 = arith.constant dense<0xFF800000> : vector<8xf32>
    %54 = vector.multi_reduction <maximumf>, %53, %cst_17 [1] : vector<8x8xf32> to vector<8xf32>
    %55 = vector.shape_cast %54 : vector<8xf32> to vector<8x1xf32>
    %56 = vector.broadcast %55 : vector<8x1xf32> to vector<8x8xf32>
    %57 = arith.subf %53, %56 : vector<8x8xf32>
    %58 = math.exp %57 : vector<8x8xf32>
    %cst_18 = arith.constant dense<0.000000e+00> : vector<8xf32>
    %59 = vector.multi_reduction <add>, %58, %cst_18 [1] : vector<8x8xf32> to vector<8xf32>
    %60 = vector.shape_cast %59 : vector<8xf32> to vector<8x1xf32>
    %61 = tpu.reciprocal %60 {approx = true} : vector<8x1xf32> -> vector<8x1xf32>
    %62 = vector.broadcast %61 : vector<8x1xf32> to vector<8x8xf32>
    %63 = arith.mulf %58, %62 : vector<8x8xf32>
    %cst_19 = arith.constant dense<0.000000e+00> : vector<8x16xf32>
    %64 = tpu.matmul %63, %47, %cst_19 {dimension_numbers = #tpu.dot_dimension_numbers<[1], [0], [0], [1], [0, 0, 1, 1], [], []>} : vector<8x8xf32>, vector<8x16xf32>, vector<8x16xf32> -> vector<8x16xf32>
    %c0_20 = arith.constant 0 : index
    %c0_21 = arith.constant 0 : index
    %65 = vector.load %arg9[%c0_20, %c0_21] : memref<16x32xf32, #tpu.memory_space<vmem>>, vector<8x16xf32>
    tpu.vector_store %arg9[%c0_20, %c0_21], %64 {strides = array<i32>} : memref<16x32xf32, #tpu.memory_space<vmem>>, vector<8x16xf32>,
    %66 = vector.extract_strided_slice %43 {offsets = [0, 16], sizes = [8, 16], strides = [1, 1]} : vector<16x96xf32> to vector<8x16xf32>
    %67 = vector.extract_strided_slice %43 {offsets = [0, 48], sizes = [8, 16], strides = [1, 1]} : vector<16x96xf32> to vector<8x16xf32>
    %68 = vector.extract_strided_slice %43 {offsets = [0, 80], sizes = [8, 16], strides = [1, 1]} : vector<16x96xf32> to vector<8x16xf32>
    %69 = tpu.transpose %67, [1, 0] : vector<8x16xf32> -> vector<16x8xf32>
    %cst_22 = arith.constant dense<0.000000e+00> : vector<8x8xf32>
    %70 = tpu.matmul %66, %69, %cst_22 {dimension_numbers = #tpu.dot_dimension_numbers<[1], [0], [0], [1], [0, 0, 1, 1], [], []>} : vector<8x16xf32>, vector<16x8xf32>, vector<8x8xf32> -> vector<8x8xf32>
    %cst_23 = arith.constant 2.500000e-01 : f32
    %71 = vector.broadcast %cst_23 : f32 to vector<8x8xf32>
    %72 = arith.mulf %70, %71 : vector<8x8xf32>
    %73 = vector.broadcast %44 : vector<1x8xf32> to vector<8x8xf32>
    %74 = arith.addf %72, %73 : vector<8x8xf32>
    %cst_24 = arith.constant dense<0xFF800000> : vector<8xf32>
    %75 = vector.multi_reduction <maximumf>, %74, %cst_24 [1] : vector<8x8xf32> to vector<8xf32>
    %76 = vector.shape_cast %75 : vector<8xf32> to vector<8x1xf32>
    %77 = vector.broadcast %76 : vector<8x1xf32> to vector<8x8xf32>
    %78 = arith.subf %74, %77 : vector<8x8xf32>
    %79 = math.exp %78 : vector<8x8xf32>
    %cst_25 = arith.constant dense<0.000000e+00> : vector<8xf32>
    %80 = vector.multi_reduction <add>, %79, %cst_25 [1] : vector<8x8xf32> to vector<8xf32>
    %81 = vector.shape_cast %80 : vector<8xf32> to vector<8x1xf32>
    %82 = tpu.reciprocal %81 {approx = true} : vector<8x1xf32> -> vector<8x1xf32>
    %83 = vector.broadcast %82 : vector<8x1xf32> to vector<8x8xf32>
    %84 = arith.mulf %79, %83 : vector<8x8xf32>
    %cst_26 = arith.constant dense<0.000000e+00> : vector<8x16xf32>
    %85 = tpu.matmul %84, %68, %cst_26 {dimension_numbers = #tpu.dot_dimension_numbers<[1], [0], [0], [1], [0, 0, 1, 1], [], []>} : vector<8x8xf32>, vector<8x16xf32>, vector<8x16xf32> -> vector<8x16xf32>
    %c0_27 = arith.constant 0 : index
    %c16 = arith.constant 16 : index
    %86 = vector.load %arg9[%c0_27, %c16] : memref<16x32xf32, #tpu.memory_space<vmem>>, vector<8x16xf32>
    tpu.vector_store %arg9[%c0_27, %c16], %85 {strides = array<i32>} : memref<16x32xf32, #tpu.memory_space<vmem>>, vector<8x16xf32>,
    %87 = vector.extract_strided_slice %30 {offsets = [1, 0], sizes = [1, 8], strides = [1, 1]} : vector<2x8xf32> to vector<1x8xf32>
    %88 = vector.extract_strided_slice %43 {offsets = [8, 0], sizes = [8, 16], strides = [1, 1]} : vector<16x96xf32> to vector<8x16xf32>
    %89 = vector.extract_strided_slice %43 {offsets = [8, 32], sizes = [8, 16], strides = [1, 1]} : vector<16x96xf32> to vector<8x16xf32>
    %90 = vector.extract_strided_slice %43 {offsets = [8, 64], sizes = [8, 16], strides = [1, 1]} : vector<16x96xf32> to vector<8x16xf32>
    %91 = tpu.transpose %89, [1, 0] : vector<8x16xf32> -> vector<16x8xf32>
    %cst_28 = arith.constant dense<0.000000e+00> : vector<8x8xf32>
    %92 = tpu.matmul %88, %91, %cst_28 {dimension_numbers = #tpu.dot_dimension_numbers<[1], [0], [0], [1], [0, 0, 1, 1], [], []>} : vector<8x16xf32>, vector<16x8xf32>, vector<8x8xf32> -> vector<8x8xf32>
    %cst_29 = arith.constant 2.500000e-01 : f32
    %93 = vector.broadcast %cst_29 : f32 to vector<8x8xf32>
    %94 = arith.mulf %92, %93 : vector<8x8xf32>
    %95 = vector.broadcast %87 : vector<1x8xf32> to vector<8x8xf32>
    %96 = arith.addf %94, %95 : vector<8x8xf32>
    %cst_30 = arith.constant dense<0xFF800000> : vector<8xf32>
    %97 = vector.multi_reduction <maximumf>, %96, %cst_30 [1] : vector<8x8xf32> to vector<8xf32>
    %98 = vector.shape_cast %97 : vector<8xf32> to vector<8x1xf32>
    %99 = vector.broadcast %98 : vector<8x1xf32> to vector<8x8xf32>
    %100 = arith.subf %96, %99 : vector<8x8xf32>
    %101 = math.exp %100 : vector<8x8xf32>
    %cst_31 = arith.constant dense<0.000000e+00> : vector<8xf32>
    %102 = vector.multi_reduction <add>, %101, %cst_31 [1] : vector<8x8xf32> to vector<8xf32>
    %103 = vector.shape_cast %102 : vector<8xf32> to vector<8x1xf32>
    %104 = tpu.reciprocal %103 {approx = true} : vector<8x1xf32> -> vector<8x1xf32>
    %105 = vector.broadcast %104 : vector<8x1xf32> to vector<8x8xf32>
    %106 = arith.mulf %101, %105 : vector<8x8xf32>
    %cst_32 = arith.constant dense<0.000000e+00> : vector<8x16xf32>
    %107 = tpu.matmul %106, %90, %cst_32 {dimension_numbers = #tpu.dot_dimension_numbers<[1], [0], [0], [1], [0, 0, 1, 1], [], []>} : vector<8x8xf32>, vector<8x16xf32>, vector<8x16xf32> -> vector<8x16xf32>
    %c8 = arith.constant 8 : index
    %c0_33 = arith.constant 0 : index
    %108 = vector.load %arg9[%c8, %c0_33] : memref<16x32xf32, #tpu.memory_space<vmem>>, vector<8x16xf32>
    tpu.vector_store %arg9[%c8, %c0_33], %107 {strides = array<i32>} : memref<16x32xf32, #tpu.memory_space<vmem>>, vector<8x16xf32>,
    %109 = vector.extract_strided_slice %43 {offsets = [8, 16], sizes = [8, 16], strides = [1, 1]} : vector<16x96xf32> to vector<8x16xf32>
    %110 = vector.extract_strided_slice %43 {offsets = [8, 48], sizes = [8, 16], strides = [1, 1]} : vector<16x96xf32> to vector<8x16xf32>
    %111 = vector.extract_strided_slice %43 {offsets = [8, 80], sizes = [8, 16], strides = [1, 1]} : vector<16x96xf32> to vector<8x16xf32>
    %112 = tpu.transpose %110, [1, 0] : vector<8x16xf32> -> vector<16x8xf32>
    %cst_34 = arith.constant dense<0.000000e+00> : vector<8x8xf32>
    %113 = tpu.matmul %109, %112, %cst_34 {dimension_numbers = #tpu.dot_dimension_numbers<[1], [0], [0], [1], [0, 0, 1, 1], [], []>} : vector<8x16xf32>, vector<16x8xf32>, vector<8x8xf32> -> vector<8x8xf32>
    %cst_35 = arith.constant 2.500000e-01 : f32
    %114 = vector.broadcast %cst_35 : f32 to vector<8x8xf32>
    %115 = arith.mulf %113, %114 : vector<8x8xf32>
    %116 = vector.broadcast %87 : vector<1x8xf32> to vector<8x8xf32>
    %117 = arith.addf %115, %116 : vector<8x8xf32>
    %cst_36 = arith.constant dense<0xFF800000> : vector<8xf32>
    %118 = vector.multi_reduction <maximumf>, %117, %cst_36 [1] : vector<8x8xf32> to vector<8xf32>
    %119 = vector.shape_cast %118 : vector<8xf32> to vector<8x1xf32>
    %120 = vector.broadcast %119 : vector<8x1xf32> to vector<8x8xf32>
    %121 = arith.subf %117, %120 : vector<8x8xf32>
    %122 = math.exp %121 : vector<8x8xf32>
    %cst_37 = arith.constant dense<0.000000e+00> : vector<8xf32>
    %123 = vector.multi_reduction <add>, %122, %cst_37 [1] : vector<8x8xf32> to vector<8xf32>
    %124 = vector.shape_cast %123 : vector<8xf32> to vector<8x1xf32>
    %125 = tpu.reciprocal %124 {approx = true} : vector<8x1xf32> -> vector<8x1xf32>
    %126 = vector.broadcast %125 : vector<8x1xf32> to vector<8x8xf32>
    %127 = arith.mulf %122, %126 : vector<8x8xf32>
    %cst_38 = arith.constant dense<0.000000e+00> : vector<8x16xf32>
    %128 = tpu.matmul %127, %111, %cst_38 {dimension_numbers = #tpu.dot_dimension_numbers<[1], [0], [0], [1], [0, 0, 1, 1], [], []>} : vector<8x8xf32>, vector<8x16xf32>, vector<8x16xf32> -> vector<8x16xf32>
    %c8_39 = arith.constant 8 : index
    %c16_40 = arith.constant 16 : index
    %129 = vector.load %arg9[%c8_39, %c16_40] : memref<16x32xf32, #tpu.memory_space<vmem>>, vector<8x16xf32>
    tpu.vector_store %arg9[%c8_39, %c16_40], %128 {strides = array<i32>} : memref<16x32xf32, #tpu.memory_space<vmem>>, vector<8x16xf32>,
    %c0_41 = arith.constant 0 : index
    %c0_42 = arith.constant 0 : index
    %130 = vector.load %arg9[%c0_41, %c0_42] : memref<16x32xf32, #tpu.memory_space<vmem>>, vector<16x32xf32>
    %c0_43 = arith.constant 0 : index
    %c0_44 = arith.constant 0 : index
    %c0_45 = arith.constant 0 : index
    %131 = vector.load %arg5[%c0_43, %c0_44, %c0_45] : memref<2x32x32xf32, #tpu.memory_space<vmem>>, vector<1x32x32xf32>
    %132 = vector.shape_cast %131 : vector<1x32x32xf32> to vector<32x32xf32>
    %cst_46 = arith.constant dense<0.000000e+00> : vector<16x32xf32>
    %133 = tpu.matmul %130, %132, %cst_46 {dimension_numbers = #tpu.dot_dimension_numbers<[1], [0], [0], [1], [0, 0, 1, 1], [], []>} : vector<16x32xf32>, vector<32x32xf32>, vector<16x32xf32> -> vector<16x32xf32>
    %134 = vector.broadcast %32 : vector<1x32xf32> to vector<16x32xf32>
    %135 = arith.addf %133, %134 : vector<16x32xf32>
    %136 = arith.addf %25, %135 : vector<16x32xf32>
    %cst_47 = arith.constant dense<0.000000e+00> : vector<16xf32>
    %137 = vector.multi_reduction <add>, %136, %cst_47 [1] : vector<16x32xf32> to vector<16xf32>
    %138 = vector.shape_cast %137 : vector<16xf32> to vector<16x1xf32>
    %cst_48 = arith.constant 3.200000e+01 : f32
    %139 = vector.broadcast %cst_48 : f32 to vector<16x1xf32>
    %140 = arith.divf %138, %139 : vector<16x1xf32>
    %141 = vector.broadcast %140 : vector<16x1xf32> to vector<16x32xf32>
    %142 = arith.subf %136, %141 : vector<16x32xf32>
    %143 = arith.mulf %142, %142 : vector<16x32xf32>
    %cst_49 = arith.constant dense<0.000000e+00> : vector<16xf32>
    %144 = vector.multi_reduction <add>, %143, %cst_49 [1] : vector<16x32xf32> to vector<16xf32>
    %145 = vector.shape_cast %144 : vector<16xf32> to vector<16x1xf32>
    %cst_50 = arith.constant 3.200000e+01 : f32
    %146 = vector.broadcast %cst_50 : f32 to vector<16x1xf32>
    %147 = arith.divf %145, %146 : vector<16x1xf32>
    %148 = vector.broadcast %140 : vector<16x1xf32> to vector<16x32xf32>
    %149 = arith.subf %136, %148 : vector<16x32xf32>
    %cst_51 = arith.constant 9.99999996E-13 : f32
    %150 = vector.broadcast %cst_51 : f32 to vector<16x1xf32>
    %151 = arith.addf %147, %150 : vector<16x1xf32>
    %152 = math.rsqrt %151 : vector<16x1xf32>
    %153 = vector.broadcast %152 : vector<16x1xf32> to vector<16x32xf32>
    %154 = arith.mulf %149, %153 : vector<16x32xf32>
    %155 = vector.broadcast %35 : vector<1x32xf32> to vector<16x32xf32>
    %156 = arith.mulf %154, %155 : vector<16x32xf32>
    %157 = vector.broadcast %36 : vector<1x32xf32> to vector<16x32xf32>
    %158 = arith.addf %156, %157 : vector<16x32xf32>
    %c0_52 = arith.constant 0 : index
    %c0_53 = arith.constant 0 : index
    %c0_54 = arith.constant 0 : index
    %159 = vector.load %arg6[%c0_52, %c0_53, %c0_54] : memref<2x32x64xf32, #tpu.memory_space<vmem>>, vector<1x32x64xf32>
    %160 = vector.shape_cast %159 : vector<1x32x64xf32> to vector<32x64xf32>
    %cst_55 = arith.constant dense<0.000000e+00> : vector<16x64xf32>
    %161 = tpu.matmul %158, %160, %cst_55 {dimension_numbers = #tpu.dot_dimension_numbers<[1], [0], [0], [1], [0, 0, 1, 1], [], []>} : vector<16x32xf32>, vector<32x64xf32>, vector<16x64xf32> -> vector<16x64xf32>
    %162 = vector.broadcast %33 : vector<1x64xf32> to vector<16x64xf32>
    %163 = arith.addf %161, %162 : vector<16x64xf32>
    %164 = arith.mulf %163, %163 : vector<16x64xf32>
    %165 = arith.mulf %163, %164 : vector<16x64xf32>
    %cst_56 = arith.constant 4.471500e-02 : f32
    %166 = vector.broadcast %cst_56 : f32 to vector<16x64xf32>
    %167 = arith.mulf %166, %165 : vector<16x64xf32>
    %168 = arith.addf %163, %167 : vector<16x64xf32>
    %cst_57 = arith.constant 0.797884583 : f32
    %169 = vector.broadcast %cst_57 : f32 to vector<16x64xf32>
    %170 = arith.mulf %169, %168 : vector<16x64xf32>
    %171 = math.tanh %170 : vector<16x64xf32>
    %cst_58 = arith.constant 1.000000e+00 : f32
    %172 = vector.broadcast %cst_58 : f32 to vector<16x64xf32>
    %173 = arith.addf %172, %171 : vector<16x64xf32>
    %cst_59 = arith.constant 5.000000e-01 : f32
    %174 = vector.broadcast %cst_59 : f32 to vector<16x64xf32>
    %175 = arith.mulf %174, %173 : vector<16x64xf32>
    %176 = arith.mulf %163, %175 : vector<16x64xf32>
    %c0_60 = arith.constant 0 : index
    %c0_61 = arith.constant 0 : index
    %c0_62 = arith.constant 0 : index
    %177 = vector.load %arg7[%c0_60, %c0_61, %c0_62] : memref<2x64x32xf32, #tpu.memory_space<vmem>>, vector<1x64x32xf32>
    %178 = vector.shape_cast %177 : vector<1x64x32xf32> to vector<64x32xf32>
    %cst_63 = arith.constant dense<0.000000e+00> : vector<16x32xf32>
    %179 = tpu.matmul %176, %178, %cst_63 {dimension_numbers = #tpu.dot_dimension_numbers<[1], [0], [0], [1], [0, 0, 1, 1], [], []>} : vector<16x64xf32>, vector<64x32xf32>, vector<16x32xf32> -> vector<16x32xf32>
    %180 = vector.broadcast %34 : vector<1x32xf32> to vector<16x32xf32>
    %181 = arith.addf %179, %180 : vector<16x32xf32>
    %182 = arith.addf %158, %181 : vector<16x32xf32>
    %cst_64 = arith.constant dense<0.000000e+00> : vector<16xf32>
    %183 = vector.multi_reduction <add>, %182, %cst_64 [1] : vector<16x32xf32> to vector<16xf32>
    %184 = vector.shape_cast %183 : vector<16xf32> to vector<16x1xf32>
    %cst_65 = arith.constant 3.200000e+01 : f32
    %185 = vector.broadcast %cst_65 : f32 to vector<16x1xf32>
    %186 = arith.divf %184, %185 : vector<16x1xf32>
    %187 = vector.broadcast %186 : vector<16x1xf32> to vector<16x32xf32>
    %188 = arith.subf %182, %187 : vector<16x32xf32>
    %189 = arith.mulf %188, %188 : vector<16x32xf32>
    %cst_66 = arith.constant dense<0.000000e+00> : vector<16xf32>
    %190 = vector.multi_reduction <add>, %189, %cst_66 [1] : vector<16x32xf32> to vector<16xf32>
    %191 = vector.shape_cast %190 : vector<16xf32> to vector<16x1xf32>
    %cst_67 = arith.constant 3.200000e+01 : f32
    %192 = vector.broadcast %cst_67 : f32 to vector<16x1xf32>
    %193 = arith.divf %191, %192 : vector<16x1xf32>
    %194 = vector.broadcast %186 : vector<16x1xf32> to vector<16x32xf32>
    %195 = arith.subf %182, %194 : vector<16x32xf32>
    %cst_68 = arith.constant 9.99999996E-13 : f32
    %196 = vector.broadcast %cst_68 : f32 to vector<16x1xf32>
    %197 = arith.addf %193, %196 : vector<16x1xf32>
    %198 = math.rsqrt %197 : vector<16x1xf32>
    %199 = vector.broadcast %198 : vector<16x1xf32> to vector<16x32xf32>
    %200 = arith.mulf %195, %199 : vector<16x32xf32>
    %201 = vector.broadcast %37 : vector<1x32xf32> to vector<16x32xf32>
    %202 = arith.mulf %200, %201 : vector<16x32xf32>
    %203 = vector.broadcast %38 : vector<1x32xf32> to vector<16x32xf32>
    %204 = arith.addf %202, %203 : vector<16x32xf32>
    %205 = vector.extract_strided_slice %0 {offsets = [10, 0], sizes = [1, 96], strides = [1, 1]} : vector<18x96xf32> to vector<1x96xf32>
    %206 = vector.extract_strided_slice %0 {offsets = [11, 0], sizes = [1, 32], strides = [1, 1]} : vector<18x96xf32> to vector<1x32xf32>
    %207 = vector.extract_strided_slice %0 {offsets = [12, 0], sizes = [1, 64], strides = [1, 1]} : vector<18x96xf32> to vector<1x64xf32>
    %208 = vector.extract_strided_slice %0 {offsets = [13, 0], sizes = [1, 32], strides = [1, 1]} : vector<18x96xf32> to vector<1x32xf32>
    %209 = vector.extract_strided_slice %0 {offsets = [14, 0], sizes = [1, 32], strides = [1, 1]} : vector<18x96xf32> to vector<1x32xf32>
    %210 = vector.extract_strided_slice %0 {offsets = [15, 0], sizes = [1, 32], strides = [1, 1]} : vector<18x96xf32> to vector<1x32xf32>
    %211 = vector.extract_strided_slice %0 {offsets = [16, 0], sizes = [1, 32], strides = [1, 1]} : vector<18x96xf32> to vector<1x32xf32>
    %212 = vector.extract_strided_slice %0 {offsets = [17, 0], sizes = [1, 32], strides = [1, 1]} : vector<18x96xf32> to vector<1x32xf32>
    %c1 = arith.constant 1 : index
    %c0_69 = arith.constant 0 : index
    %c0_70 = arith.constant 0 : index
    %213 = vector.load %arg4[%c1, %c0_69, %c0_70] : memref<2x32x96xf32, #tpu.memory_space<vmem>>, vector<1x32x96xf32>
    %214 = vector.shape_cast %213 : vector<1x32x96xf32> to vector<32x96xf32>
    %cst_71 = arith.constant dense<0.000000e+00> : vector<16x96xf32>
    %215 = tpu.matmul %204, %214, %cst_71 {dimension_numbers = #tpu.dot_dimension_numbers<[1], [0], [0], [1], [0, 0, 1, 1], [], []>} : vector<16x32xf32>, vector<32x96xf32>, vector<16x96xf32> -> vector<16x96xf32>
    %216 = vector.broadcast %205 : vector<1x96xf32> to vector<16x96xf32>
    %217 = arith.addf %215, %216 : vector<16x96xf32>
    %218 = vector.extract_strided_slice %30 {offsets = [0, 0], sizes = [1, 8], strides = [1, 1]} : vector<2x8xf32> to vector<1x8xf32>
    %219 = vector.extract_strided_slice %217 {offsets = [0, 0], sizes = [8, 16], strides = [1, 1]} : vector<16x96xf32> to vector<8x16xf32>
    %220 = vector.extract_strided_slice %217 {offsets = [0, 32], sizes = [8, 16], strides = [1, 1]} : vector<16x96xf32> to vector<8x16xf32>
    %221 = vector.extract_strided_slice %217 {offsets = [0, 64], sizes = [8, 16], strides = [1, 1]} : vector<16x96xf32> to vector<8x16xf32>
    %222 = tpu.transpose %220, [1, 0] : vector<8x16xf32> -> vector<16x8xf32>
    %cst_72 = arith.constant dense<0.000000e+00> : vector<8x8xf32>
    %223 = tpu.matmul %219, %222, %cst_72 {dimension_numbers = #tpu.dot_dimension_numbers<[1], [0], [0], [1], [0, 0, 1, 1], [], []>} : vector<8x16xf32>, vector<16x8xf32>, vector<8x8xf32> -> vector<8x8xf32>
    %cst_73 = arith.constant 2.500000e-01 : f32
    %224 = vector.broadcast %cst_73 : f32 to vector<8x8xf32>
    %225 = arith.mulf %223, %224 : vector<8x8xf32>
    %226 = vector.broadcast %218 : vector<1x8xf32> to vector<8x8xf32>
    %227 = arith.addf %225, %226 : vector<8x8xf32>
    %cst_74 = arith.constant dense<0xFF800000> : vector<8xf32>
    %228 = vector.multi_reduction <maximumf>, %227, %cst_74 [1] : vector<8x8xf32> to vector<8xf32>
    %229 = vector.shape_cast %228 : vector<8xf32> to vector<8x1xf32>
    %230 = vector.broadcast %229 : vector<8x1xf32> to vector<8x8xf32>
    %231 = arith.subf %227, %230 : vector<8x8xf32>
    %232 = math.exp %231 : vector<8x8xf32>
    %cst_75 = arith.constant dense<0.000000e+00> : vector<8xf32>
    %233 = vector.multi_reduction <add>, %232, %cst_75 [1] : vector<8x8xf32> to vector<8xf32>
    %234 = vector.shape_cast %233 : vector<8xf32> to vector<8x1xf32>
    %235 = tpu.reciprocal %234 {approx = true} : vector<8x1xf32> -> vector<8x1xf32>
    %236 = vector.broadcast %235 : vector<8x1xf32> to vector<8x8xf32>
    %237 = arith.mulf %232, %236 : vector<8x8xf32>
    %cst_76 = arith.constant dense<0.000000e+00> : vector<8x16xf32>
    %238 = tpu.matmul %237, %221, %cst_76 {dimension_numbers = #tpu.dot_dimension_numbers<[1], [0], [0], [1], [0, 0, 1, 1], [], []>} : vector<8x8xf32>, vector<8x16xf32>, vector<8x16xf32> -> vector<8x16xf32>
    %c0_77 = arith.constant 0 : index
    %c0_78 = arith.constant 0 : index
    %239 = vector.load %arg9[%c0_77, %c0_78] : memref<16x32xf32, #tpu.memory_space<vmem>>, vector<8x16xf32>
    tpu.vector_store %arg9[%c0_77, %c0_78], %238 {strides = array<i32>} : memref<16x32xf32, #tpu.memory_space<vmem>>, vector<8x16xf32>,
    %240 = vector.extract_strided_slice %217 {offsets = [0, 16], sizes = [8, 16], strides = [1, 1]} : vector<16x96xf32> to vector<8x16xf32>
    %241 = vector.extract_strided_slice %217 {offsets = [0, 48], sizes = [8, 16], strides = [1, 1]} : vector<16x96xf32> to vector<8x16xf32>
    %242 = vector.extract_strided_slice %217 {offsets = [0, 80], sizes = [8, 16], strides = [1, 1]} : vector<16x96xf32> to vector<8x16xf32>
    %243 = tpu.transpose %241, [1, 0] : vector<8x16xf32> -> vector<16x8xf32>
    %cst_79 = arith.constant dense<0.000000e+00> : vector<8x8xf32>
    %244 = tpu.matmul %240, %243, %cst_79 {dimension_numbers = #tpu.dot_dimension_numbers<[1], [0], [0], [1], [0, 0, 1, 1], [], []>} : vector<8x16xf32>, vector<16x8xf32>, vector<8x8xf32> -> vector<8x8xf32>
    %cst_80 = arith.constant 2.500000e-01 : f32
    %245 = vector.broadcast %cst_80 : f32 to vector<8x8xf32>
    %246 = arith.mulf %244, %245 : vector<8x8xf32>
    %247 = vector.broadcast %218 : vector<1x8xf32> to vector<8x8xf32>
    %248 = arith.addf %246, %247 : vector<8x8xf32>
    %cst_81 = arith.constant dense<0xFF800000> : vector<8xf32>
    %249 = vector.multi_reduction <maximumf>, %248, %cst_81 [1] : vector<8x8xf32> to vector<8xf32>
    %250 = vector.shape_cast %249 : vector<8xf32> to vector<8x1xf32>
    %251 = vector.broadcast %250 : vector<8x1xf32> to vector<8x8xf32>
    %252 = arith.subf %248, %251 : vector<8x8xf32>
    %253 = math.exp %252 : vector<8x8xf32>
    %cst_82 = arith.constant dense<0.000000e+00> : vector<8xf32>
    %254 = vector.multi_reduction <add>, %253, %cst_82 [1] : vector<8x8xf32> to vector<8xf32>
    %255 = vector.shape_cast %254 : vector<8xf32> to vector<8x1xf32>
    %256 = tpu.reciprocal %255 {approx = true} : vector<8x1xf32> -> vector<8x1xf32>
    %257 = vector.broadcast %256 : vector<8x1xf32> to vector<8x8xf32>
    %258 = arith.mulf %253, %257 : vector<8x8xf32>
    %cst_83 = arith.constant dense<0.000000e+00> : vector<8x16xf32>
    %259 = tpu.matmul %258, %242, %cst_83 {dimension_numbers = #tpu.dot_dimension_numbers<[1], [0], [0], [1], [0, 0, 1, 1], [], []>} : vector<8x8xf32>, vector<8x16xf32>, vector<8x16xf32> -> vector<8x16xf32>
    %c0_84 = arith.constant 0 : index
    %c16_85 = arith.constant 16 : index
    %260 = vector.load %arg9[%c0_84, %c16_85] : memref<16x32xf32, #tpu.memory_space<vmem>>, vector<8x16xf32>
    tpu.vector_store %arg9[%c0_84, %c16_85], %259 {strides = array<i32>} : memref<16x32xf32, #tpu.memory_space<vmem>>, vector<8x16xf32>,
    %261 = vector.extract_strided_slice %30 {offsets = [1, 0], sizes = [1, 8], strides = [1, 1]} : vector<2x8xf32> to vector<1x8xf32>
    %262 = vector.extract_strided_slice %217 {offsets = [8, 0], sizes = [8, 16], strides = [1, 1]} : vector<16x96xf32> to vector<8x16xf32>
    %263 = vector.extract_strided_slice %217 {offsets = [8, 32], sizes = [8, 16], strides = [1, 1]} : vector<16x96xf32> to vector<8x16xf32>
    %264 = vector.extract_strided_slice %217 {offsets = [8, 64], sizes = [8, 16], strides = [1, 1]} : vector<16x96xf32> to vector<8x16xf32>
    %265 = tpu.transpose %263, [1, 0] : vector<8x16xf32> -> vector<16x8xf32>
    %cst_86 = arith.constant dense<0.000000e+00> : vector<8x8xf32>
    %266 = tpu.matmul %262, %265, %cst_86 {dimension_numbers = #tpu.dot_dimension_numbers<[1], [0], [0], [1], [0, 0, 1, 1], [], []>} : vector<8x16xf32>, vector<16x8xf32>, vector<8x8xf32> -> vector<8x8xf32>
    %cst_87 = arith.constant 2.500000e-01 : f32
    %267 = vector.broadcast %cst_87 : f32 to vector<8x8xf32>
    %268 = arith.mulf %266, %267 : vector<8x8xf32>
    %269 = vector.broadcast %261 : vector<1x8xf32> to vector<8x8xf32>
    %270 = arith.addf %268, %269 : vector<8x8xf32>
    %cst_88 = arith.constant dense<0xFF800000> : vector<8xf32>
    %271 = vector.multi_reduction <maximumf>, %270, %cst_88 [1] : vector<8x8xf32> to vector<8xf32>
    %272 = vector.shape_cast %271 : vector<8xf32> to vector<8x1xf32>
    %273 = vector.broadcast %272 : vector<8x1xf32> to vector<8x8xf32>
    %274 = arith.subf %270, %273 : vector<8x8xf32>
    %275 = math.exp %274 : vector<8x8xf32>
    %cst_89 = arith.constant dense<0.000000e+00> : vector<8xf32>
    %276 = vector.multi_reduction <add>, %275, %cst_89 [1] : vector<8x8xf32> to vector<8xf32>
    %277 = vector.shape_cast %276 : vector<8xf32> to vector<8x1xf32>
    %278 = tpu.reciprocal %277 {approx = true} : vector<8x1xf32> -> vector<8x1xf32>
    %279 = vector.broadcast %278 : vector<8x1xf32> to vector<8x8xf32>
    %280 = arith.mulf %275, %279 : vector<8x8xf32>
    %cst_90 = arith.constant dense<0.000000e+00> : vector<8x16xf32>
    %281 = tpu.matmul %280, %264, %cst_90 {dimension_numbers = #tpu.dot_dimension_numbers<[1], [0], [0], [1], [0, 0, 1, 1], [], []>} : vector<8x8xf32>, vector<8x16xf32>, vector<8x16xf32> -> vector<8x16xf32>
    %c8_91 = arith.constant 8 : index
    %c0_92 = arith.constant 0 : index
    %282 = vector.load %arg9[%c8_91, %c0_92] : memref<16x32xf32, #tpu.memory_space<vmem>>, vector<8x16xf32>
    tpu.vector_store %arg9[%c8_91, %c0_92], %281 {strides = array<i32>} : memref<16x32xf32, #tpu.memory_space<vmem>>, vector<8x16xf32>,
    %283 = vector.extract_strided_slice %217 {offsets = [8, 16], sizes = [8, 16], strides = [1, 1]} : vector<16x96xf32> to vector<8x16xf32>
    %284 = vector.extract_strided_slice %217 {offsets = [8, 48], sizes = [8, 16], strides = [1, 1]} : vector<16x96xf32> to vector<8x16xf32>
    %285 = vector.extract_strided_slice %217 {offsets = [8, 80], sizes = [8, 16], strides = [1, 1]} : vector<16x96xf32> to vector<8x16xf32>
    %286 = tpu.transpose %284, [1, 0] : vector<8x16xf32> -> vector<16x8xf32>
    %cst_93 = arith.constant dense<0.000000e+00> : vector<8x8xf32>
    %287 = tpu.matmul %283, %286, %cst_93 {dimension_numbers = #tpu.dot_dimension_numbers<[1], [0], [0], [1], [0, 0, 1, 1], [], []>} : vector<8x16xf32>, vector<16x8xf32>, vector<8x8xf32> -> vector<8x8xf32>
    %cst_94 = arith.constant 2.500000e-01 : f32
    %288 = vector.broadcast %cst_94 : f32 to vector<8x8xf32>
    %289 = arith.mulf %287, %288 : vector<8x8xf32>
    %290 = vector.broadcast %261 : vector<1x8xf32> to vector<8x8xf32>
    %291 = arith.addf %289, %290 : vector<8x8xf32>
    %cst_95 = arith.constant dense<0xFF800000> : vector<8xf32>
    %292 = vector.multi_reduction <maximumf>, %291, %cst_95 [1] : vector<8x8xf32> to vector<8xf32>
    %293 = vector.shape_cast %292 : vector<8xf32> to vector<8x1xf32>
    %294 = vector.broadcast %293 : vector<8x1xf32> to vector<8x8xf32>
    %295 = arith.subf %291, %294 : vector<8x8xf32>
    %296 = math.exp %295 : vector<8x8xf32>
    %cst_96 = arith.constant dense<0.000000e+00> : vector<8xf32>
    %297 = vector.multi_reduction <add>, %296, %cst_96 [1] : vector<8x8xf32> to vector<8xf32>
    %298 = vector.shape_cast %297 : vector<8xf32> to vector<8x1xf32>
    %299 = tpu.reciprocal %298 {approx = true} : vector<8x1xf32> -> vector<8x1xf32>
    %300 = vector.broadcast %299 : vector<8x1xf32> to vector<8x8xf32>
    %301 = arith.mulf %296, %300 : vector<8x8xf32>
    %cst_97 = arith.constant dense<0.000000e+00> : vector<8x16xf32>
    %302 = tpu.matmul %301, %285, %cst_97 {dimension_numbers = #tpu.dot_dimension_numbers<[1], [0], [0], [1], [0, 0, 1, 1], [], []>} : vector<8x8xf32>, vector<8x16xf32>, vector<8x16xf32> -> vector<8x16xf32>
    %c8_98 = arith.constant 8 : index
    %c16_99 = arith.constant 16 : index
    %303 = vector.load %arg9[%c8_98, %c16_99] : memref<16x32xf32, #tpu.memory_space<vmem>>, vector<8x16xf32>
    tpu.vector_store %arg9[%c8_98, %c16_99], %302 {strides = array<i32>} : memref<16x32xf32, #tpu.memory_space<vmem>>, vector<8x16xf32>,
    %c0_100 = arith.constant 0 : index
    %c0_101 = arith.constant 0 : index
    %304 = vector.load %arg9[%c0_100, %c0_101] : memref<16x32xf32, #tpu.memory_space<vmem>>, vector<16x32xf32>
    %c1_102 = arith.constant 1 : index
    %c0_103 = arith.constant 0 : index
    %c0_104 = arith.constant 0 : index
    %305 = vector.load %arg5[%c1_102, %c0_103, %c0_104] : memref<2x32x32xf32, #tpu.memory_space<vmem>>, vector<1x32x32xf32>
    %306 = vector.shape_cast %305 : vector<1x32x32xf32> to vector<32x32xf32>
    %cst_105 = arith.constant dense<0.000000e+00> : vector<16x32xf32>
    %307 = tpu.matmul %304, %306, %cst_105 {dimension_numbers = #tpu.dot_dimension_numbers<[1], [0], [0], [1], [0, 0, 1, 1], [], []>} : vector<16x32xf32>, vector<32x32xf32>, vector<16x32xf32> -> vector<16x32xf32>
    %308 = vector.broadcast %206 : vector<1x32xf32> to vector<16x32xf32>
    %309 = arith.addf %307, %308 : vector<16x32xf32>
    %310 = arith.addf %204, %309 : vector<16x32xf32>
    %cst_106 = arith.constant dense<0.000000e+00> : vector<16xf32>
    %311 = vector.multi_reduction <add>, %310, %cst_106 [1] : vector<16x32xf32> to vector<16xf32>
    %312 = vector.shape_cast %311 : vector<16xf32> to vector<16x1xf32>
    %cst_107 = arith.constant 3.200000e+01 : f32
    %313 = vector.broadcast %cst_107 : f32 to vector<16x1xf32>
    %314 = arith.divf %312, %313 : vector<16x1xf32>
    %315 = vector.broadcast %314 : vector<16x1xf32> to vector<16x32xf32>
    %316 = arith.subf %310, %315 : vector<16x32xf32>
    %317 = arith.mulf %316, %316 : vector<16x32xf32>
    %cst_108 = arith.constant dense<0.000000e+00> : vector<16xf32>
    %318 = vector.multi_reduction <add>, %317, %cst_108 [1] : vector<16x32xf32> to vector<16xf32>
    %319 = vector.shape_cast %318 : vector<16xf32> to vector<16x1xf32>
    %cst_109 = arith.constant 3.200000e+01 : f32
    %320 = vector.broadcast %cst_109 : f32 to vector<16x1xf32>
    %321 = arith.divf %319, %320 : vector<16x1xf32>
    %322 = vector.broadcast %314 : vector<16x1xf32> to vector<16x32xf32>
    %323 = arith.subf %310, %322 : vector<16x32xf32>
    %cst_110 = arith.constant 9.99999996E-13 : f32
    %324 = vector.broadcast %cst_110 : f32 to vector<16x1xf32>
    %325 = arith.addf %321, %324 : vector<16x1xf32>
    %326 = math.rsqrt %325 : vector<16x1xf32>
    %327 = vector.broadcast %326 : vector<16x1xf32> to vector<16x32xf32>
    %328 = arith.mulf %323, %327 : vector<16x32xf32>
    %329 = vector.broadcast %209 : vector<1x32xf32> to vector<16x32xf32>
    %330 = arith.mulf %328, %329 : vector<16x32xf32>
    %331 = vector.broadcast %210 : vector<1x32xf32> to vector<16x32xf32>
    %332 = arith.addf %330, %331 : vector<16x32xf32>
    %c1_111 = arith.constant 1 : index
    %c0_112 = arith.constant 0 : index
    %c0_113 = arith.constant 0 : index
    %333 = vector.load %arg6[%c1_111, %c0_112, %c0_113] : memref<2x32x64xf32, #tpu.memory_space<vmem>>, vector<1x32x64xf32>
    %334 = vector.shape_cast %333 : vector<1x32x64xf32> to vector<32x64xf32>
    %cst_114 = arith.constant dense<0.000000e+00> : vector<16x64xf32>
    %335 = tpu.matmul %332, %334, %cst_114 {dimension_numbers = #tpu.dot_dimension_numbers<[1], [0], [0], [1], [0, 0, 1, 1], [], []>} : vector<16x32xf32>, vector<32x64xf32>, vector<16x64xf32> -> vector<16x64xf32>
    %336 = vector.broadcast %207 : vector<1x64xf32> to vector<16x64xf32>
    %337 = arith.addf %335, %336 : vector<16x64xf32>
    %338 = arith.mulf %337, %337 : vector<16x64xf32>
    %339 = arith.mulf %337, %338 : vector<16x64xf32>
    %cst_115 = arith.constant 4.471500e-02 : f32
    %340 = vector.broadcast %cst_115 : f32 to vector<16x64xf32>
    %341 = arith.mulf %340, %339 : vector<16x64xf32>
    %342 = arith.addf %337, %341 : vector<16x64xf32>
    %cst_116 = arith.constant 0.797884583 : f32
    %343 = vector.broadcast %cst_116 : f32 to vector<16x64xf32>
    %344 = arith.mulf %343, %342 : vector<16x64xf32>
    %345 = math.tanh %344 : vector<16x64xf32>
    %cst_117 = arith.constant 1.000000e+00 : f32
    %346 = vector.broadcast %cst_117 : f32 to vector<16x64xf32>
    %347 = arith.addf %346, %345 : vector<16x64xf32>
    %cst_118 = arith.constant 5.000000e-01 : f32
    %348 = vector.broadcast %cst_118 : f32 to vector<16x64xf32>
    %349 = arith.mulf %348, %347 : vector<16x64xf32>
    %350 = arith.mulf %337, %349 : vector<16x64xf32>
    %c1_119 = arith.constant 1 : index
    %c0_120 = arith.constant 0 : index
    %c0_121 = arith.constant 0 : index
    %351 = vector.load %arg7[%c1_119, %c0_120, %c0_121] : memref<2x64x32xf32, #tpu.memory_space<vmem>>, vector<1x64x32xf32>
    %352 = vector.shape_cast %351 : vector<1x64x32xf32> to vector<64x32xf32>
    %cst_122 = arith.constant dense<0.000000e+00> : vector<16x32xf32>
    %353 = tpu.matmul %350, %352, %cst_122 {dimension_numbers = #tpu.dot_dimension_numbers<[1], [0], [0], [1], [0, 0, 1, 1], [], []>} : vector<16x64xf32>, vector<64x32xf32>, vector<16x32xf32> -> vector<16x32xf32>
    %354 = vector.broadcast %208 : vector<1x32xf32> to vector<16x32xf32>
    %355 = arith.addf %353, %354 : vector<16x32xf32>
    %356 = arith.addf %332, %355 : vector<16x32xf32>
    %cst_123 = arith.constant dense<0.000000e+00> : vector<16xf32>
    %357 = vector.multi_reduction <add>, %356, %cst_123 [1] : vector<16x32xf32> to vector<16xf32>
    %358 = vector.shape_cast %357 : vector<16xf32> to vector<16x1xf32>
    %cst_124 = arith.constant 3.200000e+01 : f32
    %359 = vector.broadcast %cst_124 : f32 to vector<16x1xf32>
    %360 = arith.divf %358, %359 : vector<16x1xf32>
    %361 = vector.broadcast %360 : vector<16x1xf32> to vector<16x32xf32>
    %362 = arith.subf %356, %361 : vector<16x32xf32>
    %363 = arith.mulf %362, %362 : vector<16x32xf32>
    %cst_125 = arith.constant dense<0.000000e+00> : vector<16xf32>
    %364 = vector.multi_reduction <add>, %363, %cst_125 [1] : vector<16x32xf32> to vector<16xf32>
    %365 = vector.shape_cast %364 : vector<16xf32> to vector<16x1xf32>
    %cst_126 = arith.constant 3.200000e+01 : f32
    %366 = vector.broadcast %cst_126 : f32 to vector<16x1xf32>
    %367 = arith.divf %365, %366 : vector<16x1xf32>
    %368 = vector.broadcast %360 : vector<16x1xf32> to vector<16x32xf32>
    %369 = arith.subf %356, %368 : vector<16x32xf32>
    %cst_127 = arith.constant 9.99999996E-13 : f32
    %370 = vector.broadcast %cst_127 : f32 to vector<16x1xf32>
    %371 = arith.addf %367, %370 : vector<16x1xf32>
    %372 = math.rsqrt %371 : vector<16x1xf32>
    %373 = vector.broadcast %372 : vector<16x1xf32> to vector<16x32xf32>
    %374 = arith.mulf %369, %373 : vector<16x32xf32>
    %375 = vector.broadcast %211 : vector<1x32xf32> to vector<16x32xf32>
    %376 = arith.mulf %374, %375 : vector<16x32xf32>
    %377 = vector.broadcast %212 : vector<1x32xf32> to vector<16x32xf32>
    %378 = arith.addf %376, %377 : vector<16x32xf32>
    %c0_128 = arith.constant 0 : index
    %c0_129 = arith.constant 0 : index
    %379 = vector.load %arg8[%c0_128, %c0_129] : memref<16x32xf32, #tpu.memory_space<vmem>>, vector<16x32xf32>
    tpu.vector_store %arg8[%c0_128, %c0_129], %378 {strides = array<i32>} : memref<16x32xf32, #tpu.memory_space<vmem>>, vector<16x32xf32>,
    return
  }
  func.func @transform_0(%arg0: i32) -> (i32, i32) {
    %c0_i32 = arith.constant 0 : i32
    %c0_i32_0 = arith.constant 0 : i32
    %c0_i32_1 = arith.constant 0 : i32
    return %c0_i32, %c0_i32_0 : i32, i32
  }
  func.func @transform_1(%arg0: i32) -> (i32, i32) {
    %c0_i32 = arith.constant 0 : i32
    %c0_i32_0 = arith.constant 0 : i32
    %c0_i32_1 = arith.constant 0 : i32
    return %c0_i32, %c0_i32_0 : i32, i32
  }
  func.func @transform_2(%arg0: i32) -> (i32, i32) {
    %c0_i32 = arith.constant 0 : i32
    %c0_i32_0 = arith.constant 0 : i32
    %c0_i32_1 = arith.constant 0 : i32
    return %c0_i32, %c0_i32_0 : i32, i32
  }
  func.func @transform_3(%arg0: i32) -> (i32, i32, i32) {
    %c0_i32 = arith.constant 0 : i32
    %c0_i32_0 = arith.constant 0 : i32
    %c0_i32_1 = arith.constant 0 : i32
    %c0_i32_2 = arith.constant 0 : i32
    return %c0_i32, %c0_i32_0, %c0_i32_1 : i32, i32, i32
  }
  func.func @transform_4(%arg0: i32) -> (i32, i32, i32) {
    %c0_i32 = arith.constant 0 : i32
    %c0_i32_0 = arith.constant 0 : i32
    %c0_i32_1 = arith.constant 0 : i32
    %c0_i32_2 = arith.constant 0 : i32
    return %c0_i32, %c0_i32_0, %c0_i32_1 : i32, i32, i32
  }
  func.func @transform_5(%arg0: i32) -> (i32, i32, i32) {
    %c0_i32 = arith.constant 0 : i32
    %c0_i32_0 = arith.constant 0 : i32
    %c0_i32_1 = arith.constant 0 : i32
    %c0_i32_2 = arith.constant 0 : i32
    return %c0_i32, %c0_i32_0, %c0_i32_1 : i32, i32, i32
  }
  func.func @transform_6(%arg0: i32) -> (i32, i32, i32) {
    %c0_i32 = arith.constant 0 : i32
    %c0_i32_0 = arith.constant 0 : i32
    %c0_i32_1 = arith.constant 0 : i32
    %c0_i32_2 = arith.constant 0 : i32
    return %c0_i32, %c0_i32_0, %c0_i32_1 : i32, i32, i32
  }
  func.func @transform_7(%arg0: i32) -> (i32, i32) {
    %c0_i32 = arith.constant 0 : i32
    %c0_i32_0 = arith.constant 0 : i32
    %c0_i32_1 = arith.constant 0 : i32
    return %c0_i32, %c0_i32_0 : i32, i32
  }
}

</mosaic_0001>

<llo_original>
// kernel: tpu_custom_call.1
$region0: #{tpu_custom_call.1}
  #allocation0 [shape = 'u32[]', space=smem, size = 0x4, offset = 0x4, fixed_abs, tag = 'smem constant byte address 0x4 - core index']
  #allocation1 [shape = 'u32[144,128]{1,0:T(1,128)}', space=vmem, size = 0x12000, scoped, tag = 'internal scratch']
  #allocation2 [shape = 'f32[16,32]{1,0:T(8,128)}', space=vmem, size = 0x2000, scoped, tag = 'scratch operand']
  %s0 = inlined_call_operand.hbm [shape: f32[16,32], index: 0, kind: input, shape index: {}]
  %s1 = inlined_call_operand.hbm [shape: f32[2,8], index: 1, kind: input, shape index: {}]
  %s2 = inlined_call_operand.hbm [shape: f32[18,96], index: 2, kind: input, shape index: {}]
  %s3 = inlined_call_operand.vmem [shape: f32[2,32,96], index: 3, kind: input, shape index: {}]
  %s4 = inlined_call_operand.vmem [shape: f32[2,32,32], index: 4, kind: input, shape index: {}]
  %s5 = inlined_call_operand.vmem [shape: f32[2,32,64], index: 5, kind: input, shape index: {}]
  %s6 = inlined_call_operand.vmem [shape: f32[2,64,32], index: 6, kind: input, shape index: {}]
  %s7 = inlined_call_operand.hbm [shape: f32[16,32], index: 7, kind: output, shape index: {}]
  %s8 = sld [smem:[#allocation0]]
  $region50: #{tpu_custom_call.1} parent=0
    _
  %s10 = ssub.s32 1, %s8
  %s11 = scalar_select 0, %s10, %s8
  $region1: #{tpu_custom_call.1} parent=0
    #allocation3 [shape = 'u8[8192]{0}', space=vmem, size = 0x2000, scoped, tag = 'input window, operand 0, single buffered']
    #allocation4 [shape = 's32[1]{0}', space=sflag, size = 0x4, scoped, tag = 'scoped memory for tpu_custom_call.1']
    #allocation5 [shape = 's32[1]{0}', space=sflag, size = 0x4, scoped, tag = 'scoped memory for tpu_custom_call.1']
    #allocation6 [shape = 'u8[1024]{0}', space=vmem, size = 0x400, scoped, tag = 'input window, operand 1, single buffered']
    #allocation7 [shape = 's32[1]{0}', space=sflag, size = 0x4, scoped, tag = 'scoped memory for tpu_custom_call.1']
    #allocation8 [shape = 'u8[12288]{0}', space=vmem, size = 0x3000, scoped, tag = 'input window, operand 2, single buffered']
    #allocation9 [shape = 'u8[8192]{0}', space=vmem, size = 0x2000, scoped, tag = 'output window, operand 0, single buffered']
    %12 = vsyncpa [#allocation4], 0
    %13 = vsyncpa [#allocation7], 0
    %14 = vsyncpa [#allocation5], 0
    // Predicated region
    $region2: #{tpu_custom_call.1} parent=1 // pred_check
      _
    $region3: #{tpu_custom_call.1} parent=1 // pred_check_branch
      %16 = sbr.rel (0) target = $region5
    $region4: #{tpu_custom_call.1} parent=1 // pred_region
      %s18 = ssub.s32 256, 256
      %19 = vsyncadd [#allocation4], %s18
      %s20 = sshll.u32 [#allocation3], 4
      %s21 = int_to_ptr.vmem [resolvable:$true] %s20
      %26 = dma.hbm_to_vmem [thread:$0]  %s0, 256, %s21, [#allocation4], 128, 128, 8
    $region5: #{tpu_custom_call.1} parent=1 // pred_fallthru
      _
    // Predicated region
    $region6: #{tpu_custom_call.1} parent=1 // pred_check
      _
    $region7: #{tpu_custom_call.1} parent=1 // pred_check_branch
      %28 = sbr.rel (0) target = $region9
    $region8: #{tpu_custom_call.1} parent=1 // pred_region
      %s30 = ssub.s32 32, 32
      %31 = vsyncadd [#allocation7], %s30
      %s33 = sshll.u32 [#allocation6], 4
      %s34 = int_to_ptr.vmem [resolvable:$true] %s33
      %36 = dma.hbm_to_vmem [thread:$0]  %s1, 32, %s34, [#allocation7]
    $region9: #{tpu_custom_call.1} parent=1 // pred_fallthru
      _
    // Predicated region
    $region10: #{tpu_custom_call.1} parent=1 // pred_check
      _
    $region11: #{tpu_custom_call.1} parent=1 // pred_check_branch
      %38 = sbr.rel (0) target = $region13
    $region12: #{tpu_custom_call.1} parent=1 // pred_region
      %s40 = ssub.s32 384, 384
      %41 = vsyncadd [#allocation7], %s40
      %s42 = sshll.u32 [#allocation8], 4
      %s43 = int_to_ptr.vmem [resolvable:$true] %s42
      %48 = dma.hbm_to_vmem [thread:$0]  %s2, 384, %s43, [#allocation7], 128, 128, 8
    $region13: #{tpu_custom_call.1} parent=1 // pred_fallthru
      _
    // Predicated region
    $region14: #{tpu_custom_call.1} parent=1 // pred_check
      _
    $region15: #{tpu_custom_call.1} parent=1 // pred_check_branch
      %50 = sbr.rel (0) target = $region17
    $region16: #{tpu_custom_call.1} parent=1 // pred_region
      _
    $region17: #{tpu_custom_call.1} parent=1 // pred_fallthru
      _
    // Predicated region
    $region18: #{tpu_custom_call.1} parent=1 // pred_check
      _
    $region19: #{tpu_custom_call.1} parent=1 // pred_check_branch
      %52 = sbr.rel (0) target = $region21
    $region20: #{tpu_custom_call.1} parent=1 // pred_region
      _
    $region21: #{tpu_custom_call.1} parent=1 // pred_fallthru
      _
    // Predicated region
    $region22: #{tpu_custom_call.1} parent=1 // pred_check
      _
    $region23: #{tpu_custom_call.1} parent=1 // pred_check_branch
      %54 = sbr.rel (0) target = $region25
    $region24: #{tpu_custom_call.1} parent=1 // pred_region
      _
    $region25: #{tpu_custom_call.1} parent=1 // pred_fallthru
      _
    // Predicated region
    $region26: #{tpu_custom_call.1} parent=1 // pred_check
      _
    $region27: #{tpu_custom_call.1} parent=1 // pred_check_branch
      %56 = sbr.rel (0) target = $region29
    $region28: #{tpu_custom_call.1} parent=1 // pred_region
      _
    $region29: #{tpu_custom_call.1} parent=1 // pred_fallthru
      _
    // Predicated region
    $region30: #{tpu_custom_call.1} parent=1 // pred_check
      _
    $region31: #{tpu_custom_call.1} parent=1 // pred_check_branch
      %58 = sbr.rel (0) target = $region33
    $region32: #{tpu_custom_call.1} parent=1 // pred_region
      %59 = dma.done [#allocation4], 256
    $region33: #{tpu_custom_call.1} parent=1 // pred_fallthru
      _
    // Predicated region
    $region34: #{tpu_custom_call.1} parent=1 // pred_check
      _
    $region35: #{tpu_custom_call.1} parent=1 // pred_check_branch
      %61 = sbr.rel (0) target = $region37
    $region36: #{tpu_custom_call.1} parent=1 // pred_region
      %62 = dma.done [#allocation7], 32
    $region37: #{tpu_custom_call.1} parent=1 // pred_fallthru
      _
    // Predicated region
    $region38: #{tpu_custom_call.1} parent=1 // pred_check
      _
    $region39: #{tpu_custom_call.1} parent=1 // pred_check_branch
      %64 = sbr.rel (0) target = $region41
    $region40: #{tpu_custom_call.1} parent=1 // pred_region
      %65 = dma.done [#allocation7], 384
    $region41: #{tpu_custom_call.1} parent=1 // pred_fallthru
      _
    %v66 = vld [vmem:[#allocation8] sm:$0xff]
    %v67 = vld [vmem:[#allocation8 + $0x8] sm:$0xff]
    %v68 = vld [vmem:[#allocation8 + $0x10] sm:$0x3]
    %v69 = vld [vmem:[#allocation3] sm:$0xff]
    %v70 = vld [vmem:[#allocation3 + $0x8] sm:$0xff]
    %vm71 = vcmask 261120
    %v72 = vsel %vm71, %v69, 0.0
    %73 = vadd.xlane.f32.xlu0 %v72
    %v74 = vpop.xlane.xlu0 %73
    %v75 = vsel %vm71, %v70, 0.0
    %76 = vadd.xlane.f32.xlu0 %v75
    %v77 = vpop.xlane.xlu0 %76
    %v78 = vrcp.pop 32.0
    %v79 = vmul.f32 %v74, %v78
    %v80 = vmul.f32 %v77, %v78
    %v81 = vsub.f32 %v69, %v79
    %v82 = vsub.f32 %v70, %v80
    %v83 = vmul.f32 %v81, %v81
    %v84 = vmul.f32 %v82, %v82
    %v85 = vsel %vm71, %v83, 0.0
    %86 = vadd.xlane.f32.xlu0 %v85
    %v87 = vpop.xlane.xlu0 %86
    %v88 = vsel %vm71, %v84, 0.0
    %89 = vadd.xlane.f32.xlu0 %v88
    %v90 = vpop.xlane.xlu0 %89
    %v91 = vmul.f32 %v87, %v78
    %v92 = vmul.f32 %v90, %v78
    %v93 = vadd.f32 %v91, 1e-12
    %v94 = vadd.f32 %v92, 1e-12
    %v95 = vrsqrt.pop %v93
    %v96 = vrsqrt.pop %v94
    %v97 = vmul.f32 %v81, %v95
    %v98 = vmul.f32 %v82, %v96
    %v99 = vlaneseq
    %v100 = vshrl.u32 %v99, 7
    %v101 = vsub.s32 0, %v100
    %v102 = vrot.slane %v66, %v101
    %v103 = vmul.f32 %v97, %v102
    %v104 = vmul.f32 %v98, %v102
    %v105 = vlaneseq
    %v106 = vshrl.u32 %v105, 7
    %v107 = vsub.s32 1, %v106
    %v108 = vrot.slane %v66, %v107
    %v109 = vadd.f32 %v103, %v108
    %v110 = vadd.f32 %v104, %v108
    %v111 = vld [vmem:[#allocation6] sm:$0x3]
    %v112 = vsub.f32 1.0, %v111
    %v113 = vmul.f32 %v112, -1e+09
    %v114 = vld [vmem:[%s3] sm:$0xff]
    %v115 = vld [vmem:[%s3 + $0x8] sm:$0xff]
    %v116 = vld [vmem:[%s3 + $0x10] sm:$0xff]
    %v117 = vld [vmem:[%s3 + $0x18] sm:$0xff]
    %v118 = vlaneseq
    %v119 = vshrl.u32 %v118, 7
    %v120 = vsub.s32 2, %v119
    %v121 = vrot.slane %v66, %v120
    %v123 = vsel %vm71, %v109, 0
    %v126 = vsel %vm71, %v110, 0
    %128 = vmatprep.subr.mxu0 0.0
    %129 = vmatpush1.msra.mxu0 0.0
    %130 = vmatprep.subr.mxu0 0.0
    %131 = vmatpush1.msra.mxu0 0.0
    %132 = vmatprep.subr.mxu0 0.0
    %133 = vmatpush1.msra.mxu0 0.0
    %134 = vmatprep.subr.mxu0 0.0
    %135 = vmatpush1.msra.mxu0 0.0
    %136 = vmatprep.subr.mxu0 0.0
    %137 = vmatpush1.msra.mxu0 0.0
    %138 = vmatprep.subr.mxu0 0.0
    %139 = vmatpush1.msra.mxu0 0.0
    %140 = vmatprep.subr.mxu0 0.0
    %141 = vmatpush1.msra.mxu0 0.0
    %142 = vmatprep.subr.mxu0 0.0
    %143 = vmatpush1.msra.mxu0 0.0
    %144 = vmatprep.subr.mxu0 0.0
    %145 = vmatpush1.msra.mxu0 0.0
    %146 = vmatprep.subr.mxu0 0.0
    %147 = vmatpush1.msra.mxu0 0.0
    %148 = vmatprep.subr.mxu0 0.0
    %149 = vmatpush1.msra.mxu0 0.0
    %150 = vmatprep.subr.mxu0 0.0
    %151 = vmatpush1.msra.mxu0 0.0
    %152 = vmatprep.subr.mxu0 0.0
    %153 = vmatpush1.msra.mxu0 %v117
    %154 = vmatprep.subr.mxu0 0.0
    %155 = vmatpush1.msra.mxu0 %v116
    %156 = vmatprep.subr.mxu0 0.0
    %157 = vmatpush1.msra.mxu0 %v115
    %158 = vmatprep.subr.mxu0 0.0
    %159 = vmatpush1.msra.mxu0 %v114
    %160 = vmatprep.subr.mxu0 0.0
    %161 = vmatpush2.msra.mxu0 0.0
    %162 = vmatprep.subr.mxu0 0.0
    %163 = vmatpush2.msra.mxu0 0.0
    %164 = vmatprep.subr.mxu0 0.0
    %165 = vmatpush2.msra.mxu0 0.0
    %166 = vmatprep.subr.mxu0 0.0
    %167 = vmatpush2.msra.mxu0 0.0
    %168 = vmatprep.subr.mxu0 0.0
    %169 = vmatpush2.msra.mxu0 0.0
    %170 = vmatprep.subr.mxu0 0.0
    %171 = vmatpush2.msra.mxu0 0.0
    %172 = vmatprep.subr.mxu0 0.0
    %173 = vmatpush2.msra.mxu0 0.0
    %174 = vmatprep.subr.mxu0 0.0
    %175 = vmatpush2.msra.mxu0 0.0
    %176 = vmatprep.subr.mxu0 0.0
    %177 = vmatpush2.msra.mxu0 0.0
    %178 = vmatprep.subr.mxu0 0.0
    %179 = vmatpush2.msra.mxu0 0.0
    %180 = vmatprep.subr.mxu0 0.0
    %181 = vmatpush2.msra.mxu0 0.0
    %182 = vmatprep.subr.mxu0 0.0
    %183 = vmatpush2.msra.mxu0 0.0
    %184 = vmatprep.subr.mxu0 0.0
    %185 = vmatpush2.msra.mxu0 0.0
    %186 = vmatprep.subr.mxu0 0.0
    %187 = vmatpush2.msra.mxu0 0.0
    %188 = vmatprep.subr.mxu0 0.0
    %189 = vmatpush2.msra.mxu0 0.0
    %190 = vmatprep.subr.mxu0 0.0
    %191 = vmatpush2.msra.mxu0 0.0
    %192 = vmatprep.mubr.f32.mxu0 0.0
    %193 = vmatmul.mubr.f32.gmra.mxu0 %v123
    %v194 = vpop.f32.mrf.mxu0
    %v195 = vadd.f32 %v121, %v194
    %v196 = vpop.f32.mrf.mxu0
    %197 = vmatprep.mubr.f32.mxu0 0.0
    %198 = vmatmul.mubr.f32.gmra.mxu0 %v126
    %v199 = vpop.f32.mrf.mxu0
    %v200 = vadd.f32 %v121, %v199
    %v201 = vpop.f32.mrf.mxu0
    %202 = vdwg.mxu0
    %204 = vrot.lane.b32.xlu0 %v195, 96
    %v205 = vpop.permute.xlu0 %204
    %vm206 = vcmask 130048
    %v207 = vsel %vm206, %v195, 0
    %v209 = vsel %vm206, %v205, 0
    %211 = vmatprep.subr.mxu0 0.0
    %212 = vmatpush1.xpose.msra.mxu0 0.0
    %213 = vmatprep.subr.mxu0 0.0
    %214 = vmatpush1.xpose.msra.mxu0 0.0
    %215 = vmatprep.subr.mxu0 0.0
    %216 = vmatpush1.xpose.msra.mxu0 0.0
    %217 = vmatprep.subr.mxu0 0.0
    %218 = vmatpush1.xpose.msra.mxu0 0.0
    %219 = vmatprep.subr.mxu0 0.0
    %220 = vmatpush1.xpose.msra.mxu0 0.0
    %221 = vmatprep.subr.mxu0 0.0
    %222 = vmatpush1.xpose.msra.mxu0 0.0
    %223 = vmatprep.subr.mxu0 0.0
    %224 = vmatpush1.xpose.msra.mxu0 0.0
    %225 = vmatprep.subr.mxu0 0.0
    %226 = vmatpush1.xpose.msra.mxu0 0.0
    %227 = vmatprep.subr.mxu0 0.0
    %228 = vmatpush1.xpose.msra.mxu0 0.0
    %229 = vmatprep.subr.mxu0 0.0
    %230 = vmatpush1.xpose.msra.mxu0 0.0
    %231 = vmatprep.subr.mxu0 0.0
    %232 = vmatpush1.xpose.msra.mxu0 0.0
    %233 = vmatprep.subr.mxu0 0.0
    %234 = vmatpush1.xpose.msra.mxu0 0.0
    %235 = vmatprep.subr.mxu0 0.0
    %236 = vmatpush1.xpose.msra.mxu0 0.0
    %237 = vmatprep.subr.mxu0 0.0
    %238 = vmatpush1.xpose.msra.mxu0 0.0
    %239 = vmatprep.subr.mxu0 0.0
    %240 = vmatpush1.xpose.msra.mxu0 0.0
    %241 = vmatprep.subr.mxu0 0.0
    %242 = vmatpush1.xpose.msra.mxu0 %v209
    %243 = vmatprep.subr.mxu0 0.0
    %244 = vmatpush2.xpose.msra.mxu0 0.0
    %245 = vmatprep.subr.mxu0 0.0
    %246 = vmatpush2.xpose.msra.mxu0 0.0
    %247 = vmatprep.subr.mxu0 0.0
    %248 = vmatpush2.xpose.msra.mxu0 0.0
    %249 = vmatprep.subr.mxu0 0.0
    %250 = vmatpush2.xpose.msra.mxu0 0.0
    %251 = vmatprep.subr.mxu0 0.0
    %252 = vmatpush2.xpose.msra.mxu0 0.0
    %253 = vmatprep.subr.mxu0 0.0
    %254 = vmatpush2.xpose.msra.mxu0 0.0
    %255 = vmatprep.subr.mxu0 0.0
    %256 = vmatpush2.xpose.msra.mxu0 0.0
    %257 = vmatprep.subr.mxu0 0.0
    %258 = vmatpush2.xpose.msra.mxu0 0.0
    %259 = vmatprep.subr.mxu0 0.0
    %260 = vmatpush2.xpose.msra.mxu0 0.0
    %261 = vmatprep.subr.mxu0 0.0
    %262 = vmatpush2.xpose.msra.mxu0 0.0
    %263 = vmatprep.subr.mxu0 0.0
    %264 = vmatpush2.xpose.msra.mxu0 0.0
    %265 = vmatprep.subr.mxu0 0.0
    %266 = vmatpush2.xpose.msra.mxu0 0.0
    %267 = vmatprep.subr.mxu0 0.0
    %268 = vmatpush2.xpose.msra.mxu0 0.0
    %269 = vmatprep.subr.mxu0 0.0
    %270 = vmatpush2.xpose.msra.mxu0 0.0
    %271 = vmatprep.subr.mxu0 0.0
    %272 = vmatpush2.xpose.msra.mxu0 0.0
    %273 = vmatprep.subr.mxu0 0.0
    %274 = vmatpush2.xpose.msra.mxu0 0.0
    %275 = vmatprep.mubr.f32.mxu0 0.0
    %276 = vmatmul.mubr.f32.gmra.mxu0 %v207
    %v277 = vpop.f32.mrf.mxu0
    %v278 = vadd.f32 0.0, %v277
    %v279 = vpop.f32.mrf.mxu0
    %280 = vdwg.mxu0
    %v281 = vmul.f32 %v278, 0.25
    %v282 = vlaneseq
    %v283 = vshrl.u32 %v282, 7
    %v284 = vsub.s32 0, %v283
    %v285 = vrot.slane %v113, %v284
    %v286 = vadd.f32 %v281, %v285
    %vm287 = vcmask 64512
    %v288 = vsel %vm287, %v286, -inf
    %289 = vmax.xlane.f32.xlu0 %v288
    %v290 = vpop.xlane.xlu0 %289
    %v291 = vsub.f32 %v286, %v290
    %v292 = vmul.f32 %v291, 1.442695
    %v293 = vpow.pop %v292
    %v294 = vsel %vm287, %v293, 0.0
    %295 = vadd.xlane.f32.xlu0 %v294
    %v296 = vpop.xlane.xlu0 %295
    %v297 = vrcp.pop %v296
    %v298 = vmul.f32 %v293, %v297
    %299 = vrot.lane.b32.xlu0 %v195, 64
    %v300 = vpop.permute.xlu0 %299
    %v303 = vsel %vm287, %v298, 0
    %305 = vmatprep.subr.mxu0 0.0
    %306 = vmatpush1.msra.mxu0 0.0
    %307 = vmatprep.subr.mxu0 0.0
    %308 = vmatpush1.msra.mxu0 0.0
    %309 = vmatprep.subr.mxu0 0.0
    %310 = vmatpush1.msra.mxu0 0.0
    %311 = vmatprep.subr.mxu0 0.0
    %312 = vmatpush1.msra.mxu0 0.0
    %313 = vmatprep.subr.mxu0 0.0
    %314 = vmatpush1.msra.mxu0 0.0
    %315 = vmatprep.subr.mxu0 0.0
    %316 = vmatpush1.msra.mxu0 0.0
    %317 = vmatprep.subr.mxu0 0.0
    %318 = vmatpush1.msra.mxu0 0.0
    %319 = vmatprep.subr.mxu0 0.0
    %320 = vmatpush1.msra.mxu0 0.0
    %321 = vmatprep.subr.mxu0 0.0
    %322 = vmatpush1.msra.mxu0 0.0
    %323 = vmatprep.subr.mxu0 0.0
    %324 = vmatpush1.msra.mxu0 0.0
    %325 = vmatprep.subr.mxu0 0.0
    %326 = vmatpush1.msra.mxu0 0.0
    %327 = vmatprep.subr.mxu0 0.0
    %328 = vmatpush1.msra.mxu0 0.0
    %329 = vmatprep.subr.mxu0 0.0
    %330 = vmatpush1.msra.mxu0 0.0
    %331 = vmatprep.subr.mxu0 0.0
    %332 = vmatpush1.msra.mxu0 0.0
    %333 = vmatprep.subr.mxu0 0.0
    %334 = vmatpush1.msra.mxu0 0.0
    %335 = vmatprep.subr.mxu0 0.0
    %336 = vmatpush1.msra.mxu0 %v300
    %337 = vmatprep.subr.mxu0 0.0
    %338 = vmatpush2.msra.mxu0 0.0
    %339 = vmatprep.subr.mxu0 0.0
    %340 = vmatpush2.msra.mxu0 0.0
    %341 = vmatprep.subr.mxu0 0.0
    %342 = vmatpush2.msra.mxu0 0.0
    %343 = vmatprep.subr.mxu0 0.0
    %344 = vmatpush2.msra.mxu0 0.0
    %345 = vmatprep.subr.mxu0 0.0
    %346 = vmatpush2.msra.mxu0 0.0
    %347 = vmatprep.subr.mxu0 0.0
    %348 = vmatpush2.msra.mxu0 0.0
    %349 = vmatprep.subr.mxu0 0.0
    %350 = vmatpush2.msra.mxu0 0.0
    %351 = vmatprep.subr.mxu0 0.0
    %352 = vmatpush2.msra.mxu0 0.0
    %353 = vmatprep.subr.mxu0 0.0
    %354 = vmatpush2.msra.mxu0 0.0
    %355 = vmatprep.subr.mxu0 0.0
    %356 = vmatpush2.msra.mxu0 0.0
    %357 = vmatprep.subr.mxu0 0.0
    %358 = vmatpush2.msra.mxu0 0.0
    %359 = vmatprep.subr.mxu0 0.0
    %360 = vmatpush2.msra.mxu0 0.0
    %361 = vmatprep.subr.mxu0 0.0
    %362 = vmatpush2.msra.mxu0 0.0
    %363 = vmatprep.subr.mxu0 0.0
    %364 = vmatpush2.msra.mxu0 0.0
    %365 = vmatprep.subr.mxu0 0.0
    %366 = vmatpush2.msra.mxu0 0.0
    %367 = vmatprep.subr.mxu0 0.0
    %368 = vmatpush2.msra.mxu0 0.0
    %369 = vmatprep.mubr.f32.mxu0 0.0
    %370 = vmatmul.mubr.f32.gmra.mxu0 %v303
    %v371 = vpop.f32.mrf.mxu0
    %v372 = vadd.f32 0.0, %v371
    %v373 = vpop.f32.mrf.mxu0
    %374 = vdwg.mxu0
    %375 = vst.msk [vmem:[#allocation2] sm:$0xff] %vm206, %v372
    %376 = vrot.lane.b32.xlu0 %v195, 112
    %v377 = vpop.permute.xlu0 %376
    %378 = vrot.lane.b32.xlu0 %v195, 80
    %v379 = vpop.permute.xlu0 %378
    %v380 = vsel %vm206, %v377, 0
    %v382 = vsel %vm206, %v379, 0
    %384 = vmatprep.subr.mxu0 0.0
    %385 = vmatpush1.xpose.msra.mxu0 0.0
    %386 = vmatprep.subr.mxu0 0.0
    %387 = vmatpush1.xpose.msra.mxu0 0.0
    %388 = vmatprep.subr.mxu0 0.0
    %389 = vmatpush1.xpose.msra.mxu0 0.0
    %390 = vmatprep.subr.mxu0 0.0
    %391 = vmatpush1.xpose.msra.mxu0 0.0
    %392 = vmatprep.subr.mxu0 0.0
    %393 = vmatpush1.xpose.msra.mxu0 0.0
    %394 = vmatprep.subr.mxu0 0.0
    %395 = vmatpush1.xpose.msra.mxu0 0.0
    %396 = vmatprep.subr.mxu0 0.0
    %397 = vmatpush1.xpose.msra.mxu0 0.0
    %398 = vmatprep.subr.mxu0 0.0
    %399 = vmatpush1.xpose.msra.mxu0 0.0
    %400 = vmatprep.subr.mxu0 0.0
    %401 = vmatpush1.xpose.msra.mxu0 0.0
    %402 = vmatprep.subr.mxu0 0.0
    %403 = vmatpush1.xpose.msra.mxu0 0.0
    %404 = vmatprep.subr.mxu0 0.0
    %405 = vmatpush1.xpose.msra.mxu0 0.0
    %406 = vmatprep.subr.mxu0 0.0
    %407 = vmatpush1.xpose.msra.mxu0 0.0
    %408 = vmatprep.subr.mxu0 0.0
    %409 = vmatpush1.xpose.msra.mxu0 0.0
    %410 = vmatprep.subr.mxu0 0.0
    %411 = vmatpush1.xpose.msra.mxu0 0.0
    %412 = vmatprep.subr.mxu0 0.0
    %413 = vmatpush1.xpose.msra.mxu0 0.0
    %414 = vmatprep.subr.mxu0 0.0
    %415 = vmatpush1.xpose.msra.mxu0 %v382
    %416 = vmatprep.subr.mxu0 0.0
    %417 = vmatpush2.xpose.msra.mxu0 0.0
    %418 = vmatprep.subr.mxu0 0.0
    %419 = vmatpush2.xpose.msra.mxu0 0.0
    %420 = vmatprep.subr.mxu0 0.0
    %421 = vmatpush2.xpose.msra.mxu0 0.0
    %422 = vmatprep.subr.mxu0 0.0
    %423 = vmatpush2.xpose.msra.mxu0 0.0
    %424 = vmatprep.subr.mxu0 0.0
    %425 = vmatpush2.xpose.msra.mxu0 0.0
    %426 = vmatprep.subr.mxu0 0.0
    %427 = vmatpush2.xpose.msra.mxu0 0.0
    %428 = vmatprep.subr.mxu0 0.0
    %429 = vmatpush2.xpose.msra.mxu0 0.0
    %430 = vmatprep.subr.mxu0 0.0
    %431 = vmatpush2.xpose.msra.mxu0 0.0
    %432 = vmatprep.subr.mxu0 0.0
    %433 = vmatpush2.xpose.msra.mxu0 0.0
    %434 = vmatprep.subr.mxu0 0.0
    %435 = vmatpush2.xpose.msra.mxu0 0.0
    %436 = vmatprep.subr.mxu0 0.0
    %437 = vmatpush2.xpose.msra.mxu0 0.0
    %438 = vmatprep.subr.mxu0 0.0
    %439 = vmatpush2.xpose.msra.mxu0 0.0
    %440 = vmatprep.subr.mxu0 0.0
    %441 = vmatpush2.xpose.msra.mxu0 0.0
    %442 = vmatprep.subr.mxu0 0.0
    %443 = vmatpush2.xpose.msra.mxu0 0.0
    %444 = vmatprep.subr.mxu0 0.0
    %445 = vmatpush2.xpose.msra.mxu0 0.0
    %446 = vmatprep.subr.mxu0 0.0
    %447 = vmatpush2.xpose.msra.mxu0 0.0
    %448 = vmatprep.mubr.f32.mxu0 0.0
    %449 = vmatmul.mubr.f32.gmra.mxu0 %v380
    %v450 = vpop.f32.mrf.mxu0
    %v451 = vadd.f32 0.0, %v450
    %v452 = vpop.f32.mrf.mxu0
    %453 = vdwg.mxu0
    %v454 = vmul.f32 %v451, 0.25
    %v455 = vadd.f32 %v454, %v285
    %v456 = vsel %vm287, %v455, -inf
    %457 = vmax.xlane.f32.xlu0 %v456
    %v458 = vpop.xlane.xlu0 %457
    %v459 = vsub.f32 %v455, %v458
    %v460 = vmul.f32 %v459, 1.442695
    %v461 = vpow.pop %v460
    %v462 = vsel %vm287, %v461, 0.0
    %463 = vadd.xlane.f32.xlu0 %v462
    %v464 = vpop.xlane.xlu0 %463
    %v465 = vrcp.pop %v464
    %v466 = vmul.f32 %v461, %v465
    %467 = vrot.lane.b32.xlu0 %v195, 48
    %v468 = vpop.permute.xlu0 %467
    %v471 = vsel %vm287, %v466, 0
    %473 = vmatprep.subr.mxu0 0.0
    %474 = vmatpush1.msra.mxu0 0.0
    %475 = vmatprep.subr.mxu0 0.0
    %476 = vmatpush1.msra.mxu0 0.0
    %477 = vmatprep.subr.mxu0 0.0
    %478 = vmatpush1.msra.mxu0 0.0
    %479 = vmatprep.subr.mxu0 0.0
    %480 = vmatpush1.msra.mxu0 0.0
    %481 = vmatprep.subr.mxu0 0.0
    %482 = vmatpush1.msra.mxu0 0.0
    %483 = vmatprep.subr.mxu0 0.0
    %484 = vmatpush1.msra.mxu0 0.0
    %485 = vmatprep.subr.mxu0 0.0
    %486 = vmatpush1.msra.mxu0 0.0
    %487 = vmatprep.subr.mxu0 0.0
    %488 = vmatpush1.msra.mxu0 0.0
    %489 = vmatprep.subr.mxu0 0.0
    %490 = vmatpush1.msra.mxu0 0.0
    %491 = vmatprep.subr.mxu0 0.0
    %492 = vmatpush1.msra.mxu0 0.0
    %493 = vmatprep.subr.mxu0 0.0
    %494 = vmatpush1.msra.mxu0 0.0
    %495 = vmatprep.subr.mxu0 0.0
    %496 = vmatpush1.msra.mxu0 0.0
    %497 = vmatprep.subr.mxu0 0.0
    %498 = vmatpush1.msra.mxu0 0.0
    %499 = vmatprep.subr.mxu0 0.0
    %500 = vmatpush1.msra.mxu0 0.0
    %501 = vmatprep.subr.mxu0 0.0
    %502 = vmatpush1.msra.mxu0 0.0
    %503 = vmatprep.subr.mxu0 0.0
    %504 = vmatpush1.msra.mxu0 %v468
    %505 = vmatprep.subr.mxu0 0.0
    %506 = vmatpush2.msra.mxu0 0.0
    %507 = vmatprep.subr.mxu0 0.0
    %508 = vmatpush2.msra.mxu0 0.0
    %509 = vmatprep.subr.mxu0 0.0
    %510 = vmatpush2.msra.mxu0 0.0
    %511 = vmatprep.subr.mxu0 0.0
    %512 = vmatpush2.msra.mxu0 0.0
    %513 = vmatprep.subr.mxu0 0.0
    %514 = vmatpush2.msra.mxu0 0.0
    %515 = vmatprep.subr.mxu0 0.0
    %516 = vmatpush2.msra.mxu0 0.0
    %517 = vmatprep.subr.mxu0 0.0
    %518 = vmatpush2.msra.mxu0 0.0
    %519 = vmatprep.subr.mxu0 0.0
    %520 = vmatpush2.msra.mxu0 0.0
    %521 = vmatprep.subr.mxu0 0.0
    %522 = vmatpush2.msra.mxu0 0.0
    %523 = vmatprep.subr.mxu0 0.0
    %524 = vmatpush2.msra.mxu0 0.0
    %525 = vmatprep.subr.mxu0 0.0
    %526 = vmatpush2.msra.mxu0 0.0
    %527 = vmatprep.subr.mxu0 0.0
    %528 = vmatpush2.msra.mxu0 0.0
    %529 = vmatprep.subr.mxu0 0.0
    %530 = vmatpush2.msra.mxu0 0.0
    %531 = vmatprep.subr.mxu0 0.0
    %532 = vmatpush2.msra.mxu0 0.0
    %533 = vmatprep.subr.mxu0 0.0
    %534 = vmatpush2.msra.mxu0 0.0
    %535 = vmatprep.subr.mxu0 0.0
    %536 = vmatpush2.msra.mxu0 0.0
    %537 = vmatprep.mubr.f32.mxu0 0.0
    %538 = vmatmul.mubr.f32.gmra.mxu0 %v471
    %v539 = vpop.f32.mrf.mxu0
    %v540 = vadd.f32 0.0, %v539
    %v541 = vpop.f32.mrf.mxu0
    %542 = vdwg.mxu0
    %544 = vrot.lane.b32.xlu0 %v540, 16
    %v545 = vpop.permute.xlu0 %544
    %vm547 = vcmask 261248
    %548 = vst.msk [vmem:[#allocation2] sm:$0xff] %vm547, %v545
    %550 = vrot.lane.b32.xlu0 %v200, 96
    %v551 = vpop.permute.xlu0 %550
    %v552 = vsel %vm206, %v200, 0
    %v554 = vsel %vm206, %v551, 0
    %556 = vmatprep.subr.mxu0 0.0
    %557 = vmatpush1.xpose.msra.mxu0 0.0
    %558 = vmatprep.subr.mxu0 0.0
    %559 = vmatpush1.xpose.msra.mxu0 0.0
    %560 = vmatprep.subr.mxu0 0.0
    %561 = vmatpush1.xpose.msra.mxu0 0.0
    %562 = vmatprep.subr.mxu0 0.0
    %563 = vmatpush1.xpose.msra.mxu0 0.0
    %564 = vmatprep.subr.mxu0 0.0
    %565 = vmatpush1.xpose.msra.mxu0 0.0
    %566 = vmatprep.subr.mxu0 0.0
    %567 = vmatpush1.xpose.msra.mxu0 0.0
    %568 = vmatprep.subr.mxu0 0.0
    %569 = vmatpush1.xpose.msra.mxu0 0.0
    %570 = vmatprep.subr.mxu0 0.0
    %571 = vmatpush1.xpose.msra.mxu0 0.0
    %572 = vmatprep.subr.mxu0 0.0
    %573 = vmatpush1.xpose.msra.mxu0 0.0
    %574 = vmatprep.subr.mxu0 0.0
    %575 = vmatpush1.xpose.msra.mxu0 0.0
    %576 = vmatprep.subr.mxu0 0.0
    %577 = vmatpush1.xpose.msra.mxu0 0.0
    %578 = vmatprep.subr.mxu0 0.0
    %579 = vmatpush1.xpose.msra.mxu0 0.0
    %580 = vmatprep.subr.mxu0 0.0
    %581 = vmatpush1.xpose.msra.mxu0 0.0
    %582 = vmatprep.subr.mxu0 0.0
    %583 = vmatpush1.xpose.msra.mxu0 0.0
    %584 = vmatprep.subr.mxu0 0.0
    %585 = vmatpush1.xpose.msra.mxu0 0.0
    %586 = vmatprep.subr.mxu0 0.0
    %587 = vmatpush1.xpose.msra.mxu0 %v554
    %588 = vmatprep.subr.mxu0 0.0
    %589 = vmatpush2.xpose.msra.mxu0 0.0
    %590 = vmatprep.subr.mxu0 0.0
    %591 = vmatpush2.xpose.msra.mxu0 0.0
    %592 = vmatprep.subr.mxu0 0.0
    %593 = vmatpush2.xpose.msra.mxu0 0.0
    %594 = vmatprep.subr.mxu0 0.0
    %595 = vmatpush2.xpose.msra.mxu0 0.0
    %596 = vmatprep.subr.mxu0 0.0
    %597 = vmatpush2.xpose.msra.mxu0 0.0
    %598 = vmatprep.subr.mxu0 0.0
    %599 = vmatpush2.xpose.msra.mxu0 0.0
    %600 = vmatprep.subr.mxu0 0.0
    %601 = vmatpush2.xpose.msra.mxu0 0.0
    %602 = vmatprep.subr.mxu0 0.0
    %603 = vmatpush2.xpose.msra.mxu0 0.0
    %604 = vmatprep.subr.mxu0 0.0
    %605 = vmatpush2.xpose.msra.mxu0 0.0
    %606 = vmatprep.subr.mxu0 0.0
    %607 = vmatpush2.xpose.msra.mxu0 0.0
    %608 = vmatprep.subr.mxu0 0.0
    %609 = vmatpush2.xpose.msra.mxu0 0.0
    %610 = vmatprep.subr.mxu0 0.0
    %611 = vmatpush2.xpose.msra.mxu0 0.0
    %612 = vmatprep.subr.mxu0 0.0
    %613 = vmatpush2.xpose.msra.mxu0 0.0
    %614 = vmatprep.subr.mxu0 0.0
    %615 = vmatpush2.xpose.msra.mxu0 0.0
    %616 = vmatprep.subr.mxu0 0.0
    %617 = vmatpush2.xpose.msra.mxu0 0.0
    %618 = vmatprep.subr.mxu0 0.0
    %619 = vmatpush2.xpose.msra.mxu0 0.0
    %620 = vmatprep.mubr.f32.mxu0 0.0
    %621 = vmatmul.mubr.f32.gmra.mxu0 %v552
    %v622 = vpop.f32.mrf.mxu0
    %v623 = vadd.f32 0.0, %v622
    %v624 = vpop.f32.mrf.mxu0
    %625 = vdwg.mxu0
    %v626 = vmul.f32 %v623, 0.25
    %v627 = vlaneseq
    %v628 = vshrl.u32 %v627, 7
    %v629 = vsub.s32 1, %v628
    %v630 = vrot.slane %v113, %v629
    %v631 = vadd.f32 %v626, %v630
    %v632 = vsel %vm287, %v631, -inf
    %633 = vmax.xlane.f32.xlu0 %v632
    %v634 = vpop.xlane.xlu0 %633
    %v635 = vsub.f32 %v631, %v634
    %v636 = vmul.f32 %v635, 1.442695
    %v637 = vpow.pop %v636
    %v638 = vsel %vm287, %v637, 0.0
    %639 = vadd.xlane.f32.xlu0 %v638
    %v640 = vpop.xlane.xlu0 %639
    %v641 = vrcp.pop %v640
    %v642 = vmul.f32 %v637, %v641
    %643 = vrot.lane.b32.xlu0 %v200, 64
    %v644 = vpop.permute.xlu0 %643
    %v647 = vsel %vm287, %v642, 0
    %649 = vmatprep.subr.mxu0 0.0
    %650 = vmatpush1.msra.mxu0 0.0
    %651 = vmatprep.subr.mxu0 0.0
    %652 = vmatpush1.msra.mxu0 0.0
    %653 = vmatprep.subr.mxu0 0.0
    %654 = vmatpush1.msra.mxu0 0.0
    %655 = vmatprep.subr.mxu0 0.0
    %656 = vmatpush1.msra.mxu0 0.0
    %657 = vmatprep.subr.mxu0 0.0
    %658 = vmatpush1.msra.mxu0 0.0
    %659 = vmatprep.subr.mxu0 0.0
    %660 = vmatpush1.msra.mxu0 0.0
    %661 = vmatprep.subr.mxu0 0.0
    %662 = vmatpush1.msra.mxu0 0.0
    %663 = vmatprep.subr.mxu0 0.0
    %664 = vmatpush1.msra.mxu0 0.0
    %665 = vmatprep.subr.mxu0 0.0
    %666 = vmatpush1.msra.mxu0 0.0
    %667 = vmatprep.subr.mxu0 0.0
    %668 = vmatpush1.msra.mxu0 0.0
    %669 = vmatprep.subr.mxu0 0.0
    %670 = vmatpush1.msra.mxu0 0.0
    %671 = vmatprep.subr.mxu0 0.0
    %672 = vmatpush1.msra.mxu0 0.0
    %673 = vmatprep.subr.mxu0 0.0
    %674 = vmatpush1.msra.mxu0 0.0
    %675 = vmatprep.subr.mxu0 0.0
    %676 = vmatpush1.msra.mxu0 0.0
    %677 = vmatprep.subr.mxu0 0.0
    %678 = vmatpush1.msra.mxu0 0.0
    %679 = vmatprep.subr.mxu0 0.0
    %680 = vmatpush1.msra.mxu0 %v644
    %681 = vmatprep.subr.mxu0 0.0
    %682 = vmatpush2.msra.mxu0 0.0
    %683 = vmatprep.subr.mxu0 0.0
    %684 = vmatpush2.msra.mxu0 0.0
    %685 = vmatprep.subr.mxu0 0.0
    %686 = vmatpush2.msra.mxu0 0.0
    %687 = vmatprep.subr.mxu0 0.0
    %688 = vmatpush2.msra.mxu0 0.0
    %689 = vmatprep.subr.mxu0 0.0
    %690 = vmatpush2.msra.mxu0 0.0
    %691 = vmatprep.subr.mxu0 0.0
    %692 = vmatpush2.msra.mxu0 0.0
    %693 = vmatprep.subr.mxu0 0.0
    %694 = vmatpush2.msra.mxu0 0.0
    %695 = vmatprep.subr.mxu0 0.0
    %696 = vmatpush2.msra.mxu0 0.0
    %697 = vmatprep.subr.mxu0 0.0
    %698 = vmatpush2.msra.mxu0 0.0
    %699 = vmatprep.subr.mxu0 0.0
    %700 = vmatpush2.msra.mxu0 0.0
    %701 = vmatprep.subr.mxu0 0.0
    %702 = vmatpush2.msra.mxu0 0.0
    %703 = vmatprep.subr.mxu0 0.0
    %704 = vmatpush2.msra.mxu0 0.0
    %705 = vmatprep.subr.mxu0 0.0
    %706 = vmatpush2.msra.mxu0 0.0
    %707 = vmatprep.subr.mxu0 0.0
    %708 = vmatpush2.msra.mxu0 0.0
    %709 = vmatprep.subr.mxu0 0.0
    %710 = vmatpush2.msra.mxu0 0.0
    %711 = vmatprep.subr.mxu0 0.0
    %712 = vmatpush2.msra.mxu0 0.0
    %713 = vmatprep.mubr.f32.mxu0 0.0
    %714 = vmatmul.mubr.f32.gmra.mxu0 %v647
    %v715 = vpop.f32.mrf.mxu0
    %v716 = vadd.f32 0.0, %v715
    %v717 = vpop.f32.mrf.mxu0
    %718 = vdwg.mxu0
    %719 = vst.msk [vmem:[#allocation2 + $0x8] sm:$0xff] %vm206, %v716
    %720 = vrot.lane.b32.xlu0 %v200, 112
    %v721 = vpop.permute.xlu0 %720
    %722 = vrot.lane.b32.xlu0 %v200, 80
    %v723 = vpop.permute.xlu0 %722
    %v724 = vsel %vm206, %v721, 0
    %v726 = vsel %vm206, %v723, 0
    %728 = vmatprep.subr.mxu0 0.0
    %729 = vmatpush1.xpose.msra.mxu0 0.0
    %730 = vmatprep.subr.mxu0 0.0
    %731 = vmatpush1.xpose.msra.mxu0 0.0
    %732 = vmatprep.subr.mxu0 0.0
    %733 = vmatpush1.xpose.msra.mxu0 0.0
    %734 = vmatprep.subr.mxu0 0.0
    %735 = vmatpush1.xpose.msra.mxu0 0.0
    %736 = vmatprep.subr.mxu0 0.0
    %737 = vmatpush1.xpose.msra.mxu0 0.0
    %738 = vmatprep.subr.mxu0 0.0
    %739 = vmatpush1.xpose.msra.mxu0 0.0
    %740 = vmatprep.subr.mxu0 0.0
    %741 = vmatpush1.xpose.msra.mxu0 0.0
    %742 = vmatprep.subr.mxu0 0.0
    %743 = vmatpush1.xpose.msra.mxu0 0.0
    %744 = vmatprep.subr.mxu0 0.0
    %745 = vmatpush1.xpose.msra.mxu0 0.0
    %746 = vmatprep.subr.mxu0 0.0
    %747 = vmatpush1.xpose.msra.mxu0 0.0
    %748 = vmatprep.subr.mxu0 0.0
    %749 = vmatpush1.xpose.msra.mxu0 0.0
    %750 = vmatprep.subr.mxu0 0.0
    %751 = vmatpush1.xpose.msra.mxu0 0.0
    %752 = vmatprep.subr.mxu0 0.0
    %753 = vmatpush1.xpose.msra.mxu0 0.0
    %754 = vmatprep.subr.mxu0 0.0
    %755 = vmatpush1.xpose.msra.mxu0 0.0
    %756 = vmatprep.subr.mxu0 0.0
    %757 = vmatpush1.xpose.msra.mxu0 0.0
    %758 = vmatprep.subr.mxu0 0.0
    %759 = vmatpush1.xpose.msra.mxu0 %v726
    %760 = vmatprep.subr.mxu0 0.0
    %761 = vmatpush2.xpose.msra.mxu0 0.0
    %762 = vmatprep.subr.mxu0 0.0
    %763 = vmatpush2.xpose.msra.mxu0 0.0
    %764 = vmatprep.subr.mxu0 0.0
    %765 = vmatpush2.xpose.msra.mxu0 0.0
    %766 = vmatprep.subr.mxu0 0.0
    %767 = vmatpush2.xpose.msra.mxu0 0.0
    %768 = vmatprep.subr.mxu0 0.0
    %769 = vmatpush2.xpose.msra.mxu0 0.0
    %770 = vmatprep.subr.mxu0 0.0
    %771 = vmatpush2.xpose.msra.mxu0 0.0
    %772 = vmatprep.subr.mxu0 0.0
    %773 = vmatpush2.xpose.msra.mxu0 0.0
    %774 = vmatprep.subr.mxu0 0.0
    %775 = vmatpush2.xpose.msra.mxu0 0.0
    %776 = vmatprep.subr.mxu0 0.0
    %777 = vmatpush2.xpose.msra.mxu0 0.0
    %778 = vmatprep.subr.mxu0 0.0
    %779 = vmatpush2.xpose.msra.mxu0 0.0
    %780 = vmatprep.subr.mxu0 0.0
    %781 = vmatpush2.xpose.msra.mxu0 0.0
    %782 = vmatprep.subr.mxu0 0.0
    %783 = vmatpush2.xpose.msra.mxu0 0.0
    %784 = vmatprep.subr.mxu0 0.0
    %785 = vmatpush2.xpose.msra.mxu0 0.0
    %786 = vmatprep.subr.mxu0 0.0
    %787 = vmatpush2.xpose.msra.mxu0 0.0
    %788 = vmatprep.subr.mxu0 0.0
    %789 = vmatpush2.xpose.msra.mxu0 0.0
    %790 = vmatprep.subr.mxu0 0.0
    %791 = vmatpush2.xpose.msra.mxu0 0.0
    %792 = vmatprep.mubr.f32.mxu0 0.0
    %793 = vmatmul.mubr.f32.gmra.mxu0 %v724
    %v794 = vpop.f32.mrf.mxu0
    %v795 = vadd.f32 0.0, %v794
    %v796 = vpop.f32.mrf.mxu0
    %797 = vdwg.mxu0
    %v798 = vmul.f32 %v795, 0.25
    %v799 = vadd.f32 %v798, %v630
    %v800 = vsel %vm287, %v799, -inf
    %801 = vmax.xlane.f32.xlu0 %v800
    %v802 = vpop.xlane.xlu0 %801
    %v803 = vsub.f32 %v799, %v802
    %v804 = vmul.f32 %v803, 1.442695
    %v805 = vpow.pop %v804
    %v806 = vsel %vm287, %v805, 0.0
    %807 = vadd.xlane.f32.xlu0 %v806
    %v808 = vpop.xlane.xlu0 %807
    %v809 = vrcp.pop %v808
    %v810 = vmul.f32 %v805, %v809
    %811 = vrot.lane.b32.xlu0 %v200, 48
    %v812 = vpop.permute.xlu0 %811
    %v815 = vsel %vm287, %v810, 0
    %817 = vmatprep.subr.mxu0 0.0
    %818 = vmatpush1.msra.mxu0 0.0
    %819 = vmatprep.subr.mxu0 0.0
    %820 = vmatpush1.msra.mxu0 0.0
    %821 = vmatprep.subr.mxu0 0.0
    %822 = vmatpush1.msra.mxu0 0.0
    %823 = vmatprep.subr.mxu0 0.0
    %824 = vmatpush1.msra.mxu0 0.0
    %825 = vmatprep.subr.mxu0 0.0
    %826 = vmatpush1.msra.mxu0 0.0
    %827 = vmatprep.subr.mxu0 0.0
    %828 = vmatpush1.msra.mxu0 0.0
    %829 = vmatprep.subr.mxu0 0.0
    %830 = vmatpush1.msra.mxu0 0.0
    %831 = vmatprep.subr.mxu0 0.0
    %832 = vmatpush1.msra.mxu0 0.0
    %833 = vmatprep.subr.mxu0 0.0
    %834 = vmatpush1.msra.mxu0 0.0
    %835 = vmatprep.subr.mxu0 0.0
    %836 = vmatpush1.msra.mxu0 0.0
    %837 = vmatprep.subr.mxu0 0.0
    %838 = vmatpush1.msra.mxu0 0.0
    %839 = vmatprep.subr.mxu0 0.0
    %840 = vmatpush1.msra.mxu0 0.0
    %841 = vmatprep.subr.mxu0 0.0
    %842 = vmatpush1.msra.mxu0 0.0
    %843 = vmatprep.subr.mxu0 0.0
    %844 = vmatpush1.msra.mxu0 0.0
    %845 = vmatprep.subr.mxu0 0.0
    %846 = vmatpush1.msra.mxu0 0.0
    %847 = vmatprep.subr.mxu0 0.0
    %848 = vmatpush1.msra.mxu0 %v812
    %849 = vmatprep.subr.mxu0 0.0
    %850 = vmatpush2.msra.mxu0 0.0
    %851 = vmatprep.subr.mxu0 0.0
    %852 = vmatpush2.msra.mxu0 0.0
    %853 = vmatprep.subr.mxu0 0.0
    %854 = vmatpush2.msra.mxu0 0.0
    %855 = vmatprep.subr.mxu0 0.0
    %856 = vmatpush2.msra.mxu0 0.0
    %857 = vmatprep.subr.mxu0 0.0
    %858 = vmatpush2.msra.mxu0 0.0
    %859 = vmatprep.subr.mxu0 0.0
    %860 = vmatpush2.msra.mxu0 0.0
    %861 = vmatprep.subr.mxu0 0.0
    %862 = vmatpush2.msra.mxu0 0.0
    %863 = vmatprep.subr.mxu0 0.0
    %864 = vmatpush2.msra.mxu0 0.0
    %865 = vmatprep.subr.mxu0 0.0
    %866 = vmatpush2.msra.mxu0 0.0
    %867 = vmatprep.subr.mxu0 0.0
    %868 = vmatpush2.msra.mxu0 0.0
    %869 = vmatprep.subr.mxu0 0.0
    %870 = vmatpush2.msra.mxu0 0.0
    %871 = vmatprep.subr.mxu0 0.0
    %872 = vmatpush2.msra.mxu0 0.0
    %873 = vmatprep.subr.mxu0 0.0
    %874 = vmatpush2.msra.mxu0 0.0
    %875 = vmatprep.subr.mxu0 0.0
    %876 = vmatpush2.msra.mxu0 0.0
    %877 = vmatprep.subr.mxu0 0.0
    %878 = vmatpush2.msra.mxu0 0.0
    %879 = vmatprep.subr.mxu0 0.0
    %880 = vmatpush2.msra.mxu0 0.0
    %881 = vmatprep.mubr.f32.mxu0 0.0
    %882 = vmatmul.mubr.f32.gmra.mxu0 %v815
    %v883 = vpop.f32.mrf.mxu0
    %v884 = vadd.f32 0.0, %v883
    %v885 = vpop.f32.mrf.mxu0
    %886 = vdwg.mxu0
    %888 = vrot.lane.b32.xlu0 %v884, 16
    %v889 = vpop.permute.xlu0 %888
    %891 = vst.msk [vmem:[#allocation2 + $0x8] sm:$0xff] %vm547, %v889
    %v892 = vld [vmem:[#allocation2] sm:$0xff]
    %v893 = vld [vmem:[#allocation2 + $0x8] sm:$0xff]
    %v894 = vld [vmem:[%s4] sm:$0xff]
    %v895 = vld [vmem:[%s4 + $0x8] sm:$0xff]
    %v896 = vld [vmem:[%s4 + $0x10] sm:$0xff]
    %v897 = vld [vmem:[%s4 + $0x18] sm:$0xff]
    %v898 = vlaneseq
    %v899 = vshrl.u32 %v898, 7
    %v900 = vsub.s32 3, %v899
    %v901 = vrot.slane %v66, %v900
    %v903 = vsel %vm71, %v892, 0
    %v906 = vsel %vm71, %v893, 0
    %908 = vmatprep.subr.mxu0 0.0
    %909 = vmatpush1.msra.mxu0 0.0
    %910 = vmatprep.subr.mxu0 0.0
    %911 = vmatpush1.msra.mxu0 0.0
    %912 = vmatprep.subr.mxu0 0.0
    %913 = vmatpush1.msra.mxu0 0.0
    %914 = vmatprep.subr.mxu0 0.0
    %915 = vmatpush1.msra.mxu0 0.0
    %916 = vmatprep.subr.mxu0 0.0
    %917 = vmatpush1.msra.mxu0 0.0
    %918 = vmatprep.subr.mxu0 0.0
    %919 = vmatpush1.msra.mxu0 0.0
    %920 = vmatprep.subr.mxu0 0.0
    %921 = vmatpush1.msra.mxu0 0.0
    %922 = vmatprep.subr.mxu0 0.0
    %923 = vmatpush1.msra.mxu0 0.0
    %924 = vmatprep.subr.mxu0 0.0
    %925 = vmatpush1.msra.mxu0 0.0
    %926 = vmatprep.subr.mxu0 0.0
    %927 = vmatpush1.msra.mxu0 0.0
    %928 = vmatprep.subr.mxu0 0.0
    %929 = vmatpush1.msra.mxu0 0.0
    %930 = vmatprep.subr.mxu0 0.0
    %931 = vmatpush1.msra.mxu0 0.0
    %932 = vmatprep.subr.mxu0 0.0
    %933 = vmatpush1.msra.mxu0 %v897
    %934 = vmatprep.subr.mxu0 0.0
    %935 = vmatpush1.msra.mxu0 %v896
    %936 = vmatprep.subr.mxu0 0.0
    %937 = vmatpush1.msra.mxu0 %v895
    %938 = vmatprep.subr.mxu0 0.0
    %939 = vmatpush1.msra.mxu0 %v894
    %940 = vmatprep.subr.mxu0 0.0
    %941 = vmatpush2.msra.mxu0 0.0
    %942 = vmatprep.subr.mxu0 0.0
    %943 = vmatpush2.msra.mxu0 0.0
    %944 = vmatprep.subr.mxu0 0.0
    %945 = vmatpush2.msra.mxu0 0.0
    %946 = vmatprep.subr.mxu0 0.0
    %947 = vmatpush2.msra.mxu0 0.0
    %948 = vmatprep.subr.mxu0 0.0
    %949 = vmatpush2.msra.mxu0 0.0
    %950 = vmatprep.subr.mxu0 0.0
    %951 = vmatpush2.msra.mxu0 0.0
    %952 = vmatprep.subr.mxu0 0.0
    %953 = vmatpush2.msra.mxu0 0.0
    %954 = vmatprep.subr.mxu0 0.0
    %955 = vmatpush2.msra.mxu0 0.0
    %956 = vmatprep.subr.mxu0 0.0
    %957 = vmatpush2.msra.mxu0 0.0
    %958 = vmatprep.subr.mxu0 0.0
    %959 = vmatpush2.msra.mxu0 0.0
    %960 = vmatprep.subr.mxu0 0.0
    %961 = vmatpush2.msra.mxu0 0.0
    %962 = vmatprep.subr.mxu0 0.0
    %963 = vmatpush2.msra.mxu0 0.0
    %964 = vmatprep.subr.mxu0 0.0
    %965 = vmatpush2.msra.mxu0 0.0
    %966 = vmatprep.subr.mxu0 0.0
    %967 = vmatpush2.msra.mxu0 0.0
    %968 = vmatprep.subr.mxu0 0.0
    %969 = vmatpush2.msra.mxu0 0.0
    %970 = vmatprep.subr.mxu0 0.0
    %971 = vmatpush2.msra.mxu0 0.0
    %972 = vmatprep.mubr.f32.mxu0 0.0
    %973 = vmatmul.mubr.f32.gmra.mxu0 %v903
    %v974 = vpop.f32.mrf.mxu0
    %v975 = vadd.f32 %v901, %v974
    %v976 = vpop.f32.mrf.mxu0
    %977 = vmatprep.mubr.f32.mxu0 0.0
    %978 = vmatmul.mubr.f32.gmra.mxu0 %v906
    %v979 = vpop.f32.mrf.mxu0
    %v980 = vadd.f32 %v901, %v979
    %v981 = vpop.f32.mrf.mxu0
    %982 = vdwg.mxu0
    %v983 = vadd.f32 %v109, %v975
    %v984 = vadd.f32 %v110, %v980
    %v985 = vsel %vm71, %v983, 0.0
    %986 = vadd.xlane.f32.xlu0 %v985
    %v987 = vpop.xlane.xlu0 %986
    %v988 = vsel %vm71, %v984, 0.0
    %989 = vadd.xlane.f32.xlu0 %v988
    %v990 = vpop.xlane.xlu0 %989
    %v991 = vmul.f32 %v987, %v78
    %v992 = vmul.f32 %v990, %v78
    %v993 = vsub.f32 %v983, %v991
    %v994 = vsub.f32 %v984, %v992
    %v995 = vmul.f32 %v993, %v993
    %v996 = vmul.f32 %v994, %v994
    %v997 = vsel %vm71, %v995, 0.0
    %998 = vadd.xlane.f32.xlu0 %v997
    %v999 = vpop.xlane.xlu0 %998
    %v1000 = vsel %vm71, %v996, 0.0
    %1001 = vadd.xlane.f32.xlu0 %v1000
    %v1002 = vpop.xlane.xlu0 %1001
    %v1003 = vmul.f32 %v999, %v78
    %v1004 = vmul.f32 %v1002, %v78
    %v1005 = vadd.f32 %v1003, 1e-12
    %v1006 = vadd.f32 %v1004, 1e-12
    %v1007 = vrsqrt.pop %v1005
    %v1008 = vrsqrt.pop %v1006
    %v1009 = vmul.f32 %v993, %v1007
    %v1010 = vmul.f32 %v994, %v1008
    %v1011 = vlaneseq
    %v1012 = vshrl.u32 %v1011, 7
    %v1013 = vsub.s32 6, %v1012
    %v1014 = vrot.slane %v66, %v1013
    %v1015 = vmul.f32 %v1009, %v1014
    %v1016 = vmul.f32 %v1010, %v1014
    %v1017 = vlaneseq
    %v1018 = vshrl.u32 %v1017, 7
    %v1019 = vsub.s32 7, %v1018
    %v1020 = vrot.slane %v66, %v1019
    %v1021 = vadd.f32 %v1015, %v1020
    %v1022 = vadd.f32 %v1016, %v1020
    %v1023 = vld [vmem:[%s5] sm:$0xff]
    %v1024 = vld [vmem:[%s5 + $0x8] sm:$0xff]
    %v1025 = vld [vmem:[%s5 + $0x10] sm:$0xff]
    %v1026 = vld [vmem:[%s5 + $0x18] sm:$0xff]
    %v1027 = vlaneseq
    %v1028 = vshrl.u32 %v1027, 7
    %v1029 = vsub.s32 4, %v1028
    %v1030 = vrot.slane %v66, %v1029
    %v1032 = vsel %vm71, %v1021, 0
    %v1035 = vsel %vm71, %v1022, 0
    %1037 = vmatprep.subr.mxu0 0.0
    %1038 = vmatpush1.msra.mxu0 0.0
    %1039 = vmatprep.subr.mxu0 0.0
    %1040 = vmatpush1.msra.mxu0 0.0
    %1041 = vmatprep.subr.mxu0 0.0
    %1042 = vmatpush1.msra.mxu0 0.0
    %1043 = vmatprep.subr.mxu0 0.0
    %1044 = vmatpush1.msra.mxu0 0.0
    %1045 = vmatprep.subr.mxu0 0.0
    %1046 = vmatpush1.msra.mxu0 0.0
    %1047 = vmatprep.subr.mxu0 0.0
    %1048 = vmatpush1.msra.mxu0 0.0
    %1049 = vmatprep.subr.mxu0 0.0
    %1050 = vmatpush1.msra.mxu0 0.0
    %1051 = vmatprep.subr.mxu0 0.0
    %1052 = vmatpush1.msra.mxu0 0.0
    %1053 = vmatprep.subr.mxu0 0.0
    %1054 = vmatpush1.msra.mxu0 0.0
    %1055 = vmatprep.subr.mxu0 0.0
    %1056 = vmatpush1.msra.mxu0 0.0
    %1057 = vmatprep.subr.mxu0 0.0
    %1058 = vmatpush1.msra.mxu0 0.0
    %1059 = vmatprep.subr.mxu0 0.0
    %1060 = vmatpush1.msra.mxu0 0.0
    %1061 = vmatprep.subr.mxu0 0.0
    %1062 = vmatpush1.msra.mxu0 %v1026
    %1063 = vmatprep.subr.mxu0 0.0
    %1064 = vmatpush1.msra.mxu0 %v1025
    %1065 = vmatprep.subr.mxu0 0.0
    %1066 = vmatpush1.msra.mxu0 %v1024
    %1067 = vmatprep.subr.mxu0 0.0
    %1068 = vmatpush1.msra.mxu0 %v1023
    %1069 = vmatprep.subr.mxu0 0.0
    %1070 = vmatpush2.msra.mxu0 0.0
    %1071 = vmatprep.subr.mxu0 0.0
    %1072 = vmatpush2.msra.mxu0 0.0
    %1073 = vmatprep.subr.mxu0 0.0
    %1074 = vmatpush2.msra.mxu0 0.0
    %1075 = vmatprep.subr.mxu0 0.0
    %1076 = vmatpush2.msra.mxu0 0.0
    %1077 = vmatprep.subr.mxu0 0.0
    %1078 = vmatpush2.msra.mxu0 0.0
    %1079 = vmatprep.subr.mxu0 0.0
    %1080 = vmatpush2.msra.mxu0 0.0
    %1081 = vmatprep.subr.mxu0 0.0
    %1082 = vmatpush2.msra.mxu0 0.0
    %1083 = vmatprep.subr.mxu0 0.0
    %1084 = vmatpush2.msra.mxu0 0.0
    %1085 = vmatprep.subr.mxu0 0.0
    %1086 = vmatpush2.msra.mxu0 0.0
    %1087 = vmatprep.subr.mxu0 0.0
    %1088 = vmatpush2.msra.mxu0 0.0
    %1089 = vmatprep.subr.mxu0 0.0
    %1090 = vmatpush2.msra.mxu0 0.0
    %1091 = vmatprep.subr.mxu0 0.0
    %1092 = vmatpush2.msra.mxu0 0.0
    %1093 = vmatprep.subr.mxu0 0.0
    %1094 = vmatpush2.msra.mxu0 0.0
    %1095 = vmatprep.subr.mxu0 0.0
    %1096 = vmatpush2.msra.mxu0 0.0
    %1097 = vmatprep.subr.mxu0 0.0
    %1098 = vmatpush2.msra.mxu0 0.0
    %1099 = vmatprep.subr.mxu0 0.0
    %1100 = vmatpush2.msra.mxu0 0.0
    %1101 = vmatprep.mubr.f32.mxu0 0.0
    %1102 = vmatmul.mubr.f32.gmra.mxu0 %v1032
    %v1103 = vpop.f32.mrf.mxu0
    %v1104 = vadd.f32 %v1030, %v1103
    %v1105 = vpop.f32.mrf.mxu0
    %1106 = vmatprep.mubr.f32.mxu0 0.0
    %1107 = vmatmul.mubr.f32.gmra.mxu0 %v1035
    %v1108 = vpop.f32.mrf.mxu0
    %v1109 = vadd.f32 %v1030, %v1108
    %v1110 = vpop.f32.mrf.mxu0
    %1111 = vdwg.mxu0
    %v1112 = vmul.f32 %v1104, %v1104
    %v1113 = vmul.f32 %v1109, %v1109
    %v1114 = vmul.f32 %v1104, %v1112
    %v1115 = vmul.f32 %v1109, %v1113
    %v1116 = vmul.f32 %v1114, 0.044715
    %v1117 = vmul.f32 %v1115, 0.044715
    %v1118 = vadd.f32 %v1104, %v1116
    %v1119 = vadd.f32 %v1109, %v1117
    %v1120 = vmul.f32 %v1118, 0.7978846
    %v1121 = vmul.f32 %v1119, 0.7978846
    %v1122 = vtanh.pop %v1120
    %v1123 = vtanh.pop %v1121
    %v1124 = vadd.f32 %v1122, 1.0
    %v1125 = vadd.f32 %v1123, 1.0
    %v1126 = vmul.f32 %v1124, 0.5
    %v1127 = vmul.f32 %v1125, 0.5
    %v1128 = vmul.f32 %v1104, %v1126
    %v1129 = vmul.f32 %v1109, %v1127
    %v1130 = vld [vmem:[%s6] sm:$0xff]
    %v1131 = vld [vmem:[%s6 + $0x8] sm:$0xff]
    %v1132 = vld [vmem:[%s6 + $0x10] sm:$0xff]
    %v1133 = vld [vmem:[%s6 + $0x18] sm:$0xff]
    %v1134 = vld [vmem:[%s6 + $0x20] sm:$0xff]
    %v1135 = vld [vmem:[%s6 + $0x28] sm:$0xff]
    %v1136 = vld [vmem:[%s6 + $0x30] sm:$0xff]
    %v1137 = vld [vmem:[%s6 + $0x38] sm:$0xff]
    %v1138 = vlaneseq
    %v1139 = vshrl.u32 %v1138, 7
    %v1140 = vsub.s32 5, %v1139
    %v1141 = vrot.slane %v66, %v1140
    %vm1142 = vcmask 523264
    %v1144 = vsel %vm1142, %v1128, 0
    %v1147 = vsel %vm1142, %v1129, 0
    %1149 = vmatprep.subr.mxu0 0.0
    %1150 = vmatpush1.msra.mxu0 0.0
    %1151 = vmatprep.subr.mxu0 0.0
    %1152 = vmatpush1.msra.mxu0 0.0
    %1153 = vmatprep.subr.mxu0 0.0
    %1154 = vmatpush1.msra.mxu0 0.0
    %1155 = vmatprep.subr.mxu0 0.0
    %1156 = vmatpush1.msra.mxu0 0.0
    %1157 = vmatprep.subr.mxu0 0.0
    %1158 = vmatpush1.msra.mxu0 0.0
    %1159 = vmatprep.subr.mxu0 0.0
    %1160 = vmatpush1.msra.mxu0 0.0
    %1161 = vmatprep.subr.mxu0 0.0
    %1162 = vmatpush1.msra.mxu0 0.0
    %1163 = vmatprep.subr.mxu0 0.0
    %1164 = vmatpush1.msra.mxu0 0.0
    %1165 = vmatprep.subr.mxu0 0.0
    %1166 = vmatpush1.msra.mxu0 %v1137
    %1167 = vmatprep.subr.mxu0 0.0
    %1168 = vmatpush1.msra.mxu0 %v1136
    %1169 = vmatprep.subr.mxu0 0.0
    %1170 = vmatpush1.msra.mxu0 %v1135
    %1171 = vmatprep.subr.mxu0 0.0
    %1172 = vmatpush1.msra.mxu0 %v1134
    %1173 = vmatprep.subr.mxu0 0.0
    %1174 = vmatpush1.msra.mxu0 %v1133
    %1175 = vmatprep.subr.mxu0 0.0
    %1176 = vmatpush1.msra.mxu0 %v1132
    %1177 = vmatprep.subr.mxu0 0.0
    %1178 = vmatpush1.msra.mxu0 %v1131
    %1179 = vmatprep.subr.mxu0 0.0
    %1180 = vmatpush1.msra.mxu0 %v1130
    %1181 = vmatprep.subr.mxu0 0.0
    %1182 = vmatpush2.msra.mxu0 0.0
    %1183 = vmatprep.subr.mxu0 0.0
    %1184 = vmatpush2.msra.mxu0 0.0
    %1185 = vmatprep.subr.mxu0 0.0
    %1186 = vmatpush2.msra.mxu0 0.0
    %1187 = vmatprep.subr.mxu0 0.0
    %1188 = vmatpush2.msra.mxu0 0.0
    %1189 = vmatprep.subr.mxu0 0.0
    %1190 = vmatpush2.msra.mxu0 0.0
    %1191 = vmatprep.subr.mxu0 0.0
    %1192 = vmatpush2.msra.mxu0 0.0
    %1193 = vmatprep.subr.mxu0 0.0
    %1194 = vmatpush2.msra.mxu0 0.0
    %1195 = vmatprep.subr.mxu0 0.0
    %1196 = vmatpush2.msra.mxu0 0.0
    %1197 = vmatprep.subr.mxu0 0.0
    %1198 = vmatpush2.msra.mxu0 0.0
    %1199 = vmatprep.subr.mxu0 0.0
    %1200 = vmatpush2.msra.mxu0 0.0
    %1201 = vmatprep.subr.mxu0 0.0
    %1202 = vmatpush2.msra.mxu0 0.0
    %1203 = vmatprep.subr.mxu0 0.0
    %1204 = vmatpush2.msra.mxu0 0.0
    %1205 = vmatprep.subr.mxu0 0.0
    %1206 = vmatpush2.msra.mxu0 0.0
    %1207 = vmatprep.subr.mxu0 0.0
    %1208 = vmatpush2.msra.mxu0 0.0
    %1209 = vmatprep.subr.mxu0 0.0
    %1210 = vmatpush2.msra.mxu0 0.0
    %1211 = vmatprep.subr.mxu0 0.0
    %1212 = vmatpush2.msra.mxu0 0.0
    %1213 = vmatprep.mubr.f32.mxu0 0.0
    %1214 = vmatmul.mubr.f32.gmra.mxu0 %v1144
    %v1215 = vpop.f32.mrf.mxu0
    %v1216 = vadd.f32 %v1141, %v1215
    %v1217 = vpop.f32.mrf.mxu0
    %1218 = vmatprep.mubr.f32.mxu0 0.0
    %1219 = vmatmul.mubr.f32.gmra.mxu0 %v1147
    %v1220 = vpop.f32.mrf.mxu0
    %v1221 = vadd.f32 %v1141, %v1220
    %v1222 = vpop.f32.mrf.mxu0
    %1223 = vdwg.mxu0
    %v1224 = vadd.f32 %v1021, %v1216
    %v1225 = vadd.f32 %v1022, %v1221
    %v1226 = vsel %vm71, %v1224, 0.0
    %1227 = vadd.xlane.f32.xlu0 %v1226
    %v1228 = vpop.xlane.xlu0 %1227
    %v1229 = vsel %vm71, %v1225, 0.0
    %1230 = vadd.xlane.f32.xlu0 %v1229
    %v1231 = vpop.xlane.xlu0 %1230
    %v1232 = vmul.f32 %v1228, %v78
    %v1233 = vmul.f32 %v1231, %v78
    %v1234 = vsub.f32 %v1224, %v1232
    %v1235 = vsub.f32 %v1225, %v1233
    %v1236 = vmul.f32 %v1234, %v1234
    %v1237 = vmul.f32 %v1235, %v1235
    %v1238 = vsel %vm71, %v1236, 0.0
    %1239 = vadd.xlane.f32.xlu0 %v1238
    %v1240 = vpop.xlane.xlu0 %1239
    %v1241 = vsel %vm71, %v1237, 0.0
    %1242 = vadd.xlane.f32.xlu0 %v1241
    %v1243 = vpop.xlane.xlu0 %1242
    %v1244 = vmul.f32 %v1240, %v78
    %v1245 = vmul.f32 %v1243, %v78
    %v1246 = vadd.f32 %v1244, 1e-12
    %v1247 = vadd.f32 %v1245, 1e-12
    %v1248 = vrsqrt.pop %v1246
    %v1249 = vrsqrt.pop %v1247
    %v1250 = vmul.f32 %v1234, %v1248
    %v1251 = vmul.f32 %v1235, %v1249
    %v1252 = vlaneseq
    %v1253 = vshrl.u32 %v1252, 7
    %v1254 = vsub.s32 0, %v1253
    %v1255 = vrot.slane %v67, %v1254
    %v1256 = vmul.f32 %v1250, %v1255
    %v1257 = vmul.f32 %v1251, %v1255
    %v1258 = vlaneseq
    %v1259 = vshrl.u32 %v1258, 7
    %v1260 = vsub.s32 1, %v1259
    %v1261 = vrot.slane %v67, %v1260
    %v1262 = vadd.f32 %v1256, %v1261
    %v1263 = vadd.f32 %v1257, %v1261
    %s1264 = scalar_lea.vmem %s3, 32
    %v1265 = vld [vmem:[%s1264] sm:$0xff]
    %v1266 = vld [vmem:[%s1264 + $0x8] sm:$0xff]
    %v1267 = vld [vmem:[%s1264 + $0x10] sm:$0xff]
    %v1268 = vld [vmem:[%s1264 + $0x18] sm:$0xff]
    %v1269 = vlaneseq
    %v1270 = vshrl.u32 %v1269, 7
    %v1271 = vsub.s32 2, %v1270
    %v1272 = vrot.slane %v67, %v1271
    %v1274 = vsel %vm71, %v1262, 0
    %v1277 = vsel %vm71, %v1263, 0
    %1279 = vmatprep.subr.mxu0 0.0
    %1280 = vmatpush1.msra.mxu0 0.0
    %1281 = vmatprep.subr.mxu0 0.0
    %1282 = vmatpush1.msra.mxu0 0.0
    %1283 = vmatprep.subr.mxu0 0.0
    %1284 = vmatpush1.msra.mxu0 0.0
    %1285 = vmatprep.subr.mxu0 0.0
    %1286 = vmatpush1.msra.mxu0 0.0
    %1287 = vmatprep.subr.mxu0 0.0
    %1288 = vmatpush1.msra.mxu0 0.0
    %1289 = vmatprep.subr.mxu0 0.0
    %1290 = vmatpush1.msra.mxu0 0.0
    %1291 = vmatprep.subr.mxu0 0.0
    %1292 = vmatpush1.msra.mxu0 0.0
    %1293 = vmatprep.subr.mxu0 0.0
    %1294 = vmatpush1.msra.mxu0 0.0
    %1295 = vmatprep.subr.mxu0 0.0
    %1296 = vmatpush1.msra.mxu0 0.0
    %1297 = vmatprep.subr.mxu0 0.0
    %1298 = vmatpush1.msra.mxu0 0.0
    %1299 = vmatprep.subr.mxu0 0.0
    %1300 = vmatpush1.msra.mxu0 0.0
    %1301 = vmatprep.subr.mxu0 0.0
    %1302 = vmatpush1.msra.mxu0 0.0
    %1303 = vmatprep.subr.mxu0 0.0
    %1304 = vmatpush1.msra.mxu0 %v1268
    %1305 = vmatprep.subr.mxu0 0.0
    %1306 = vmatpush1.msra.mxu0 %v1267
    %1307 = vmatprep.subr.mxu0 0.0
    %1308 = vmatpush1.msra.mxu0 %v1266
    %1309 = vmatprep.subr.mxu0 0.0
    %1310 = vmatpush1.msra.mxu0 %v1265
    %1311 = vmatprep.subr.mxu0 0.0
    %1312 = vmatpush2.msra.mxu0 0.0
    %1313 = vmatprep.subr.mxu0 0.0
    %1314 = vmatpush2.msra.mxu0 0.0
    %1315 = vmatprep.subr.mxu0 0.0
    %1316 = vmatpush2.msra.mxu0 0.0
    %1317 = vmatprep.subr.mxu0 0.0
    %1318 = vmatpush2.msra.mxu0 0.0
    %1319 = vmatprep.subr.mxu0 0.0
    %1320 = vmatpush2.msra.mxu0 0.0
    %1321 = vmatprep.subr.mxu0 0.0
    %1322 = vmatpush2.msra.mxu0 0.0
    %1323 = vmatprep.subr.mxu0 0.0
    %1324 = vmatpush2.msra.mxu0 0.0
    %1325 = vmatprep.subr.mxu0 0.0
    %1326 = vmatpush2.msra.mxu0 0.0
    %1327 = vmatprep.subr.mxu0 0.0
    %1328 = vmatpush2.msra.mxu0 0.0
    %1329 = vmatprep.subr.mxu0 0.0
    %1330 = vmatpush2.msra.mxu0 0.0
    %1331 = vmatprep.subr.mxu0 0.0
    %1332 = vmatpush2.msra.mxu0 0.0
    %1333 = vmatprep.subr.mxu0 0.0
    %1334 = vmatpush2.msra.mxu0 0.0
    %1335 = vmatprep.subr.mxu0 0.0
    %1336 = vmatpush2.msra.mxu0 0.0
    %1337 = vmatprep.subr.mxu0 0.0
    %1338 = vmatpush2.msra.mxu0 0.0
    %1339 = vmatprep.subr.mxu0 0.0
    %1340 = vmatpush2.msra.mxu0 0.0
    %1341 = vmatprep.subr.mxu0 0.0
    %1342 = vmatpush2.msra.mxu0 0.0
    %1343 = vmatprep.mubr.f32.mxu0 0.0
    %1344 = vmatmul.mubr.f32.gmra.mxu0 %v1274
    %v1345 = vpop.f32.mrf.mxu0
    %v1346 = vadd.f32 %v1272, %v1345
    %v1347 = vpop.f32.mrf.mxu0
    %1348 = vmatprep.mubr.f32.mxu0 0.0
    %1349 = vmatmul.mubr.f32.gmra.mxu0 %v1277
    %v1350 = vpop.f32.mrf.mxu0
    %v1351 = vadd.f32 %v1272, %v1350
    %v1352 = vpop.f32.mrf.mxu0
    %1353 = vdwg.mxu0
    %1355 = vrot.lane.b32.xlu0 %v1346, 96
    %v1356 = vpop.permute.xlu0 %1355
    %v1357 = vsel %vm206, %v1346, 0
    %v1359 = vsel %vm206, %v1356, 0
    %1361 = vmatprep.subr.mxu0 0.0
    %1362 = vmatpush1.xpose.msra.mxu0 0.0
    %1363 = vmatprep.subr.mxu0 0.0
    %1364 = vmatpush1.xpose.msra.mxu0 0.0
    %1365 = vmatprep.subr.mxu0 0.0
    %1366 = vmatpush1.xpose.msra.mxu0 0.0
    %1367 = vmatprep.subr.mxu0 0.0
    %1368 = vmatpush1.xpose.msra.mxu0 0.0
    %1369 = vmatprep.subr.mxu0 0.0
    %1370 = vmatpush1.xpose.msra.mxu0 0.0
    %1371 = vmatprep.subr.mxu0 0.0
    %1372 = vmatpush1.xpose.msra.mxu0 0.0
    %1373 = vmatprep.subr.mxu0 0.0
    %1374 = vmatpush1.xpose.msra.mxu0 0.0
    %1375 = vmatprep.subr.mxu0 0.0
    %1376 = vmatpush1.xpose.msra.mxu0 0.0
    %1377 = vmatprep.subr.mxu0 0.0
    %1378 = vmatpush1.xpose.msra.mxu0 0.0
    %1379 = vmatprep.subr.mxu0 0.0
    %1380 = vmatpush1.xpose.msra.mxu0 0.0
    %1381 = vmatprep.subr.mxu0 0.0
    %1382 = vmatpush1.xpose.msra.mxu0 0.0
    %1383 = vmatprep.subr.mxu0 0.0
    %1384 = vmatpush1.xpose.msra.mxu0 0.0
    %1385 = vmatprep.subr.mxu0 0.0
    %1386 = vmatpush1.xpose.msra.mxu0 0.0
    %1387 = vmatprep.subr.mxu0 0.0
    %1388 = vmatpush1.xpose.msra.mxu0 0.0
    %1389 = vmatprep.subr.mxu0 0.0
    %1390 = vmatpush1.xpose.msra.mxu0 0.0
    %1391 = vmatprep.subr.mxu0 0.0
    %1392 = vmatpush1.xpose.msra.mxu0 %v1359
    %1393 = vmatprep.subr.mxu0 0.0
    %1394 = vmatpush2.xpose.msra.mxu0 0.0
    %1395 = vmatprep.subr.mxu0 0.0
    %1396 = vmatpush2.xpose.msra.mxu0 0.0
    %1397 = vmatprep.subr.mxu0 0.0
    %1398 = vmatpush2.xpose.msra.mxu0 0.0
    %1399 = vmatprep.subr.mxu0 0.0
    %1400 = vmatpush2.xpose.msra.mxu0 0.0
    %1401 = vmatprep.subr.mxu0 0.0
    %1402 = vmatpush2.xpose.msra.mxu0 0.0
    %1403 = vmatprep.subr.mxu0 0.0
    %1404 = vmatpush2.xpose.msra.mxu0 0.0
    %1405 = vmatprep.subr.mxu0 0.0
    %1406 = vmatpush2.xpose.msra.mxu0 0.0
    %1407 = vmatprep.subr.mxu0 0.0
    %1408 = vmatpush2.xpose.msra.mxu0 0.0
    %1409 = vmatprep.subr.mxu0 0.0
    %1410 = vmatpush2.xpose.msra.mxu0 0.0
    %1411 = vmatprep.subr.mxu0 0.0
    %1412 = vmatpush2.xpose.msra.mxu0 0.0
    %1413 = vmatprep.subr.mxu0 0.0
    %1414 = vmatpush2.xpose.msra.mxu0 0.0
    %1415 = vmatprep.subr.mxu0 0.0
    %1416 = vmatpush2.xpose.msra.mxu0 0.0
    %1417 = vmatprep.subr.mxu0 0.0
    %1418 = vmatpush2.xpose.msra.mxu0 0.0
    %1419 = vmatprep.subr.mxu0 0.0
    %1420 = vmatpush2.xpose.msra.mxu0 0.0
    %1421 = vmatprep.subr.mxu0 0.0
    %1422 = vmatpush2.xpose.msra.mxu0 0.0
    %1423 = vmatprep.subr.mxu0 0.0
    %1424 = vmatpush2.xpose.msra.mxu0 0.0
    %1425 = vmatprep.mubr.f32.mxu0 0.0
    %1426 = vmatmul.mubr.f32.gmra.mxu0 %v1357
    %v1427 = vpop.f32.mrf.mxu0
    %v1428 = vadd.f32 0.0, %v1427
    %v1429 = vpop.f32.mrf.mxu0
    %1430 = vdwg.mxu0
    %v1431 = vmul.f32 %v1428, 0.25
    %v1432 = vadd.f32 %v1431, %v285
    %v1433 = vsel %vm287, %v1432, -inf
    %1434 = vmax.xlane.f32.xlu0 %v1433
    %v1435 = vpop.xlane.xlu0 %1434
    %v1436 = vsub.f32 %v1432, %v1435
    %v1437 = vmul.f32 %v1436, 1.442695
    %v1438 = vpow.pop %v1437
    %v1439 = vsel %vm287, %v1438, 0.0
    %1440 = vadd.xlane.f32.xlu0 %v1439
    %v1441 = vpop.xlane.xlu0 %1440
    %v1442 = vrcp.pop %v1441
    %v1443 = vmul.f32 %v1438, %v1442
    %1444 = vrot.lane.b32.xlu0 %v1346, 64
    %v1445 = vpop.permute.xlu0 %1444
    %v1448 = vsel %vm287, %v1443, 0
    %1450 = vmatprep.subr.mxu0 0.0
    %1451 = vmatpush1.msra.mxu0 0.0
    %1452 = vmatprep.subr.mxu0 0.0
    %1453 = vmatpush1.msra.mxu0 0.0
    %1454 = vmatprep.subr.mxu0 0.0
    %1455 = vmatpush1.msra.mxu0 0.0
    %1456 = vmatprep.subr.mxu0 0.0
    %1457 = vmatpush1.msra.mxu0 0.0
    %1458 = vmatprep.subr.mxu0 0.0
    %1459 = vmatpush1.msra.mxu0 0.0
    %1460 = vmatprep.subr.mxu0 0.0
    %1461 = vmatpush1.msra.mxu0 0.0
    %1462 = vmatprep.subr.mxu0 0.0
    %1463 = vmatpush1.msra.mxu0 0.0
    %1464 = vmatprep.subr.mxu0 0.0
    %1465 = vmatpush1.msra.mxu0 0.0
    %1466 = vmatprep.subr.mxu0 0.0
    %1467 = vmatpush1.msra.mxu0 0.0
    %1468 = vmatprep.subr.mxu0 0.0
    %1469 = vmatpush1.msra.mxu0 0.0
    %1470 = vmatprep.subr.mxu0 0.0
    %1471 = vmatpush1.msra.mxu0 0.0
    %1472 = vmatprep.subr.mxu0 0.0
    %1473 = vmatpush1.msra.mxu0 0.0
    %1474 = vmatprep.subr.mxu0 0.0
    %1475 = vmatpush1.msra.mxu0 0.0
    %1476 = vmatprep.subr.mxu0 0.0
    %1477 = vmatpush1.msra.mxu0 0.0
    %1478 = vmatprep.subr.mxu0 0.0
    %1479 = vmatpush1.msra.mxu0 0.0
    %1480 = vmatprep.subr.mxu0 0.0
    %1481 = vmatpush1.msra.mxu0 %v1445
    %1482 = vmatprep.subr.mxu0 0.0
    %1483 = vmatpush2.msra.mxu0 0.0
    %1484 = vmatprep.subr.mxu0 0.0
    %1485 = vmatpush2.msra.mxu0 0.0
    %1486 = vmatprep.subr.mxu0 0.0
    %1487 = vmatpush2.msra.mxu0 0.0
    %1488 = vmatprep.subr.mxu0 0.0
    %1489 = vmatpush2.msra.mxu0 0.0
    %1490 = vmatprep.subr.mxu0 0.0
    %1491 = vmatpush2.msra.mxu0 0.0
    %1492 = vmatprep.subr.mxu0 0.0
    %1493 = vmatpush2.msra.mxu0 0.0
    %1494 = vmatprep.subr.mxu0 0.0
    %1495 = vmatpush2.msra.mxu0 0.0
    %1496 = vmatprep.subr.mxu0 0.0
    %1497 = vmatpush2.msra.mxu0 0.0
    %1498 = vmatprep.subr.mxu0 0.0
    %1499 = vmatpush2.msra.mxu0 0.0
    %1500 = vmatprep.subr.mxu0 0.0
    %1501 = vmatpush2.msra.mxu0 0.0
    %1502 = vmatprep.subr.mxu0 0.0
    %1503 = vmatpush2.msra.mxu0 0.0
    %1504 = vmatprep.subr.mxu0 0.0
    %1505 = vmatpush2.msra.mxu0 0.0
    %1506 = vmatprep.subr.mxu0 0.0
    %1507 = vmatpush2.msra.mxu0 0.0
    %1508 = vmatprep.subr.mxu0 0.0
    %1509 = vmatpush2.msra.mxu0 0.0
    %1510 = vmatprep.subr.mxu0 0.0
    %1511 = vmatpush2.msra.mxu0 0.0
    %1512 = vmatprep.subr.mxu0 0.0
    %1513 = vmatpush2.msra.mxu0 0.0
    %1514 = vmatprep.mubr.f32.mxu0 0.0
    %1515 = vmatmul.mubr.f32.gmra.mxu0 %v1448
    %v1516 = vpop.f32.mrf.mxu0
    %v1517 = vadd.f32 0.0, %v1516
    %v1518 = vpop.f32.mrf.mxu0
    %1519 = vdwg.mxu0
    %1520 = vst.msk [vmem:[#allocation2] sm:$0xff] %vm206, %v1517
    %1521 = vrot.lane.b32.xlu0 %v1346, 112
    %v1522 = vpop.permute.xlu0 %1521
    %1523 = vrot.lane.b32.xlu0 %v1346, 80
    %v1524 = vpop.permute.xlu0 %1523
    %v1525 = vsel %vm206, %v1522, 0
    %v1527 = vsel %vm206, %v1524, 0
    %1529 = vmatprep.subr.mxu0 0.0
    %1530 = vmatpush1.xpose.msra.mxu0 0.0
    %1531 = vmatprep.subr.mxu0 0.0
    %1532 = vmatpush1.xpose.msra.mxu0 0.0
    %1533 = vmatprep.subr.mxu0 0.0
    %1534 = vmatpush1.xpose.msra.mxu0 0.0
    %1535 = vmatprep.subr.mxu0 0.0
    %1536 = vmatpush1.xpose.msra.mxu0 0.0
    %1537 = vmatprep.subr.mxu0 0.0
    %1538 = vmatpush1.xpose.msra.mxu0 0.0
    %1539 = vmatprep.subr.mxu0 0.0
    %1540 = vmatpush1.xpose.msra.mxu0 0.0
    %1541 = vmatprep.subr.mxu0 0.0
    %1542 = vmatpush1.xpose.msra.mxu0 0.0
    %1543 = vmatprep.subr.mxu0 0.0
    %1544 = vmatpush1.xpose.msra.mxu0 0.0
    %1545 = vmatprep.subr.mxu0 0.0
    %1546 = vmatpush1.xpose.msra.mxu0 0.0
    %1547 = vmatprep.subr.mxu0 0.0
    %1548 = vmatpush1.xpose.msra.mxu0 0.0
    %1549 = vmatprep.subr.mxu0 0.0
    %1550 = vmatpush1.xpose.msra.mxu0 0.0
    %1551 = vmatprep.subr.mxu0 0.0
    %1552 = vmatpush1.xpose.msra.mxu0 0.0
    %1553 = vmatprep.subr.mxu0 0.0
    %1554 = vmatpush1.xpose.msra.mxu0 0.0
    %1555 = vmatprep.subr.mxu0 0.0
    %1556 = vmatpush1.xpose.msra.mxu0 0.0
    %1557 = vmatprep.subr.mxu0 0.0
    %1558 = vmatpush1.xpose.msra.mxu0 0.0
    %1559 = vmatprep.subr.mxu0 0.0
    %1560 = vmatpush1.xpose.msra.mxu0 %v1527
    %1561 = vmatprep.subr.mxu0 0.0
    %1562 = vmatpush2.xpose.msra.mxu0 0.0
    %1563 = vmatprep.subr.mxu0 0.0
    %1564 = vmatpush2.xpose.msra.mxu0 0.0
    %1565 = vmatprep.subr.mxu0 0.0
    %1566 = vmatpush2.xpose.msra.mxu0 0.0
    %1567 = vmatprep.subr.mxu0 0.0
    %1568 = vmatpush2.xpose.msra.mxu0 0.0
    %1569 = vmatprep.subr.mxu0 0.0
    %1570 = vmatpush2.xpose.msra.mxu0 0.0
    %1571 = vmatprep.subr.mxu0 0.0
    %1572 = vmatpush2.xpose.msra.mxu0 0.0
    %1573 = vmatprep.subr.mxu0 0.0
    %1574 = vmatpush2.xpose.msra.mxu0 0.0
    %1575 = vmatprep.subr.mxu0 0.0
    %1576 = vmatpush2.xpose.msra.mxu0 0.0
    %1577 = vmatprep.subr.mxu0 0.0
    %1578 = vmatpush2.xpose.msra.mxu0 0.0
    %1579 = vmatprep.subr.mxu0 0.0
    %1580 = vmatpush2.xpose.msra.mxu0 0.0
    %1581 = vmatprep.subr.mxu0 0.0
    %1582 = vmatpush2.xpose.msra.mxu0 0.0
    %1583 = vmatprep.subr.mxu0 0.0
    %1584 = vmatpush2.xpose.msra.mxu0 0.0
    %1585 = vmatprep.subr.mxu0 0.0
    %1586 = vmatpush2.xpose.msra.mxu0 0.0
    %1587 = vmatprep.subr.mxu0 0.0
    %1588 = vmatpush2.xpose.msra.mxu0 0.0
    %1589 = vmatprep.subr.mxu0 0.0
    %1590 = vmatpush2.xpose.msra.mxu0 0.0
    %1591 = vmatprep.subr.mxu0 0.0
    %1592 = vmatpush2.xpose.msra.mxu0 0.0
    %1593 = vmatprep.mubr.f32.mxu0 0.0
    %1594 = vmatmul.mubr.f32.gmra.mxu0 %v1525
    %v1595 = vpop.f32.mrf.mxu0
    %v1596 = vadd.f32 0.0, %v1595
    %v1597 = vpop.f32.mrf.mxu0
    %1598 = vdwg.mxu0
    %v1599 = vmul.f32 %v1596, 0.25
    %v1600 = vadd.f32 %v1599, %v285
    %v1601 = vsel %vm287, %v1600, -inf
    %1602 = vmax.xlane.f32.xlu0 %v1601
    %v1603 = vpop.xlane.xlu0 %1602
    %v1604 = vsub.f32 %v1600, %v1603
    %v1605 = vmul.f32 %v1604, 1.442695
    %v1606 = vpow.pop %v1605
    %v1607 = vsel %vm287, %v1606, 0.0
    %1608 = vadd.xlane.f32.xlu0 %v1607
    %v1609 = vpop.xlane.xlu0 %1608
    %v1610 = vrcp.pop %v1609
    %v1611 = vmul.f32 %v1606, %v1610
    %1612 = vrot.lane.b32.xlu0 %v1346, 48
    %v1613 = vpop.permute.xlu0 %1612
    %v1616 = vsel %vm287, %v1611, 0
    %1618 = vmatprep.subr.mxu0 0.0
    %1619 = vmatpush1.msra.mxu0 0.0
    %1620 = vmatprep.subr.mxu0 0.0
    %1621 = vmatpush1.msra.mxu0 0.0
    %1622 = vmatprep.subr.mxu0 0.0
    %1623 = vmatpush1.msra.mxu0 0.0
    %1624 = vmatprep.subr.mxu0 0.0
    %1625 = vmatpush1.msra.mxu0 0.0
    %1626 = vmatprep.subr.mxu0 0.0
    %1627 = vmatpush1.msra.mxu0 0.0
    %1628 = vmatprep.subr.mxu0 0.0
    %1629 = vmatpush1.msra.mxu0 0.0
    %1630 = vmatprep.subr.mxu0 0.0
    %1631 = vmatpush1.msra.mxu0 0.0
    %1632 = vmatprep.subr.mxu0 0.0
    %1633 = vmatpush1.msra.mxu0 0.0
    %1634 = vmatprep.subr.mxu0 0.0
    %1635 = vmatpush1.msra.mxu0 0.0
    %1636 = vmatprep.subr.mxu0 0.0
    %1637 = vmatpush1.msra.mxu0 0.0
    %1638 = vmatprep.subr.mxu0 0.0
    %1639 = vmatpush1.msra.mxu0 0.0
    %1640 = vmatprep.subr.mxu0 0.0
    %1641 = vmatpush1.msra.mxu0 0.0
    %1642 = vmatprep.subr.mxu0 0.0
    %1643 = vmatpush1.msra.mxu0 0.0
    %1644 = vmatprep.subr.mxu0 0.0
    %1645 = vmatpush1.msra.mxu0 0.0
    %1646 = vmatprep.subr.mxu0 0.0
    %1647 = vmatpush1.msra.mxu0 0.0
    %1648 = vmatprep.subr.mxu0 0.0
    %1649 = vmatpush1.msra.mxu0 %v1613
    %1650 = vmatprep.subr.mxu0 0.0
    %1651 = vmatpush2.msra.mxu0 0.0
    %1652 = vmatprep.subr.mxu0 0.0
    %1653 = vmatpush2.msra.mxu0 0.0
    %1654 = vmatprep.subr.mxu0 0.0
    %1655 = vmatpush2.msra.mxu0 0.0
    %1656 = vmatprep.subr.mxu0 0.0
    %1657 = vmatpush2.msra.mxu0 0.0
    %1658 = vmatprep.subr.mxu0 0.0
    %1659 = vmatpush2.msra.mxu0 0.0
    %1660 = vmatprep.subr.mxu0 0.0
    %1661 = vmatpush2.msra.mxu0 0.0
    %1662 = vmatprep.subr.mxu0 0.0
    %1663 = vmatpush2.msra.mxu0 0.0
    %1664 = vmatprep.subr.mxu0 0.0
    %1665 = vmatpush2.msra.mxu0 0.0
    %1666 = vmatprep.subr.mxu0 0.0
    %1667 = vmatpush2.msra.mxu0 0.0
    %1668 = vmatprep.subr.mxu0 0.0
    %1669 = vmatpush2.msra.mxu0 0.0
    %1670 = vmatprep.subr.mxu0 0.0
    %1671 = vmatpush2.msra.mxu0 0.0
    %1672 = vmatprep.subr.mxu0 0.0
    %1673 = vmatpush2.msra.mxu0 0.0
    %1674 = vmatprep.subr.mxu0 0.0
    %1675 = vmatpush2.msra.mxu0 0.0
    %1676 = vmatprep.subr.mxu0 0.0
    %1677 = vmatpush2.msra.mxu0 0.0
    %1678 = vmatprep.subr.mxu0 0.0
    %1679 = vmatpush2.msra.mxu0 0.0
    %1680 = vmatprep.subr.mxu0 0.0
    %1681 = vmatpush2.msra.mxu0 0.0
    %1682 = vmatprep.mubr.f32.mxu0 0.0
    %1683 = vmatmul.mubr.f32.gmra.mxu0 %v1616
    %v1684 = vpop.f32.mrf.mxu0
    %v1685 = vadd.f32 0.0, %v1684
    %v1686 = vpop.f32.mrf.mxu0
    %1687 = vdwg.mxu0
    %1689 = vrot.lane.b32.xlu0 %v1685, 16
    %v1690 = vpop.permute.xlu0 %1689
    %1692 = vst.msk [vmem:[#allocation2] sm:$0xff] %vm547, %v1690
    %1694 = vrot.lane.b32.xlu0 %v1351, 96
    %v1695 = vpop.permute.xlu0 %1694
    %v1696 = vsel %vm206, %v1351, 0
    %v1698 = vsel %vm206, %v1695, 0
    %1700 = vmatprep.subr.mxu0 0.0
    %1701 = vmatpush1.xpose.msra.mxu0 0.0
    %1702 = vmatprep.subr.mxu0 0.0
    %1703 = vmatpush1.xpose.msra.mxu0 0.0
    %1704 = vmatprep.subr.mxu0 0.0
    %1705 = vmatpush1.xpose.msra.mxu0 0.0
    %1706 = vmatprep.subr.mxu0 0.0
    %1707 = vmatpush1.xpose.msra.mxu0 0.0
    %1708 = vmatprep.subr.mxu0 0.0
    %1709 = vmatpush1.xpose.msra.mxu0 0.0
    %1710 = vmatprep.subr.mxu0 0.0
    %1711 = vmatpush1.xpose.msra.mxu0 0.0
    %1712 = vmatprep.subr.mxu0 0.0
    %1713 = vmatpush1.xpose.msra.mxu0 0.0
    %1714 = vmatprep.subr.mxu0 0.0
    %1715 = vmatpush1.xpose.msra.mxu0 0.0
    %1716 = vmatprep.subr.mxu0 0.0
    %1717 = vmatpush1.xpose.msra.mxu0 0.0
    %1718 = vmatprep.subr.mxu0 0.0
    %1719 = vmatpush1.xpose.msra.mxu0 0.0
    %1720 = vmatprep.subr.mxu0 0.0
    %1721 = vmatpush1.xpose.msra.mxu0 0.0
    %1722 = vmatprep.subr.mxu0 0.0
    %1723 = vmatpush1.xpose.msra.mxu0 0.0
    %1724 = vmatprep.subr.mxu0 0.0
    %1725 = vmatpush1.xpose.msra.mxu0 0.0
    %1726 = vmatprep.subr.mxu0 0.0
    %1727 = vmatpush1.xpose.msra.mxu0 0.0
    %1728 = vmatprep.subr.mxu0 0.0
    %1729 = vmatpush1.xpose.msra.mxu0 0.0
    %1730 = vmatprep.subr.mxu0 0.0
    %1731 = vmatpush1.xpose.msra.mxu0 %v1698
    %1732 = vmatprep.subr.mxu0 0.0
    %1733 = vmatpush2.xpose.msra.mxu0 0.0
    %1734 = vmatprep.subr.mxu0 0.0
    %1735 = vmatpush2.xpose.msra.mxu0 0.0
    %1736 = vmatprep.subr.mxu0 0.0
    %1737 = vmatpush2.xpose.msra.mxu0 0.0
    %1738 = vmatprep.subr.mxu0 0.0
    %1739 = vmatpush2.xpose.msra.mxu0 0.0
    %1740 = vmatprep.subr.mxu0 0.0
    %1741 = vmatpush2.xpose.msra.mxu0 0.0
    %1742 = vmatprep.subr.mxu0 0.0
    %1743 = vmatpush2.xpose.msra.mxu0 0.0
    %1744 = vmatprep.subr.mxu0 0.0
    %1745 = vmatpush2.xpose.msra.mxu0 0.0
    %1746 = vmatprep.subr.mxu0 0.0
    %1747 = vmatpush2.xpose.msra.mxu0 0.0
    %1748 = vmatprep.subr.mxu0 0.0
    %1749 = vmatpush2.xpose.msra.mxu0 0.0
    %1750 = vmatprep.subr.mxu0 0.0
    %1751 = vmatpush2.xpose.msra.mxu0 0.0
    %1752 = vmatprep.subr.mxu0 0.0
    %1753 = vmatpush2.xpose.msra.mxu0 0.0
    %1754 = vmatprep.subr.mxu0 0.0
    %1755 = vmatpush2.xpose.msra.mxu0 0.0
    %1756 = vmatprep.subr.mxu0 0.0
    %1757 = vmatpush2.xpose.msra.mxu0 0.0
    %1758 = vmatprep.subr.mxu0 0.0
    %1759 = vmatpush2.xpose.msra.mxu0 0.0
    %1760 = vmatprep.subr.mxu0 0.0
    %1761 = vmatpush2.xpose.msra.mxu0 0.0
    %1762 = vmatprep.subr.mxu0 0.0
    %1763 = vmatpush2.xpose.msra.mxu0 0.0
    %1764 = vmatprep.mubr.f32.mxu0 0.0
    %1765 = vmatmul.mubr.f32.gmra.mxu0 %v1696
    %v1766 = vpop.f32.mrf.mxu0
    %v1767 = vadd.f32 0.0, %v1766
    %v1768 = vpop.f32.mrf.mxu0
    %1769 = vdwg.mxu0
    %v1770 = vmul.f32 %v1767, 0.25
    %v1771 = vadd.f32 %v1770, %v630
    %v1772 = vsel %vm287, %v1771, -inf
    %1773 = vmax.xlane.f32.xlu0 %v1772
    %v1774 = vpop.xlane.xlu0 %1773
    %v1775 = vsub.f32 %v1771, %v1774
    %v1776 = vmul.f32 %v1775, 1.442695
    %v1777 = vpow.pop %v1776
    %v1778 = vsel %vm287, %v1777, 0.0
    %1779 = vadd.xlane.f32.xlu0 %v1778
    %v1780 = vpop.xlane.xlu0 %1779
    %v1781 = vrcp.pop %v1780
    %v1782 = vmul.f32 %v1777, %v1781
    %1783 = vrot.lane.b32.xlu0 %v1351, 64
    %v1784 = vpop.permute.xlu0 %1783
    %v1787 = vsel %vm287, %v1782, 0
    %1789 = vmatprep.subr.mxu0 0.0
    %1790 = vmatpush1.msra.mxu0 0.0
    %1791 = vmatprep.subr.mxu0 0.0
    %1792 = vmatpush1.msra.mxu0 0.0
    %1793 = vmatprep.subr.mxu0 0.0
    %1794 = vmatpush1.msra.mxu0 0.0
    %1795 = vmatprep.subr.mxu0 0.0
    %1796 = vmatpush1.msra.mxu0 0.0
    %1797 = vmatprep.subr.mxu0 0.0
    %1798 = vmatpush1.msra.mxu0 0.0
    %1799 = vmatprep.subr.mxu0 0.0
    %1800 = vmatpush1.msra.mxu0 0.0
    %1801 = vmatprep.subr.mxu0 0.0
    %1802 = vmatpush1.msra.mxu0 0.0
    %1803 = vmatprep.subr.mxu0 0.0
    %1804 = vmatpush1.msra.mxu0 0.0
    %1805 = vmatprep.subr.mxu0 0.0
    %1806 = vmatpush1.msra.mxu0 0.0
    %1807 = vmatprep.subr.mxu0 0.0
    %1808 = vmatpush1.msra.mxu0 0.0
    %1809 = vmatprep.subr.mxu0 0.0
    %1810 = vmatpush1.msra.mxu0 0.0
    %1811 = vmatprep.subr.mxu0 0.0
    %1812 = vmatpush1.msra.mxu0 0.0
    %1813 = vmatprep.subr.mxu0 0.0
    %1814 = vmatpush1.msra.mxu0 0.0
    %1815 = vmatprep.subr.mxu0 0.0
    %1816 = vmatpush1.msra.mxu0 0.0
    %1817 = vmatprep.subr.mxu0 0.0
    %1818 = vmatpush1.msra.mxu0 0.0
    %1819 = vmatprep.subr.mxu0 0.0
    %1820 = vmatpush1.msra.mxu0 %v1784
    %1821 = vmatprep.subr.mxu0 0.0
    %1822 = vmatpush2.msra.mxu0 0.0
    %1823 = vmatprep.subr.mxu0 0.0
    %1824 = vmatpush2.msra.mxu0 0.0
    %1825 = vmatprep.subr.mxu0 0.0
    %1826 = vmatpush2.msra.mxu0 0.0
    %1827 = vmatprep.subr.mxu0 0.0
    %1828 = vmatpush2.msra.mxu0 0.0
    %1829 = vmatprep.subr.mxu0 0.0
    %1830 = vmatpush2.msra.mxu0 0.0
    %1831 = vmatprep.subr.mxu0 0.0
    %1832 = vmatpush2.msra.mxu0 0.0
    %1833 = vmatprep.subr.mxu0 0.0
    %1834 = vmatpush2.msra.mxu0 0.0
    %1835 = vmatprep.subr.mxu0 0.0
    %1836 = vmatpush2.msra.mxu0 0.0
    %1837 = vmatprep.subr.mxu0 0.0
    %1838 = vmatpush2.msra.mxu0 0.0
    %1839 = vmatprep.subr.mxu0 0.0
    %1840 = vmatpush2.msra.mxu0 0.0
    %1841 = vmatprep.subr.mxu0 0.0
    %1842 = vmatpush2.msra.mxu0 0.0
    %1843 = vmatprep.subr.mxu0 0.0
    %1844 = vmatpush2.msra.mxu0 0.0
    %1845 = vmatprep.subr.mxu0 0.0
    %1846 = vmatpush2.msra.mxu0 0.0
    %1847 = vmatprep.subr.mxu0 0.0
    %1848 = vmatpush2.msra.mxu0 0.0
    %1849 = vmatprep.subr.mxu0 0.0
    %1850 = vmatpush2.msra.mxu0 0.0
    %1851 = vmatprep.subr.mxu0 0.0
    %1852 = vmatpush2.msra.mxu0 0.0
    %1853 = vmatprep.mubr.f32.mxu0 0.0
    %1854 = vmatmul.mubr.f32.gmra.mxu0 %v1787
    %v1855 = vpop.f32.mrf.mxu0
    %v1856 = vadd.f32 0.0, %v1855
    %v1857 = vpop.f32.mrf.mxu0
    %1858 = vdwg.mxu0
    %1859 = vst.msk [vmem:[#allocation2 + $0x8] sm:$0xff] %vm206, %v1856
    %1860 = vrot.lane.b32.xlu0 %v1351, 112
    %v1861 = vpop.permute.xlu0 %1860
    %1862 = vrot.lane.b32.xlu0 %v1351, 80
    %v1863 = vpop.permute.xlu0 %1862
    %v1864 = vsel %vm206, %v1861, 0
    %v1866 = vsel %vm206, %v1863, 0
    %1868 = vmatprep.subr.mxu0 0.0
    %1869 = vmatpush1.xpose.msra.mxu0 0.0
    %1870 = vmatprep.subr.mxu0 0.0
    %1871 = vmatpush1.xpose.msra.mxu0 0.0
    %1872 = vmatprep.subr.mxu0 0.0
    %1873 = vmatpush1.xpose.msra.mxu0 0.0
    %1874 = vmatprep.subr.mxu0 0.0
    %1875 = vmatpush1.xpose.msra.mxu0 0.0
    %1876 = vmatprep.subr.mxu0 0.0
    %1877 = vmatpush1.xpose.msra.mxu0 0.0
    %1878 = vmatprep.subr.mxu0 0.0
    %1879 = vmatpush1.xpose.msra.mxu0 0.0
    %1880 = vmatprep.subr.mxu0 0.0
    %1881 = vmatpush1.xpose.msra.mxu0 0.0
    %1882 = vmatprep.subr.mxu0 0.0
    %1883 = vmatpush1.xpose.msra.mxu0 0.0
    %1884 = vmatprep.subr.mxu0 0.0
    %1885 = vmatpush1.xpose.msra.mxu0 0.0
    %1886 = vmatprep.subr.mxu0 0.0
    %1887 = vmatpush1.xpose.msra.mxu0 0.0
    %1888 = vmatprep.subr.mxu0 0.0
    %1889 = vmatpush1.xpose.msra.mxu0 0.0
    %1890 = vmatprep.subr.mxu0 0.0
    %1891 = vmatpush1.xpose.msra.mxu0 0.0
    %1892 = vmatprep.subr.mxu0 0.0
    %1893 = vmatpush1.xpose.msra.mxu0 0.0
    %1894 = vmatprep.subr.mxu0 0.0
    %1895 = vmatpush1.xpose.msra.mxu0 0.0
    %1896 = vmatprep.subr.mxu0 0.0
    %1897 = vmatpush1.xpose.msra.mxu0 0.0
    %1898 = vmatprep.subr.mxu0 0.0
    %1899 = vmatpush1.xpose.msra.mxu0 %v1866
    %1900 = vmatprep.subr.mxu0 0.0
    %1901 = vmatpush2.xpose.msra.mxu0 0.0
    %1902 = vmatprep.subr.mxu0 0.0
    %1903 = vmatpush2.xpose.msra.mxu0 0.0
    %1904 = vmatprep.subr.mxu0 0.0
    %1905 = vmatpush2.xpose.msra.mxu0 0.0
    %1906 = vmatprep.subr.mxu0 0.0
    %1907 = vmatpush2.xpose.msra.mxu0 0.0
    %1908 = vmatprep.subr.mxu0 0.0
    %1909 = vmatpush2.xpose.msra.mxu0 0.0
    %1910 = vmatprep.subr.mxu0 0.0
    %1911 = vmatpush2.xpose.msra.mxu0 0.0
    %1912 = vmatprep.subr.mxu0 0.0
    %1913 = vmatpush2.xpose.msra.mxu0 0.0
    %1914 = vmatprep.subr.mxu0 0.0
    %1915 = vmatpush2.xpose.msra.mxu0 0.0
    %1916 = vmatprep.subr.mxu0 0.0
    %1917 = vmatpush2.xpose.msra.mxu0 0.0
    %1918 = vmatprep.subr.mxu0 0.0
    %1919 = vmatpush2.xpose.msra.mxu0 0.0
    %1920 = vmatprep.subr.mxu0 0.0
    %1921 = vmatpush2.xpose.msra.mxu0 0.0
    %1922 = vmatprep.subr.mxu0 0.0
    %1923 = vmatpush2.xpose.msra.mxu0 0.0
    %1924 = vmatprep.subr.mxu0 0.0
    %1925 = vmatpush2.xpose.msra.mxu0 0.0
    %1926 = vmatprep.subr.mxu0 0.0
    %1927 = vmatpush2.xpose.msra.mxu0 0.0
    %1928 = vmatprep.subr.mxu0 0.0
    %1929 = vmatpush2.xpose.msra.mxu0 0.0
    %1930 = vmatprep.subr.mxu0 0.0
    %1931 = vmatpush2.xpose.msra.mxu0 0.0
    %1932 = vmatprep.mubr.f32.mxu0 0.0
    %1933 = vmatmul.mubr.f32.gmra.mxu0 %v1864
    %v1934 = vpop.f32.mrf.mxu0
    %v1935 = vadd.f32 0.0, %v1934
    %v1936 = vpop.f32.mrf.mxu0
    %1937 = vdwg.mxu0
    %v1938 = vmul.f32 %v1935, 0.25
    %v1939 = vadd.f32 %v1938, %v630
    %v1940 = vsel %vm287, %v1939, -inf
    %1941 = vmax.xlane.f32.xlu0 %v1940
    %v1942 = vpop.xlane.xlu0 %1941
    %v1943 = vsub.f32 %v1939, %v1942
    %v1944 = vmul.f32 %v1943, 1.442695
    %v1945 = vpow.pop %v1944
    %v1946 = vsel %vm287, %v1945, 0.0
    %1947 = vadd.xlane.f32.xlu0 %v1946
    %v1948 = vpop.xlane.xlu0 %1947
    %v1949 = vrcp.pop %v1948
    %v1950 = vmul.f32 %v1945, %v1949
    %1951 = vrot.lane.b32.xlu0 %v1351, 48
    %v1952 = vpop.permute.xlu0 %1951
    %v1955 = vsel %vm287, %v1950, 0
    %1957 = vmatprep.subr.mxu0 0.0
    %1958 = vmatpush1.msra.mxu0 0.0
    %1959 = vmatprep.subr.mxu0 0.0
    %1960 = vmatpush1.msra.mxu0 0.0
    %1961 = vmatprep.subr.mxu0 0.0
    %1962 = vmatpush1.msra.mxu0 0.0
    %1963 = vmatprep.subr.mxu0 0.0
    %1964 = vmatpush1.msra.mxu0 0.0
    %1965 = vmatprep.subr.mxu0 0.0
    %1966 = vmatpush1.msra.mxu0 0.0
    %1967 = vmatprep.subr.mxu0 0.0
    %1968 = vmatpush1.msra.mxu0 0.0
    %1969 = vmatprep.subr.mxu0 0.0
    %1970 = vmatpush1.msra.mxu0 0.0
    %1971 = vmatprep.subr.mxu0 0.0
    %1972 = vmatpush1.msra.mxu0 0.0
    %1973 = vmatprep.subr.mxu0 0.0
    %1974 = vmatpush1.msra.mxu0 0.0
    %1975 = vmatprep.subr.mxu0 0.0
    %1976 = vmatpush1.msra.mxu0 0.0
    %1977 = vmatprep.subr.mxu0 0.0
    %1978 = vmatpush1.msra.mxu0 0.0
    %1979 = vmatprep.subr.mxu0 0.0
    %1980 = vmatpush1.msra.mxu0 0.0
    %1981 = vmatprep.subr.mxu0 0.0
    %1982 = vmatpush1.msra.mxu0 0.0
    %1983 = vmatprep.subr.mxu0 0.0
    %1984 = vmatpush1.msra.mxu0 0.0
    %1985 = vmatprep.subr.mxu0 0.0
    %1986 = vmatpush1.msra.mxu0 0.0
    %1987 = vmatprep.subr.mxu0 0.0
    %1988 = vmatpush1.msra.mxu0 %v1952
    %1989 = vmatprep.subr.mxu0 0.0
    %1990 = vmatpush2.msra.mxu0 0.0
    %1991 = vmatprep.subr.mxu0 0.0
    %1992 = vmatpush2.msra.mxu0 0.0
    %1993 = vmatprep.subr.mxu0 0.0
    %1994 = vmatpush2.msra.mxu0 0.0
    %1995 = vmatprep.subr.mxu0 0.0
    %1996 = vmatpush2.msra.mxu0 0.0
    %1997 = vmatprep.subr.mxu0 0.0
    %1998 = vmatpush2.msra.mxu0 0.0
    %1999 = vmatprep.subr.mxu0 0.0
    %2000 = vmatpush2.msra.mxu0 0.0
    %2001 = vmatprep.subr.mxu0 0.0
    %2002 = vmatpush2.msra.mxu0 0.0
    %2003 = vmatprep.subr.mxu0 0.0
    %2004 = vmatpush2.msra.mxu0 0.0
    %2005 = vmatprep.subr.mxu0 0.0
    %2006 = vmatpush2.msra.mxu0 0.0
    %2007 = vmatprep.subr.mxu0 0.0
    %2008 = vmatpush2.msra.mxu0 0.0
    %2009 = vmatprep.subr.mxu0 0.0
    %2010 = vmatpush2.msra.mxu0 0.0
    %2011 = vmatprep.subr.mxu0 0.0
    %2012 = vmatpush2.msra.mxu0 0.0
    %2013 = vmatprep.subr.mxu0 0.0
    %2014 = vmatpush2.msra.mxu0 0.0
    %2015 = vmatprep.subr.mxu0 0.0
    %2016 = vmatpush2.msra.mxu0 0.0
    %2017 = vmatprep.subr.mxu0 0.0
    %2018 = vmatpush2.msra.mxu0 0.0
    %2019 = vmatprep.subr.mxu0 0.0
    %2020 = vmatpush2.msra.mxu0 0.0
    %2021 = vmatprep.mubr.f32.mxu0 0.0
    %2022 = vmatmul.mubr.f32.gmra.mxu0 %v1955
    %v2023 = vpop.f32.mrf.mxu0
    %v2024 = vadd.f32 0.0, %v2023
    %v2025 = vpop.f32.mrf.mxu0
    %2026 = vdwg.mxu0
    %2028 = vrot.lane.b32.xlu0 %v2024, 16
    %v2029 = vpop.permute.xlu0 %2028
    %2031 = vst.msk [vmem:[#allocation2 + $0x8] sm:$0xff] %vm547, %v2029
    %v2032 = vld [vmem:[#allocation2] sm:$0xff]
    %v2033 = vld [vmem:[#allocation2 + $0x8] sm:$0xff]
    %s2034 = scalar_lea.vmem %s4, 32
    %v2035 = vld [vmem:[%s2034] sm:$0xff]
    %v2036 = vld [vmem:[%s2034 + $0x8] sm:$0xff]
    %v2037 = vld [vmem:[%s2034 + $0x10] sm:$0xff]
    %v2038 = vld [vmem:[%s2034 + $0x18] sm:$0xff]
    %v2039 = vlaneseq
    %v2040 = vshrl.u32 %v2039, 7
    %v2041 = vsub.s32 3, %v2040
    %v2042 = vrot.slane %v67, %v2041
    %v2044 = vsel %vm71, %v2032, 0
    %v2047 = vsel %vm71, %v2033, 0
    %2049 = vmatprep.subr.mxu0 0.0
    %2050 = vmatpush1.msra.mxu0 0.0
    %2051 = vmatprep.subr.mxu0 0.0
    %2052 = vmatpush1.msra.mxu0 0.0
    %2053 = vmatprep.subr.mxu0 0.0
    %2054 = vmatpush1.msra.mxu0 0.0
    %2055 = vmatprep.subr.mxu0 0.0
    %2056 = vmatpush1.msra.mxu0 0.0
    %2057 = vmatprep.subr.mxu0 0.0
    %2058 = vmatpush1.msra.mxu0 0.0
    %2059 = vmatprep.subr.mxu0 0.0
    %2060 = vmatpush1.msra.mxu0 0.0
    %2061 = vmatprep.subr.mxu0 0.0
    %2062 = vmatpush1.msra.mxu0 0.0
    %2063 = vmatprep.subr.mxu0 0.0
    %2064 = vmatpush1.msra.mxu0 0.0
    %2065 = vmatprep.subr.mxu0 0.0
    %2066 = vmatpush1.msra.mxu0 0.0
    %2067 = vmatprep.subr.mxu0 0.0
    %2068 = vmatpush1.msra.mxu0 0.0
    %2069 = vmatprep.subr.mxu0 0.0
    %2070 = vmatpush1.msra.mxu0 0.0
    %2071 = vmatprep.subr.mxu0 0.0
    %2072 = vmatpush1.msra.mxu0 0.0
    %2073 = vmatprep.subr.mxu0 0.0
    %2074 = vmatpush1.msra.mxu0 %v2038
    %2075 = vmatprep.subr.mxu0 0.0
    %2076 = vmatpush1.msra.mxu0 %v2037
    %2077 = vmatprep.subr.mxu0 0.0
    %2078 = vmatpush1.msra.mxu0 %v2036
    %2079 = vmatprep.subr.mxu0 0.0
    %2080 = vmatpush1.msra.mxu0 %v2035
    %2081 = vmatprep.subr.mxu0 0.0
    %2082 = vmatpush2.msra.mxu0 0.0
    %2083 = vmatprep.subr.mxu0 0.0
    %2084 = vmatpush2.msra.mxu0 0.0
    %2085 = vmatprep.subr.mxu0 0.0
    %2086 = vmatpush2.msra.mxu0 0.0
    %2087 = vmatprep.subr.mxu0 0.0
    %2088 = vmatpush2.msra.mxu0 0.0
    %2089 = vmatprep.subr.mxu0 0.0
    %2090 = vmatpush2.msra.mxu0 0.0
    %2091 = vmatprep.subr.mxu0 0.0
    %2092 = vmatpush2.msra.mxu0 0.0
    %2093 = vmatprep.subr.mxu0 0.0
    %2094 = vmatpush2.msra.mxu0 0.0
    %2095 = vmatprep.subr.mxu0 0.0
    %2096 = vmatpush2.msra.mxu0 0.0
    %2097 = vmatprep.subr.mxu0 0.0
    %2098 = vmatpush2.msra.mxu0 0.0
    %2099 = vmatprep.subr.mxu0 0.0
    %2100 = vmatpush2.msra.mxu0 0.0
    %2101 = vmatprep.subr.mxu0 0.0
    %2102 = vmatpush2.msra.mxu0 0.0
    %2103 = vmatprep.subr.mxu0 0.0
    %2104 = vmatpush2.msra.mxu0 0.0
    %2105 = vmatprep.subr.mxu0 0.0
    %2106 = vmatpush2.msra.mxu0 0.0
    %2107 = vmatprep.subr.mxu0 0.0
    %2108 = vmatpush2.msra.mxu0 0.0
    %2109 = vmatprep.subr.mxu0 0.0
    %2110 = vmatpush2.msra.mxu0 0.0
    %2111 = vmatprep.subr.mxu0 0.0
    %2112 = vmatpush2.msra.mxu0 0.0
    %2113 = vmatprep.mubr.f32.mxu0 0.0
    %2114 = vmatmul.mubr.f32.gmra.mxu0 %v2044
    %v2115 = vpop.f32.mrf.mxu0
    %v2116 = vadd.f32 %v2042, %v2115
    %v2117 = vpop.f32.mrf.mxu0
    %2118 = vmatprep.mubr.f32.mxu0 0.0
    %2119 = vmatmul.mubr.f32.gmra.mxu0 %v2047
    %v2120 = vpop.f32.mrf.mxu0
    %v2121 = vadd.f32 %v2042, %v2120
    %v2122 = vpop.f32.mrf.mxu0
    %2123 = vdwg.mxu0
    %v2124 = vadd.f32 %v1262, %v2116
    %v2125 = vadd.f32 %v1263, %v2121
    %v2126 = vsel %vm71, %v2124, 0.0
    %2127 = vadd.xlane.f32.xlu0 %v2126
    %v2128 = vpop.xlane.xlu0 %2127
    %v2129 = vsel %vm71, %v2125, 0.0
    %2130 = vadd.xlane.f32.xlu0 %v2129
    %v2131 = vpop.xlane.xlu0 %2130
    %v2132 = vmul.f32 %v2128, %v78
    %v2133 = vmul.f32 %v2131, %v78
    %v2134 = vsub.f32 %v2124, %v2132
    %v2135 = vsub.f32 %v2125, %v2133
    %v2136 = vmul.f32 %v2134, %v2134
    %v2137 = vmul.f32 %v2135, %v2135
    %v2138 = vsel %vm71, %v2136, 0.0
    %2139 = vadd.xlane.f32.xlu0 %v2138
    %v2140 = vpop.xlane.xlu0 %2139
    %v2141 = vsel %vm71, %v2137, 0.0
    %2142 = vadd.xlane.f32.xlu0 %v2141
    %v2143 = vpop.xlane.xlu0 %2142
    %v2144 = vmul.f32 %v2140, %v78
    %v2145 = vmul.f32 %v2143, %v78
    %v2146 = vadd.f32 %v2144, 1e-12
    %v2147 = vadd.f32 %v2145, 1e-12
    %v2148 = vrsqrt.pop %v2146
    %v2149 = vrsqrt.pop %v2147
    %v2150 = vmul.f32 %v2134, %v2148
    %v2151 = vmul.f32 %v2135, %v2149
    %v2152 = vlaneseq
    %v2153 = vshrl.u32 %v2152, 7
    %v2154 = vsub.s32 6, %v2153
    %v2155 = vrot.slane %v67, %v2154
    %v2156 = vmul.f32 %v2150, %v2155
    %v2157 = vmul.f32 %v2151, %v2155
    %v2158 = vlaneseq
    %v2159 = vshrl.u32 %v2158, 7
    %v2160 = vsub.s32 7, %v2159
    %v2161 = vrot.slane %v67, %v2160
    %v2162 = vadd.f32 %v2156, %v2161
    %v2163 = vadd.f32 %v2157, %v2161
    %s2164 = scalar_lea.vmem %s5, 32
    %v2165 = vld [vmem:[%s2164] sm:$0xff]
    %v2166 = vld [vmem:[%s2164 + $0x8] sm:$0xff]
    %v2167 = vld [vmem:[%s2164 + $0x10] sm:$0xff]
    %v2168 = vld [vmem:[%s2164 + $0x18] sm:$0xff]
    %v2169 = vlaneseq
    %v2170 = vshrl.u32 %v2169, 7
    %v2171 = vsub.s32 4, %v2170
    %v2172 = vrot.slane %v67, %v2171
    %v2174 = vsel %vm71, %v2162, 0
    %v2177 = vsel %vm71, %v2163, 0
    %2179 = vmatprep.subr.mxu0 0.0
    %2180 = vmatpush1.msra.mxu0 0.0
    %2181 = vmatprep.subr.mxu0 0.0
    %2182 = vmatpush1.msra.mxu0 0.0
    %2183 = vmatprep.subr.mxu0 0.0
    %2184 = vmatpush1.msra.mxu0 0.0
    %2185 = vmatprep.subr.mxu0 0.0
    %2186 = vmatpush1.msra.mxu0 0.0
    %2187 = vmatprep.subr.mxu0 0.0
    %2188 = vmatpush1.msra.mxu0 0.0
    %2189 = vmatprep.subr.mxu0 0.0
    %2190 = vmatpush1.msra.mxu0 0.0
    %2191 = vmatprep.subr.mxu0 0.0
    %2192 = vmatpush1.msra.mxu0 0.0
    %2193 = vmatprep.subr.mxu0 0.0
    %2194 = vmatpush1.msra.mxu0 0.0
    %2195 = vmatprep.subr.mxu0 0.0
    %2196 = vmatpush1.msra.mxu0 0.0
    %2197 = vmatprep.subr.mxu0 0.0
    %2198 = vmatpush1.msra.mxu0 0.0
    %2199 = vmatprep.subr.mxu0 0.0
    %2200 = vmatpush1.msra.mxu0 0.0
    %2201 = vmatprep.subr.mxu0 0.0
    %2202 = vmatpush1.msra.mxu0 0.0
    %2203 = vmatprep.subr.mxu0 0.0
    %2204 = vmatpush1.msra.mxu0 %v2168
    %2205 = vmatprep.subr.mxu0 0.0
    %2206 = vmatpush1.msra.mxu0 %v2167
    %2207 = vmatprep.subr.mxu0 0.0
    %2208 = vmatpush1.msra.mxu0 %v2166
    %2209 = vmatprep.subr.mxu0 0.0
    %2210 = vmatpush1.msra.mxu0 %v2165
    %2211 = vmatprep.subr.mxu0 0.0
    %2212 = vmatpush2.msra.mxu0 0.0
    %2213 = vmatprep.subr.mxu0 0.0
    %2214 = vmatpush2.msra.mxu0 0.0
    %2215 = vmatprep.subr.mxu0 0.0
    %2216 = vmatpush2.msra.mxu0 0.0
    %2217 = vmatprep.subr.mxu0 0.0
    %2218 = vmatpush2.msra.mxu0 0.0
    %2219 = vmatprep.subr.mxu0 0.0
    %2220 = vmatpush2.msra.mxu0 0.0
    %2221 = vmatprep.subr.mxu0 0.0
    %2222 = vmatpush2.msra.mxu0 0.0
    %2223 = vmatprep.subr.mxu0 0.0
    %2224 = vmatpush2.msra.mxu0 0.0
    %2225 = vmatprep.subr.mxu0 0.0
    %2226 = vmatpush2.msra.mxu0 0.0
    %2227 = vmatprep.subr.mxu0 0.0
    %2228 = vmatpush2.msra.mxu0 0.0
    %2229 = vmatprep.subr.mxu0 0.0
    %2230 = vmatpush2.msra.mxu0 0.0
    %2231 = vmatprep.subr.mxu0 0.0
    %2232 = vmatpush2.msra.mxu0 0.0
    %2233 = vmatprep.subr.mxu0 0.0
    %2234 = vmatpush2.msra.mxu0 0.0
    %2235 = vmatprep.subr.mxu0 0.0
    %2236 = vmatpush2.msra.mxu0 0.0
    %2237 = vmatprep.subr.mxu0 0.0
    %2238 = vmatpush2.msra.mxu0 0.0
    %2239 = vmatprep.subr.mxu0 0.0
    %2240 = vmatpush2.msra.mxu0 0.0
    %2241 = vmatprep.subr.mxu0 0.0
    %2242 = vmatpush2.msra.mxu0 0.0
    %2243 = vmatprep.mubr.f32.mxu0 0.0
    %2244 = vmatmul.mubr.f32.gmra.mxu0 %v2174
    %v2245 = vpop.f32.mrf.mxu0
    %v2246 = vadd.f32 %v2172, %v2245
    %v2247 = vpop.f32.mrf.mxu0
    %2248 = vmatprep.mubr.f32.mxu0 0.0
    %2249 = vmatmul.mubr.f32.gmra.mxu0 %v2177
    %v2250 = vpop.f32.mrf.mxu0
    %v2251 = vadd.f32 %v2172, %v2250
    %v2252 = vpop.f32.mrf.mxu0
    %2253 = vdwg.mxu0
    %v2254 = vmul.f32 %v2246, %v2246
    %v2255 = vmul.f32 %v2251, %v2251
    %v2256 = vmul.f32 %v2246, %v2254
    %v2257 = vmul.f32 %v2251, %v2255
    %v2258 = vmul.f32 %v2256, 0.044715
    %v2259 = vmul.f32 %v2257, 0.044715
    %v2260 = vadd.f32 %v2246, %v2258
    %v2261 = vadd.f32 %v2251, %v2259
    %v2262 = vmul.f32 %v2260, 0.7978846
    %v2263 = vmul.f32 %v2261, 0.7978846
    %v2264 = vtanh.pop %v2262
    %v2265 = vtanh.pop %v2263
    %v2266 = vadd.f32 %v2264, 1.0
    %v2267 = vadd.f32 %v2265, 1.0
    %v2268 = vmul.f32 %v2266, 0.5
    %v2269 = vmul.f32 %v2267, 0.5
    %v2270 = vmul.f32 %v2246, %v2268
    %v2271 = vmul.f32 %v2251, %v2269
    %s2272 = scalar_lea.vmem %s6, 64
    %v2273 = vld [vmem:[%s2272] sm:$0xff]
    %v2274 = vld [vmem:[%s2272 + $0x8] sm:$0xff]
    %v2275 = vld [vmem:[%s2272 + $0x10] sm:$0xff]
    %v2276 = vld [vmem:[%s2272 + $0x18] sm:$0xff]
    %v2277 = vld [vmem:[%s2272 + $0x20] sm:$0xff]
    %v2278 = vld [vmem:[%s2272 + $0x28] sm:$0xff]
    %v2279 = vld [vmem:[%s2272 + $0x30] sm:$0xff]
    %v2280 = vld [vmem:[%s2272 + $0x38] sm:$0xff]
    %v2281 = vlaneseq
    %v2282 = vshrl.u32 %v2281, 7
    %v2283 = vsub.s32 5, %v2282
    %v2284 = vrot.slane %v67, %v2283
    %v2286 = vsel %vm1142, %v2270, 0
    %v2289 = vsel %vm1142, %v2271, 0
    %2291 = vmatprep.subr.mxu0 0.0
    %2292 = vmatpush1.msra.mxu0 0.0
    %2293 = vmatprep.subr.mxu0 0.0
    %2294 = vmatpush1.msra.mxu0 0.0
    %2295 = vmatprep.subr.mxu0 0.0
    %2296 = vmatpush1.msra.mxu0 0.0
    %2297 = vmatprep.subr.mxu0 0.0
    %2298 = vmatpush1.msra.mxu0 0.0
    %2299 = vmatprep.subr.mxu0 0.0
    %2300 = vmatpush1.msra.mxu0 0.0
    %2301 = vmatprep.subr.mxu0 0.0
    %2302 = vmatpush1.msra.mxu0 0.0
    %2303 = vmatprep.subr.mxu0 0.0
    %2304 = vmatpush1.msra.mxu0 0.0
    %2305 = vmatprep.subr.mxu0 0.0
    %2306 = vmatpush1.msra.mxu0 0.0
    %2307 = vmatprep.subr.mxu0 0.0
    %2308 = vmatpush1.msra.mxu0 %v2280
    %2309 = vmatprep.subr.mxu0 0.0
    %2310 = vmatpush1.msra.mxu0 %v2279
    %2311 = vmatprep.subr.mxu0 0.0
    %2312 = vmatpush1.msra.mxu0 %v2278
    %2313 = vmatprep.subr.mxu0 0.0
    %2314 = vmatpush1.msra.mxu0 %v2277
    %2315 = vmatprep.subr.mxu0 0.0
    %2316 = vmatpush1.msra.mxu0 %v2276
    %2317 = vmatprep.subr.mxu0 0.0
    %2318 = vmatpush1.msra.mxu0 %v2275
    %2319 = vmatprep.subr.mxu0 0.0
    %2320 = vmatpush1.msra.mxu0 %v2274
    %2321 = vmatprep.subr.mxu0 0.0
    %2322 = vmatpush1.msra.mxu0 %v2273
    %2323 = vmatprep.subr.mxu0 0.0
    %2324 = vmatpush2.msra.mxu0 0.0
    %2325 = vmatprep.subr.mxu0 0.0
    %2326 = vmatpush2.msra.mxu0 0.0
    %2327 = vmatprep.subr.mxu0 0.0
    %2328 = vmatpush2.msra.mxu0 0.0
    %2329 = vmatprep.subr.mxu0 0.0
    %2330 = vmatpush2.msra.mxu0 0.0
    %2331 = vmatprep.subr.mxu0 0.0
    %2332 = vmatpush2.msra.mxu0 0.0
    %2333 = vmatprep.subr.mxu0 0.0
    %2334 = vmatpush2.msra.mxu0 0.0
    %2335 = vmatprep.subr.mxu0 0.0
    %2336 = vmatpush2.msra.mxu0 0.0
    %2337 = vmatprep.subr.mxu0 0.0
    %2338 = vmatpush2.msra.mxu0 0.0
    %2339 = vmatprep.subr.mxu0 0.0
    %2340 = vmatpush2.msra.mxu0 0.0
    %2341 = vmatprep.subr.mxu0 0.0
    %2342 = vmatpush2.msra.mxu0 0.0
    %2343 = vmatprep.subr.mxu0 0.0
    %2344 = vmatpush2.msra.mxu0 0.0
    %2345 = vmatprep.subr.mxu0 0.0
    %2346 = vmatpush2.msra.mxu0 0.0
    %2347 = vmatprep.subr.mxu0 0.0
    %2348 = vmatpush2.msra.mxu0 0.0
    %2349 = vmatprep.subr.mxu0 0.0
    %2350 = vmatpush2.msra.mxu0 0.0
    %2351 = vmatprep.subr.mxu0 0.0
    %2352 = vmatpush2.msra.mxu0 0.0
    %2353 = vmatprep.subr.mxu0 0.0
    %2354 = vmatpush2.msra.mxu0 0.0
    %2355 = vmatprep.mubr.f32.mxu0 0.0
    %2356 = vmatmul.mubr.f32.gmra.mxu0 %v2286
    %v2357 = vpop.f32.mrf.mxu0
    %v2358 = vadd.f32 %v2284, %v2357
    %v2359 = vpop.f32.mrf.mxu0
    %2360 = vmatprep.mubr.f32.mxu0 0.0
    %2361 = vmatmul.mubr.f32.gmra.mxu0 %v2289
    %v2362 = vpop.f32.mrf.mxu0
    %v2363 = vadd.f32 %v2284, %v2362
    %v2364 = vpop.f32.mrf.mxu0
    %2365 = vdwg.mxu0
    %v2366 = vadd.f32 %v2162, %v2358
    %v2367 = vadd.f32 %v2163, %v2363
    %v2368 = vsel %vm71, %v2366, 0.0
    %2369 = vadd.xlane.f32.xlu0 %v2368
    %v2370 = vpop.xlane.xlu0 %2369
    %v2371 = vsel %vm71, %v2367, 0.0
    %2372 = vadd.xlane.f32.xlu0 %v2371
    %v2373 = vpop.xlane.xlu0 %2372
    %v2374 = vmul.f32 %v2370, %v78
    %v2375 = vmul.f32 %v2373, %v78
    %v2376 = vsub.f32 %v2366, %v2374
    %v2377 = vsub.f32 %v2367, %v2375
    %v2378 = vmul.f32 %v2376, %v2376
    %v2379 = vmul.f32 %v2377, %v2377
    %v2380 = vsel %vm71, %v2378, 0.0
    %2381 = vadd.xlane.f32.xlu0 %v2380
    %v2382 = vpop.xlane.xlu0 %2381
    %v2383 = vsel %vm71, %v2379, 0.0
    %2384 = vadd.xlane.f32.xlu0 %v2383
    %v2385 = vpop.xlane.xlu0 %2384
    %v2386 = vmul.f32 %v2382, %v78
    %v2387 = vmul.f32 %v2385, %v78
    %v2388 = vadd.f32 %v2386, 1e-12
    %v2389 = vadd.f32 %v2387, 1e-12
    %v2390 = vrsqrt.pop %v2388
    %v2391 = vrsqrt.pop %v2389
    %v2392 = vmul.f32 %v2376, %v2390
    %v2393 = vmul.f32 %v2377, %v2391
    %v2394 = vlaneseq
    %v2395 = vshrl.u32 %v2394, 7
    %v2396 = vsub.s32 0, %v2395
    %v2397 = vrot.slane %v68, %v2396
    %v2398 = vmul.f32 %v2392, %v2397
    %v2399 = vmul.f32 %v2393, %v2397
    %v2400 = vlaneseq
    %v2401 = vshrl.u32 %v2400, 7
    %v2402 = vsub.s32 1, %v2401
    %v2403 = vrot.slane %v68, %v2402
    %v2404 = vadd.f32 %v2398, %v2403
    %v2405 = vadd.f32 %v2399, %v2403
    %2406 = vst.msk [vmem:[#allocation9] sm:$0xff] %vm71, %v2404
    %2407 = vst.msk [vmem:[#allocation9 + $0x8] sm:$0xff] %vm71, %v2405
    // Predicated region
    $region42: #{tpu_custom_call.1} parent=1 // pred_check
      _
    $region43: #{tpu_custom_call.1} parent=1 // pred_check_branch
      %2409 = sbr.rel (0) target = $region45
    $region44: #{tpu_custom_call.1} parent=1 // pred_region
      %s2411 = ssub.s32 256, 256
      %2412 = vsyncadd [#allocation5], %s2411
      %s2413 = sshll.u32 [#allocation9], 4
      %s2414 = int_to_ptr.vmem [resolvable:$true] %s2413
      %2419 = dma.vmem_to_hbm [thread:$0]  %s2414, 256, %s7, [#allocation5], 128, 128, 8
    $region45: #{tpu_custom_call.1} parent=1 // pred_fallthru
      _
    // Predicated region
    $region46: #{tpu_custom_call.1} parent=1 // pred_check
      _
    $region47: #{tpu_custom_call.1} parent=1 // pred_check_branch
      %2421 = sbr.rel (0) target = $region49
    $region48: #{tpu_custom_call.1} parent=1 // pred_region
      %2422 = dma.done [#allocation5], 256
    $region49: #{tpu_custom_call.1} parent=1 // pred_fallthru
      _
    %2423 = vsyncpa [#allocation4], 1
    %2424 = vsyncpa [#allocation7], 1
    %2425 = vsyncpa [#allocation5], 1

</llo_original>
